<compile_context>
chip_gen: v7x
topology: tpu7x:2x2x1
jax: 0.10.0
libtpu: 0.0.40
codegen_flags: <defaults>
</compile_context>

<pallas_src>
import numpy as np
import jax
import jax.numpy as jnp
from jax.experimental import pallas as pl
from jax.experimental.pallas import tpu as pltpu

BN_EPS = 1e-5


# ------------------------- fused Pallas kernel -------------------------

def _make_kernel(metas):
    """metas: per-layer static dicts with cin/cout/m_in/taps/last."""

    def _shift_lanes(x, s, width):
        # y[:, m] = x[:, m - s], zero-filled where m - s falls outside [0, width).
        if s == 0:
            return x
        if s > 0:
            pad = jnp.zeros((x.shape[0], s), jnp.float32)
            return jnp.concatenate([pad, x], axis=1)[:, :width]
        pad = jnp.zeros((x.shape[0], -s), jnp.float32)
        return jnp.concatenate([x, pad], axis=1)[:, -s:-s + width]

    def _tree_sum(parts):
        while len(parts) > 1:
            nxt = [parts[i] + parts[i + 1] for i in range(0, len(parts) - 1, 2)]
            if len(parts) % 2 == 1:
                nxt.append(parts[-1])
            parts = nxt
        return parts[0]

    def kernel(*refs):
        pos = 0
        x_ref = refs[pos]; pos += 1
        per_layer_refs = []
        for meta in metas:
            w_ref = refs[pos]; pos += 1
            mask_ref = refs[pos]; pos += 1
            perm_ref = None
            if not meta['last']:
                perm_ref = refs[pos]; pos += 1
            per_layer_refs.append((w_ref, mask_ref, perm_ref))
        bias_ref = refs[pos]; pos += 1          # (Cout_last, 1) f32
        out_ref = refs[pos]                     # (Cout_last, 4*M_in_last) f32

        a = x_ref[...].astype(jnp.bfloat16)     # (Cin0, M0) channel-major

        for meta, (w_ref, mask_ref, perm_ref) in zip(metas, per_layer_refs):
            cout, m_in = meta['cout'], meta['m_in']

            # (1) All kernel taps in ONE MXU matmul (bf16 x bf16 -> f32 acc).
            z = jnp.dot(w_ref[...], a, preferred_element_type=jnp.float32)

            # (2) Stride-2 phase scatter: constant flat lane shift + 0/1
            #     boundary mask per tap (VPU/XLU slots, no dense scatter).
            parts = [[], [], [], []]
            for ti, tap in enumerate(meta['taps']):
                zt = z[ti * cout:(ti + 1) * cout, :]
                zt = _shift_lanes(zt, tap['shift'], m_in)
                if tap['needs_mask']:
                    zt = zt * mask_ref[ti]                   # (1, m_in) bcast
                parts[tap['phase']].append(zt)
            phases = [_tree_sum(p) if p else jnp.zeros((cout, m_in), jnp.float32)
                      for p in parts]
            y = jnp.concatenate(phases, axis=1)  # (Cout, 4*M_in) phase-major

            if not meta['last']:
                # (3) BatchNorm2d (training-mode batch stats, gamma=1, beta=0)
                #     + ReLU, all f32.
                mean = jnp.mean(y, axis=1, keepdims=True)
                var = jnp.mean(jnp.square(y - mean), axis=1, keepdims=True)
                act = jnp.maximum((y - mean) * jax.lax.rsqrt(var + BN_EPS), 0.0)
                # (4) Depth-to-space back to row-major flat layout for the next
                #     layer: tiny 0/1 bf16 permutation matmul applied after the
                #     bf16 cast, so it is numerically exact.
                a = jnp.dot(act.astype(jnp.bfloat16), perm_ref[...],
                            preferred_element_type=jnp.float32
                            ).astype(jnp.bfloat16)
            else:
                # Final ConvTranspose2d bias + Tanh; lane-dense phase-major store.
                out_ref[...] = jnp.tanh(y + bias_ref[...])

    return kernel


def _full_spec(shape):
    zeros = (0,) * len(shape)
    return pl.BlockSpec(shape, lambda i: zeros)


# ------------------------- host-side constant prep -------------------------

def _tap_meta(n, h, w):
    """Static per-tap metadata + destination-validity masks for one layer.

    ConvTranspose2d(k=4, s=2, p=1): input pixel (j,i), tap (ky,kx) feeds
    output (2j+ky-1, 2i+kx-1) = parity plane (py,px)=((ky+1)%2,(kx+1)%2) at
    phase coords (j+dy, i+dx) with (dy,dx)=((ky-1)//2,(kx-1)//2)."""
    m_in = n * h * w
    taps, mask_rows = [], []
    for ky in range(4):
        dy, py = (ky - 1) // 2, (ky + 1) % 2
        for kx in range(4):
            dx, px = (kx - 1) // 2, (kx + 1) % 2
            mask = np.zeros((m_in,), np.float32)
            for b in range(n):
                for j in range(h):
                    if not 0 <= j - dy < h:
                        continue
                    for i in range(w):
                        if not 0 <= i - dx < w:
                            continue
                        mask[(b * h + j) * w + i] = 1.0
            if mask.max() == 0.0:
                continue                      # tap never lands in-bounds (1x1 input)
            taps.append(dict(ky=ky, kx=kx, phase=py * 2 + px,
                             shift=dy * w + dx,
                             needs_mask=bool(mask.min() == 0.0)))
            mask_rows.append(mask)
    masks = np.stack(mask_rows, axis=0).reshape(len(taps), 1, m_in)
    return taps, masks


def _merged_tap_weights(w, taps):
    """(Cin, Cout, 4, 4) ConvTranspose2d weight -> (n_active*Cout, Cin) bf16."""
    mats = [jnp.transpose(w[:, :, t['ky'], t['kx']]) for t in taps]   # (Cout, Cin)
    return jnp.concatenate(mats, axis=0).astype(jnp.bfloat16)


def _depth_to_space_perm(n, h, w):
    """0/1 permutation (4*m_in, 4*m_in): phase-major flat -> row-major flat."""
    m_in = n * h * w
    p = np.zeros((4 * m_in, 4 * m_in), np.float32)
    for py in range(2):
        for px in range(2):
            for b in range(n):
                for j in range(h):
                    for i in range(w):
                        src = (py * 2 + px) * m_in + (b * h + j) * w + i
                        dst = (b * 2 * h + 2 * j + py) * 2 * w + 2 * i + px
                        p[src, dst] = 1.0
    return p


# ------------------------- module construction helpers -------------------------

def build_layer_dims(latent_dim, condition_dim, hidden_channels, out_channels):
    """Replicates Generator.__init__ layer construction."""
    dims = []
    in_ch = latent_dim + condition_dim
    for h in hidden_channels:
        dims.append((in_ch, h, False))              # ConvT(no bias)+BN+ReLU
        if h == hidden_channels[-1]:
            dims.append((h, out_channels, True))    # ConvT(bias)+Tanh
        else:
            in_ch = h
    return dims


def init_params(key, layer_dims):
    params = []
    for (cin, cout, has_bias) in layer_dims:
        key, kw, kb = jax.random.split(key, 3)
        lp = {'w': 0.05 * jax.random.normal(kw, (cin, cout, 4, 4), jnp.float32)}
        if has_bias:
            lp['b'] = 0.05 * jax.random.normal(kb, (cout,), jnp.float32)
        params.append(lp)
    return params


# ------------------------- forward wrappers -------------------------

def make_generator_forward(layer_params, layer_dims, batch):
    """One-time constant preparation; returns a jitted forward(z, cond)->NCHW."""
    n_layers = len(layer_dims)
    metas, consts = [], []
    h = w = 1
    for l, (lp, (cin, cout, _has_bias)) in enumerate(zip(layer_params, layer_dims)):
        taps, masks = _tap_meta(batch, h, w)
        metas.append(dict(cin=cin, cout=cout, m_in=batch * h * w,
                          taps=taps, last=(l == n_layers - 1)))
        consts.append(_merged_tap_weights(lp['w'], taps))
        consts.append(jnp.asarray(masks))
        if l < n_layers - 1:
            consts.append(jnp.asarray(_depth_to_space_perm(batch, h, w),
                                      dtype=jnp.bfloat16))
        h, w = 2 * h, 2 * w

    cout_last = layer_dims[-1][1]
    h_in_last, w_in_last = h // 2, w // 2
    m_out_last = batch * h * w
    bias = jnp.asarray(layer_params[-1]['b'], jnp.float32).reshape(cout_last, 1)
    consts.append(bias)

    # Advisory cost estimate.
    flops, transcendentals = 0, 0
    for meta in metas:
        na, co, ci, mi = len(meta['taps']), meta['cout'], meta['cin'], meta['m_in']
        flops += 2 * na * co * ci * mi           # merged tap matmul
        flops += 4 * na * co * mi                # shift / mask / accumulate
        if not meta['last']:
            flops += 2 * co * (4 * mi) ** 2      # depth-to-space perm matmul
            flops += 8 * co * 4 * mi             # batch-norm
            transcendentals += co                # rsqrt
        else:
            transcendentals += co * 4 * mi       # tanh
    x_shape = (layer_dims[0][0], batch)
    bytes_accessed = int(np.prod(x_shape)) * 4 + cout_last * m_out_last * 4
    bytes_accessed += sum(int(c.size) * c.dtype.itemsize for c in consts)
    cost = pl.CostEstimate(flops=int(flops), transcendentals=int(transcendentals),
                           bytes_accessed=int(bytes_accessed))

    out_shape_2d = (cout_last, m_out_last)
    in_specs = [_full_spec(x_shape)] + [_full_spec(tuple(c.shape)) for c in consts]

    fused = pl.pallas_call(
        _make_kernel(metas),
        out_shape=jax.ShapeDtypeStruct(out_shape_2d, jnp.float32),
        grid=(1,),
        in_specs=in_specs,
        out_specs=_full_spec(out_shape_2d),
        compiler_params=pltpu.CompilerParams(
            dimension_semantics=("arbitrary",)),
        cost_estimate=cost,
    )

    def fwd(z, condition):
        # torch.cat((z, cond), 1) -> channel-major (C0, N) for the kernel.
        x = jnp.transpose(jnp.concatenate([z, condition], axis=1))
        out2d = fused(x.astype(jnp.float32), *consts)
        # Undo the last layer's depth-to-space here (wrapper reshape):
        # (Cout, [py, px, n, j, i]) -> NCHW.
        out = out2d.reshape(cout_last, 2, 2, batch, h_in_last, w_in_last)
        out = jnp.transpose(out, (3, 0, 4, 1, 5, 2))
        return out.reshape(batch, cout_last, 2 * h_in_last, 2 * w_in_last)

    return jax.jit(fwd)


def generator_reference(z, condition, layer_params, layer_dims):
    """Pure-JAX f32 reference mirroring the PyTorch module (independent of the
    tap/phase formulation used by the kernel)."""
    x = jnp.concatenate([z, condition], axis=1)[:, :, None, None]   # NCHW
    n_layers = len(layer_dims)
    for l, lp in enumerate(layer_params):
        w = lp['w']                                                 # (Cin,Cout,4,4)
        w_conv = jnp.transpose(w[:, :, ::-1, ::-1], (1, 0, 2, 3))   # (Cout,Cin,4,4)
        y = jax.lax.conv_general_dilated(
            x, w_conv, window_strides=(1, 1), padding=((2, 2), (2, 2)),
            lhs_dilation=(2, 2), rhs_dilation=(1, 1),
            dimension_numbers=('NCHW', 'OIHW', 'NCHW'))
        if l < n_layers - 1:
            mean = jnp.mean(y, axis=(0, 2, 3), keepdims=True)
            var = jnp.mean(jnp.square(y - mean), axis=(0, 2, 3), keepdims=True)
            x = jnp.maximum((y - mean) * jax.lax.rsqrt(var + BN_EPS), 0.0)
        else:
            x = jnp.tanh(y + lp['b'][None, :, None, None])
    return x


# ------------------------- main -------------------------

if __name__ == "__main__":
    batch = 2
    latent_dim = 16
    condition_dim = 8
    hidden_channels = [64, 32, 16]
    out_channels = 1

    key = jax.random.PRNGKey(0)
    kp, kz, kc = jax.random.split(key, 3)

    layer_dims = build_layer_dims(latent_dim, condition_dim,
                                  hidden_channels, out_channels)
    params = init_params(kp, layer_dims)

    z = jax.random.normal(kz, (batch, latent_dim), jnp.float32)
    cond = jax.random.normal(kc, (batch, condition_dim), jnp.float32)

    forward = make_generator_forward(params, layer_dims, batch)
    out = jax.block_until_ready(forward(z, cond))

    # spatial doubles per layer: 1 -> 2 -> 4 -> 8 -> 16
    side = 2 ** len(layer_dims)
    expected = (batch, out_channels, side, side)
    assert out.shape == expected, (out.shape, expected)
    assert bool(jnp.all(jnp.isfinite(out)))
    assert bool(jnp.all(jnp.abs(out) <= 1.0 + 1e-6))       # tanh range

    # Numerical check vs an independent f32 XLA reference.  Tolerance covers
    # bf16 MXU operands plus training-mode BN over only 8/32/128 samples.
    ref = jax.block_until_ready(generator_reference(z, cond, params, layer_dims))
    np.testing.assert_allclose(np.asarray(out), np.asarray(ref),
                               atol=5e-2, rtol=0.0)

    print("KERNEL_OK")
</pallas_src>

<mosaic_0001>
module attributes {stable_mosaic.version = 11 : i64} {
  func.func @kernel(%arg0: i32, %arg1: memref<24x2xf32, #tpu.memory_space<vmem>>, %arg2: memref<256x24xbf16, #tpu.memory_space<vmem>>, %arg3: memref<4x1x2xf32, #tpu.memory_space<vmem>>, %arg4: memref<8x8xbf16, #tpu.memory_space<vmem>>, %arg5: memref<512x64xbf16, #tpu.memory_space<vmem>>, %arg6: memref<16x1x8xf32, #tpu.memory_space<vmem>>, %arg7: memref<32x32xbf16, #tpu.memory_space<vmem>>, %arg8: memref<256x32xbf16, #tpu.memory_space<vmem>>, %arg9: memref<16x1x32xf32, #tpu.memory_space<vmem>>, %arg10: memref<128x128xbf16, #tpu.memory_space<vmem>>, %arg11: memref<16x16xbf16, #tpu.memory_space<vmem>>, %arg12: memref<16x1x128xf32, #tpu.memory_space<vmem>>, %arg13: memref<1x1xf32, #tpu.memory_space<vmem>>, %arg14: memref<1x512xf32, #tpu.memory_space<vmem>>) attributes {dimension_semantics = [#tpu.dimension_semantics<arbitrary>], iteration_bounds = array<i64: 1>, scalar_prefetch = 0 : i64, scratch_operands = 0 : i64, tpu.core_type = #tpu.core_type<tc>, window_params = [{pipeline_mode = #tpu.pipeline_mode<synchronous>, transform_indices = @transform_0, window_bounds = array<i64: 24, 2>}, {pipeline_mode = #tpu.pipeline_mode<synchronous>, transform_indices = @transform_1, window_bounds = array<i64: 256, 24>}, {pipeline_mode = #tpu.pipeline_mode<synchronous>, transform_indices = @transform_2, window_bounds = array<i64: 4, 1, 2>}, {pipeline_mode = #tpu.pipeline_mode<synchronous>, transform_indices = @transform_3, window_bounds = array<i64: 8, 8>}, {pipeline_mode = #tpu.pipeline_mode<synchronous>, transform_indices = @transform_4, window_bounds = array<i64: 512, 64>}, {pipeline_mode = #tpu.pipeline_mode<synchronous>, transform_indices = @transform_5, window_bounds = array<i64: 16, 1, 8>}, {pipeline_mode = #tpu.pipeline_mode<synchronous>, transform_indices = @transform_6, window_bounds = array<i64: 32, 32>}, {pipeline_mode = #tpu.pipeline_mode<synchronous>, transform_indices = @transform_7, window_bounds = array<i64: 256, 32>}, {pipeline_mode = #tpu.pipeline_mode<synchronous>, transform_indices = @transform_8, window_bounds = array<i64: 16, 1, 32>}, {pipeline_mode = #tpu.pipeline_mode<synchronous>, transform_indices = @transform_9, window_bounds = array<i64: 128, 128>}, {pipeline_mode = #tpu.pipeline_mode<synchronous>, transform_indices = @transform_10, window_bounds = array<i64: 16, 16>}, {pipeline_mode = #tpu.pipeline_mode<synchronous>, transform_indices = @transform_11, window_bounds = array<i64: 16, 1, 128>}, {pipeline_mode = #tpu.pipeline_mode<synchronous>, transform_indices = @transform_12, window_bounds = array<i64: 1, 1>}, {pipeline_mode = #tpu.pipeline_mode<synchronous>, transform_indices = @transform_13, window_bounds = array<i64: 1, 512>}]} {
    %c0 = arith.constant 0 : index
    %c0_0 = arith.constant 0 : index
    %0 = vector.load %arg1[%c0, %c0_0] : memref<24x2xf32, #tpu.memory_space<vmem>>, vector<24x2xf32>
    %1 = arith.truncf %0 : vector<24x2xf32> to vector<24x2xbf16>
    %c0_1 = arith.constant 0 : index
    %c0_2 = arith.constant 0 : index
    %2 = vector.load %arg2[%c0_1, %c0_2] : memref<256x24xbf16, #tpu.memory_space<vmem>>, vector<256x24xbf16>
    %cst = arith.constant dense<0.000000e+00> : vector<256x2xf32>
    %3 = tpu.matmul %2, %1, %cst {dimension_numbers = #tpu.dot_dimension_numbers<[1], [0], [0], [1], [0, 0, 1, 1], [], []>} : vector<256x24xbf16>, vector<24x2xbf16>, vector<256x2xf32> -> vector<256x2xf32>
    %4 = vector.extract_strided_slice %3 {offsets = [0, 0], sizes = [64, 2], strides = [1, 1]} : vector<256x2xf32> to vector<64x2xf32>
    %5 = vector.extract_strided_slice %3 {offsets = [64, 0], sizes = [64, 2], strides = [1, 1]} : vector<256x2xf32> to vector<64x2xf32>
    %6 = vector.extract_strided_slice %3 {offsets = [128, 0], sizes = [64, 2], strides = [1, 1]} : vector<256x2xf32> to vector<64x2xf32>
    %7 = vector.extract_strided_slice %3 {offsets = [192, 0], sizes = [64, 2], strides = [1, 1]} : vector<256x2xf32> to vector<64x2xf32>
    %8 = tpu.concatenate %4, %5, %6, %7 in 1 : vector<64x2xf32>, vector<64x2xf32>, vector<64x2xf32>, vector<64x2xf32> -> vector<64x8xf32>
    %cst_3 = arith.constant dense<0.000000e+00> : vector<64xf32>
    %9 = vector.multi_reduction <add>, %8, %cst_3 [1] : vector<64x8xf32> to vector<64xf32>
    %10 = vector.shape_cast %9 : vector<64xf32> to vector<64x1xf32>
    %cst_4 = arith.constant 8.000000e+00 : f32
    %11 = vector.broadcast %cst_4 : f32 to vector<64x1xf32>
    %12 = arith.divf %10, %11 : vector<64x1xf32>
    %13 = vector.broadcast %12 : vector<64x1xf32> to vector<64x8xf32>
    %14 = arith.subf %8, %13 : vector<64x8xf32>
    %15 = arith.mulf %14, %14 : vector<64x8xf32>
    %cst_5 = arith.constant dense<0.000000e+00> : vector<64xf32>
    %16 = vector.multi_reduction <add>, %15, %cst_5 [1] : vector<64x8xf32> to vector<64xf32>
    %17 = vector.shape_cast %16 : vector<64xf32> to vector<64x1xf32>
    %cst_6 = arith.constant 8.000000e+00 : f32
    %18 = vector.broadcast %cst_6 : f32 to vector<64x1xf32>
    %19 = arith.divf %17, %18 : vector<64x1xf32>
    %20 = vector.broadcast %12 : vector<64x1xf32> to vector<64x8xf32>
    %21 = arith.subf %8, %20 : vector<64x8xf32>
    %cst_7 = arith.constant 9.99999974E-6 : f32
    %22 = vector.broadcast %cst_7 : f32 to vector<64x1xf32>
    %23 = arith.addf %19, %22 : vector<64x1xf32>
    %24 = math.rsqrt %23 : vector<64x1xf32>
    %25 = vector.broadcast %24 : vector<64x1xf32> to vector<64x8xf32>
    %26 = arith.mulf %21, %25 : vector<64x8xf32>
    %cst_8 = arith.constant 0.000000e+00 : f32
    %27 = vector.broadcast %cst_8 : f32 to vector<64x8xf32>
    %28 = arith.maximumf %26, %27 : vector<64x8xf32>
    %29 = arith.truncf %28 : vector<64x8xf32> to vector<64x8xbf16>
    %c0_9 = arith.constant 0 : index
    %c0_10 = arith.constant 0 : index
    %30 = vector.load %arg4[%c0_9, %c0_10] : memref<8x8xbf16, #tpu.memory_space<vmem>>, vector<8x8xbf16>
    %cst_11 = arith.constant dense<0.000000e+00> : vector<64x8xf32>
    %31 = tpu.matmul %29, %30, %cst_11 {dimension_numbers = #tpu.dot_dimension_numbers<[1], [0], [0], [1], [0, 0, 1, 1], [], []>} : vector<64x8xbf16>, vector<8x8xbf16>, vector<64x8xf32> -> vector<64x8xf32>
    %32 = arith.truncf %31 : vector<64x8xf32> to vector<64x8xbf16>
    %c0_12 = arith.constant 0 : index
    %c0_13 = arith.constant 0 : index
    %33 = vector.load %arg5[%c0_12, %c0_13] : memref<512x64xbf16, #tpu.memory_space<vmem>>, vector<512x64xbf16>
    %cst_14 = arith.constant dense<0.000000e+00> : vector<512x8xf32>
    %34 = tpu.matmul %33, %32, %cst_14 {dimension_numbers = #tpu.dot_dimension_numbers<[1], [0], [0], [1], [0, 0, 1, 1], [], []>} : vector<512x64xbf16>, vector<64x8xbf16>, vector<512x8xf32> -> vector<512x8xf32>
    %35 = vector.extract_strided_slice %34 {offsets = [0, 0], sizes = [32, 8], strides = [1, 1]} : vector<512x8xf32> to vector<32x8xf32>
    %cst_15 = arith.constant 0.000000e+00 : f32
    %36 = vector.broadcast %cst_15 : f32 to vector<32x3xf32>
    %37 = tpu.concatenate %35, %36 in 1 : vector<32x8xf32>, vector<32x3xf32> -> vector<32x11xf32>
    %38 = vector.extract_strided_slice %37 {offsets = [0, 3], sizes = [32, 8], strides = [1, 1]} : vector<32x11xf32> to vector<32x8xf32>
    %c0_16 = arith.constant 0 : index
    %c0_17 = arith.constant 0 : index
    %c0_18 = arith.constant 0 : index
    %39 = vector.load %arg6[%c0_16, %c0_17, %c0_18] : memref<16x1x8xf32, #tpu.memory_space<vmem>>, vector<1x1x8xf32>
    %40 = vector.shape_cast %39 : vector<1x1x8xf32> to vector<1x8xf32>
    %41 = vector.broadcast %40 : vector<1x8xf32> to vector<32x8xf32>
    %42 = arith.mulf %38, %41 : vector<32x8xf32>
    %43 = vector.extract_strided_slice %34 {offsets = [32, 0], sizes = [32, 8], strides = [1, 1]} : vector<512x8xf32> to vector<32x8xf32>
    %cst_19 = arith.constant 0.000000e+00 : f32
    %44 = vector.broadcast %cst_19 : f32 to vector<32x2xf32>
    %45 = tpu.concatenate %43, %44 in 1 : vector<32x8xf32>, vector<32x2xf32> -> vector<32x10xf32>
    %46 = vector.extract_strided_slice %45 {offsets = [0, 2], sizes = [32, 8], strides = [1, 1]} : vector<32x10xf32> to vector<32x8xf32>
    %c1 = arith.constant 1 : index
    %c0_20 = arith.constant 0 : index
    %c0_21 = arith.constant 0 : index
    %47 = vector.load %arg6[%c1, %c0_20, %c0_21] : memref<16x1x8xf32, #tpu.memory_space<vmem>>, vector<1x1x8xf32>
    %48 = vector.shape_cast %47 : vector<1x1x8xf32> to vector<1x8xf32>
    %49 = vector.broadcast %48 : vector<1x8xf32> to vector<32x8xf32>
    %50 = arith.mulf %46, %49 : vector<32x8xf32>
    %51 = vector.extract_strided_slice %34 {offsets = [64, 0], sizes = [32, 8], strides = [1, 1]} : vector<512x8xf32> to vector<32x8xf32>
    %cst_22 = arith.constant 0.000000e+00 : f32
    %52 = vector.broadcast %cst_22 : f32 to vector<32x2xf32>
    %53 = tpu.concatenate %51, %52 in 1 : vector<32x8xf32>, vector<32x2xf32> -> vector<32x10xf32>
    %54 = vector.extract_strided_slice %53 {offsets = [0, 2], sizes = [32, 8], strides = [1, 1]} : vector<32x10xf32> to vector<32x8xf32>
    %c2 = arith.constant 2 : index
    %c0_23 = arith.constant 0 : index
    %c0_24 = arith.constant 0 : index
    %55 = vector.load %arg6[%c2, %c0_23, %c0_24] : memref<16x1x8xf32, #tpu.memory_space<vmem>>, vector<1x1x8xf32>
    %56 = vector.shape_cast %55 : vector<1x1x8xf32> to vector<1x8xf32>
    %57 = vector.broadcast %56 : vector<1x8xf32> to vector<32x8xf32>
    %58 = arith.mulf %54, %57 : vector<32x8xf32>
    %59 = vector.extract_strided_slice %34 {offsets = [96, 0], sizes = [32, 8], strides = [1, 1]} : vector<512x8xf32> to vector<32x8xf32>
    %cst_25 = arith.constant 0.000000e+00 : f32
    %60 = vector.broadcast %cst_25 : f32 to vector<32x1xf32>
    %61 = tpu.concatenate %59, %60 in 1 : vector<32x8xf32>, vector<32x1xf32> -> vector<32x9xf32>
    %62 = vector.extract_strided_slice %61 {offsets = [0, 1], sizes = [32, 8], strides = [1, 1]} : vector<32x9xf32> to vector<32x8xf32>
    %c3 = arith.constant 3 : index
    %c0_26 = arith.constant 0 : index
    %c0_27 = arith.constant 0 : index
    %63 = vector.load %arg6[%c3, %c0_26, %c0_27] : memref<16x1x8xf32, #tpu.memory_space<vmem>>, vector<1x1x8xf32>
    %64 = vector.shape_cast %63 : vector<1x1x8xf32> to vector<1x8xf32>
    %65 = vector.broadcast %64 : vector<1x8xf32> to vector<32x8xf32>
    %66 = arith.mulf %62, %65 : vector<32x8xf32>
    %67 = vector.extract_strided_slice %34 {offsets = [128, 0], sizes = [32, 8], strides = [1, 1]} : vector<512x8xf32> to vector<32x8xf32>
    %cst_28 = arith.constant 0.000000e+00 : f32
    %68 = vector.broadcast %cst_28 : f32 to vector<32x1xf32>
    %69 = tpu.concatenate %67, %68 in 1 : vector<32x8xf32>, vector<32x1xf32> -> vector<32x9xf32>
    %70 = vector.extract_strided_slice %69 {offsets = [0, 1], sizes = [32, 8], strides = [1, 1]} : vector<32x9xf32> to vector<32x8xf32>
    %c4 = arith.constant 4 : index
    %c0_29 = arith.constant 0 : index
    %c0_30 = arith.constant 0 : index
    %71 = vector.load %arg6[%c4, %c0_29, %c0_30] : memref<16x1x8xf32, #tpu.memory_space<vmem>>, vector<1x1x8xf32>
    %72 = vector.shape_cast %71 : vector<1x1x8xf32> to vector<1x8xf32>
    %73 = vector.broadcast %72 : vector<1x8xf32> to vector<32x8xf32>
    %74 = arith.mulf %70, %73 : vector<32x8xf32>
    %75 = vector.extract_strided_slice %34 {offsets = [160, 0], sizes = [32, 8], strides = [1, 1]} : vector<512x8xf32> to vector<32x8xf32>
    %76 = vector.extract_strided_slice %34 {offsets = [192, 0], sizes = [32, 8], strides = [1, 1]} : vector<512x8xf32> to vector<32x8xf32>
    %77 = vector.extract_strided_slice %34 {offsets = [224, 0], sizes = [32, 8], strides = [1, 1]} : vector<512x8xf32> to vector<32x8xf32>
    %cst_31 = arith.constant 0.000000e+00 : f32
    %78 = vector.broadcast %cst_31 : f32 to vector<32x1xf32>
    %79 = tpu.concatenate %78, %77 in 1 : vector<32x1xf32>, vector<32x8xf32> -> vector<32x9xf32>
    %80 = vector.extract_strided_slice %79 {offsets = [0, 0], sizes = [32, 8], strides = [1, 1]} : vector<32x9xf32> to vector<32x8xf32>
    %c7 = arith.constant 7 : index
    %c0_32 = arith.constant 0 : index
    %c0_33 = arith.constant 0 : index
    %81 = vector.load %arg6[%c7, %c0_32, %c0_33] : memref<16x1x8xf32, #tpu.memory_space<vmem>>, vector<1x1x8xf32>
    %82 = vector.shape_cast %81 : vector<1x1x8xf32> to vector<1x8xf32>
    %83 = vector.broadcast %82 : vector<1x8xf32> to vector<32x8xf32>
    %84 = arith.mulf %80, %83 : vector<32x8xf32>
    %85 = vector.extract_strided_slice %34 {offsets = [256, 0], sizes = [32, 8], strides = [1, 1]} : vector<512x8xf32> to vector<32x8xf32>
    %cst_34 = arith.constant 0.000000e+00 : f32
    %86 = vector.broadcast %cst_34 : f32 to vector<32x1xf32>
    %87 = tpu.concatenate %85, %86 in 1 : vector<32x8xf32>, vector<32x1xf32> -> vector<32x9xf32>
    %88 = vector.extract_strided_slice %87 {offsets = [0, 1], sizes = [32, 8], strides = [1, 1]} : vector<32x9xf32> to vector<32x8xf32>
    %c8 = arith.constant 8 : index
    %c0_35 = arith.constant 0 : index
    %c0_36 = arith.constant 0 : index
    %89 = vector.load %arg6[%c8, %c0_35, %c0_36] : memref<16x1x8xf32, #tpu.memory_space<vmem>>, vector<1x1x8xf32>
    %90 = vector.shape_cast %89 : vector<1x1x8xf32> to vector<1x8xf32>
    %91 = vector.broadcast %90 : vector<1x8xf32> to vector<32x8xf32>
    %92 = arith.mulf %88, %91 : vector<32x8xf32>
    %93 = vector.extract_strided_slice %34 {offsets = [288, 0], sizes = [32, 8], strides = [1, 1]} : vector<512x8xf32> to vector<32x8xf32>
    %94 = vector.extract_strided_slice %34 {offsets = [320, 0], sizes = [32, 8], strides = [1, 1]} : vector<512x8xf32> to vector<32x8xf32>
    %95 = vector.extract_strided_slice %34 {offsets = [352, 0], sizes = [32, 8], strides = [1, 1]} : vector<512x8xf32> to vector<32x8xf32>
    %cst_37 = arith.constant 0.000000e+00 : f32
    %96 = vector.broadcast %cst_37 : f32 to vector<32x1xf32>
    %97 = tpu.concatenate %96, %95 in 1 : vector<32x1xf32>, vector<32x8xf32> -> vector<32x9xf32>
    %98 = vector.extract_strided_slice %97 {offsets = [0, 0], sizes = [32, 8], strides = [1, 1]} : vector<32x9xf32> to vector<32x8xf32>
    %c11 = arith.constant 11 : index
    %c0_38 = arith.constant 0 : index
    %c0_39 = arith.constant 0 : index
    %99 = vector.load %arg6[%c11, %c0_38, %c0_39] : memref<16x1x8xf32, #tpu.memory_space<vmem>>, vector<1x1x8xf32>
    %100 = vector.shape_cast %99 : vector<1x1x8xf32> to vector<1x8xf32>
    %101 = vector.broadcast %100 : vector<1x8xf32> to vector<32x8xf32>
    %102 = arith.mulf %98, %101 : vector<32x8xf32>
    %103 = vector.extract_strided_slice %34 {offsets = [384, 0], sizes = [32, 8], strides = [1, 1]} : vector<512x8xf32> to vector<32x8xf32>
    %cst_40 = arith.constant 0.000000e+00 : f32
    %104 = vector.broadcast %cst_40 : f32 to vector<32x1xf32>
    %105 = tpu.concatenate %104, %103 in 1 : vector<32x1xf32>, vector<32x8xf32> -> vector<32x9xf32>
    %106 = vector.extract_strided_slice %105 {offsets = [0, 0], sizes = [32, 8], strides = [1, 1]} : vector<32x9xf32> to vector<32x8xf32>
    %c12 = arith.constant 12 : index
    %c0_41 = arith.constant 0 : index
    %c0_42 = arith.constant 0 : index
    %107 = vector.load %arg6[%c12, %c0_41, %c0_42] : memref<16x1x8xf32, #tpu.memory_space<vmem>>, vector<1x1x8xf32>
    %108 = vector.shape_cast %107 : vector<1x1x8xf32> to vector<1x8xf32>
    %109 = vector.broadcast %108 : vector<1x8xf32> to vector<32x8xf32>
    %110 = arith.mulf %106, %109 : vector<32x8xf32>
    %111 = vector.extract_strided_slice %34 {offsets = [416, 0], sizes = [32, 8], strides = [1, 1]} : vector<512x8xf32> to vector<32x8xf32>
    %cst_43 = arith.constant 0.000000e+00 : f32
    %112 = vector.broadcast %cst_43 : f32 to vector<32x2xf32>
    %113 = tpu.concatenate %112, %111 in 1 : vector<32x2xf32>, vector<32x8xf32> -> vector<32x10xf32>
    %114 = vector.extract_strided_slice %113 {offsets = [0, 0], sizes = [32, 8], strides = [1, 1]} : vector<32x10xf32> to vector<32x8xf32>
    %c13 = arith.constant 13 : index
    %c0_44 = arith.constant 0 : index
    %c0_45 = arith.constant 0 : index
    %115 = vector.load %arg6[%c13, %c0_44, %c0_45] : memref<16x1x8xf32, #tpu.memory_space<vmem>>, vector<1x1x8xf32>
    %116 = vector.shape_cast %115 : vector<1x1x8xf32> to vector<1x8xf32>
    %117 = vector.broadcast %116 : vector<1x8xf32> to vector<32x8xf32>
    %118 = arith.mulf %114, %117 : vector<32x8xf32>
    %119 = vector.extract_strided_slice %34 {offsets = [448, 0], sizes = [32, 8], strides = [1, 1]} : vector<512x8xf32> to vector<32x8xf32>
    %cst_46 = arith.constant 0.000000e+00 : f32
    %120 = vector.broadcast %cst_46 : f32 to vector<32x2xf32>
    %121 = tpu.concatenate %120, %119 in 1 : vector<32x2xf32>, vector<32x8xf32> -> vector<32x10xf32>
    %122 = vector.extract_strided_slice %121 {offsets = [0, 0], sizes = [32, 8], strides = [1, 1]} : vector<32x10xf32> to vector<32x8xf32>
    %c14 = arith.constant 14 : index
    %c0_47 = arith.constant 0 : index
    %c0_48 = arith.constant 0 : index
    %123 = vector.load %arg6[%c14, %c0_47, %c0_48] : memref<16x1x8xf32, #tpu.memory_space<vmem>>, vector<1x1x8xf32>
    %124 = vector.shape_cast %123 : vector<1x1x8xf32> to vector<1x8xf32>
    %125 = vector.broadcast %124 : vector<1x8xf32> to vector<32x8xf32>
    %126 = arith.mulf %122, %125 : vector<32x8xf32>
    %127 = vector.extract_strided_slice %34 {offsets = [480, 0], sizes = [32, 8], strides = [1, 1]} : vector<512x8xf32> to vector<32x8xf32>
    %cst_49 = arith.constant 0.000000e+00 : f32
    %128 = vector.broadcast %cst_49 : f32 to vector<32x3xf32>
    %129 = tpu.concatenate %128, %127 in 1 : vector<32x3xf32>, vector<32x8xf32> -> vector<32x11xf32>
    %130 = vector.extract_strided_slice %129 {offsets = [0, 0], sizes = [32, 8], strides = [1, 1]} : vector<32x11xf32> to vector<32x8xf32>
    %c15 = arith.constant 15 : index
    %c0_50 = arith.constant 0 : index
    %c0_51 = arith.constant 0 : index
    %131 = vector.load %arg6[%c15, %c0_50, %c0_51] : memref<16x1x8xf32, #tpu.memory_space<vmem>>, vector<1x1x8xf32>
    %132 = vector.shape_cast %131 : vector<1x1x8xf32> to vector<1x8xf32>
    %133 = vector.broadcast %132 : vector<1x8xf32> to vector<32x8xf32>
    %134 = arith.mulf %130, %133 : vector<32x8xf32>
    %135 = arith.addf %75, %84 : vector<32x8xf32>
    %136 = arith.addf %118, %134 : vector<32x8xf32>
    %137 = arith.addf %135, %136 : vector<32x8xf32>
    %138 = arith.addf %74, %76 : vector<32x8xf32>
    %139 = arith.addf %110, %126 : vector<32x8xf32>
    %140 = arith.addf %138, %139 : vector<32x8xf32>
    %141 = arith.addf %50, %66 : vector<32x8xf32>
    %142 = arith.addf %93, %102 : vector<32x8xf32>
    %143 = arith.addf %141, %142 : vector<32x8xf32>
    %144 = arith.addf %42, %58 : vector<32x8xf32>
    %145 = arith.addf %92, %94 : vector<32x8xf32>
    %146 = arith.addf %144, %145 : vector<32x8xf32>
    %147 = tpu.concatenate %137, %140, %143, %146 in 1 : vector<32x8xf32>, vector<32x8xf32>, vector<32x8xf32>, vector<32x8xf32> -> vector<32x32xf32>
    %cst_52 = arith.constant dense<0.000000e+00> : vector<32xf32>
    %148 = vector.multi_reduction <add>, %147, %cst_52 [1] : vector<32x32xf32> to vector<32xf32>
    %149 = vector.shape_cast %148 : vector<32xf32> to vector<32x1xf32>
    %cst_53 = arith.constant 3.200000e+01 : f32
    %150 = vector.broadcast %cst_53 : f32 to vector<32x1xf32>
    %151 = arith.divf %149, %150 : vector<32x1xf32>
    %152 = vector.broadcast %151 : vector<32x1xf32> to vector<32x32xf32>
    %153 = arith.subf %147, %152 : vector<32x32xf32>
    %154 = arith.mulf %153, %153 : vector<32x32xf32>
    %cst_54 = arith.constant dense<0.000000e+00> : vector<32xf32>
    %155 = vector.multi_reduction <add>, %154, %cst_54 [1] : vector<32x32xf32> to vector<32xf32>
    %156 = vector.shape_cast %155 : vector<32xf32> to vector<32x1xf32>
    %cst_55 = arith.constant 3.200000e+01 : f32
    %157 = vector.broadcast %cst_55 : f32 to vector<32x1xf32>
    %158 = arith.divf %156, %157 : vector<32x1xf32>
    %159 = vector.broadcast %151 : vector<32x1xf32> to vector<32x32xf32>
    %160 = arith.subf %147, %159 : vector<32x32xf32>
    %cst_56 = arith.constant 9.99999974E-6 : f32
    %161 = vector.broadcast %cst_56 : f32 to vector<32x1xf32>
    %162 = arith.addf %158, %161 : vector<32x1xf32>
    %163 = math.rsqrt %162 : vector<32x1xf32>
    %164 = vector.broadcast %163 : vector<32x1xf32> to vector<32x32xf32>
    %165 = arith.mulf %160, %164 : vector<32x32xf32>
    %cst_57 = arith.constant 0.000000e+00 : f32
    %166 = vector.broadcast %cst_57 : f32 to vector<32x32xf32>
    %167 = arith.maximumf %165, %166 : vector<32x32xf32>
    %168 = arith.truncf %167 : vector<32x32xf32> to vector<32x32xbf16>
    %c0_58 = arith.constant 0 : index
    %c0_59 = arith.constant 0 : index
    %169 = vector.load %arg7[%c0_58, %c0_59] : memref<32x32xbf16, #tpu.memory_space<vmem>>, vector<32x32xbf16>
    %cst_60 = arith.constant dense<0.000000e+00> : vector<32x32xf32>
    %170 = tpu.matmul %168, %169, %cst_60 {dimension_numbers = #tpu.dot_dimension_numbers<[1], [0], [0], [1], [0, 0, 1, 1], [], []>} : vector<32x32xbf16>, vector<32x32xbf16>, vector<32x32xf32> -> vector<32x32xf32>
    %171 = arith.truncf %170 : vector<32x32xf32> to vector<32x32xbf16>
    %c0_61 = arith.constant 0 : index
    %c0_62 = arith.constant 0 : index
    %172 = vector.load %arg8[%c0_61, %c0_62] : memref<256x32xbf16, #tpu.memory_space<vmem>>, vector<256x32xbf16>
    %cst_63 = arith.constant dense<0.000000e+00> : vector<256x32xf32>
    %173 = tpu.matmul %172, %171, %cst_63 {dimension_numbers = #tpu.dot_dimension_numbers<[1], [0], [0], [1], [0, 0, 1, 1], [], []>} : vector<256x32xbf16>, vector<32x32xbf16>, vector<256x32xf32> -> vector<256x32xf32>
    %174 = vector.extract_strided_slice %173 {offsets = [0, 0], sizes = [16, 32], strides = [1, 1]} : vector<256x32xf32> to vector<16x32xf32>
    %cst_64 = arith.constant 0.000000e+00 : f32
    %175 = vector.broadcast %cst_64 : f32 to vector<16x5xf32>
    %176 = tpu.concatenate %174, %175 in 1 : vector<16x32xf32>, vector<16x5xf32> -> vector<16x37xf32>
    %177 = vector.extract_strided_slice %176 {offsets = [0, 5], sizes = [16, 32], strides = [1, 1]} : vector<16x37xf32> to vector<16x32xf32>
    %c0_65 = arith.constant 0 : index
    %c0_66 = arith.constant 0 : index
    %c0_67 = arith.constant 0 : index
    %178 = vector.load %arg9[%c0_65, %c0_66, %c0_67] : memref<16x1x32xf32, #tpu.memory_space<vmem>>, vector<1x1x32xf32>
    %179 = vector.shape_cast %178 : vector<1x1x32xf32> to vector<1x32xf32>
    %180 = vector.broadcast %179 : vector<1x32xf32> to vector<16x32xf32>
    %181 = arith.mulf %177, %180 : vector<16x32xf32>
    %182 = vector.extract_strided_slice %173 {offsets = [16, 0], sizes = [16, 32], strides = [1, 1]} : vector<256x32xf32> to vector<16x32xf32>
    %cst_68 = arith.constant 0.000000e+00 : f32
    %183 = vector.broadcast %cst_68 : f32 to vector<16x4xf32>
    %184 = tpu.concatenate %182, %183 in 1 : vector<16x32xf32>, vector<16x4xf32> -> vector<16x36xf32>
    %185 = vector.extract_strided_slice %184 {offsets = [0, 4], sizes = [16, 32], strides = [1, 1]} : vector<16x36xf32> to vector<16x32xf32>
    %c1_69 = arith.constant 1 : index
    %c0_70 = arith.constant 0 : index
    %c0_71 = arith.constant 0 : index
    %186 = vector.load %arg9[%c1_69, %c0_70, %c0_71] : memref<16x1x32xf32, #tpu.memory_space<vmem>>, vector<1x1x32xf32>
    %187 = vector.shape_cast %186 : vector<1x1x32xf32> to vector<1x32xf32>
    %188 = vector.broadcast %187 : vector<1x32xf32> to vector<16x32xf32>
    %189 = arith.mulf %185, %188 : vector<16x32xf32>
    %190 = vector.extract_strided_slice %173 {offsets = [32, 0], sizes = [16, 32], strides = [1, 1]} : vector<256x32xf32> to vector<16x32xf32>
    %cst_72 = arith.constant 0.000000e+00 : f32
    %191 = vector.broadcast %cst_72 : f32 to vector<16x4xf32>
    %192 = tpu.concatenate %190, %191 in 1 : vector<16x32xf32>, vector<16x4xf32> -> vector<16x36xf32>
    %193 = vector.extract_strided_slice %192 {offsets = [0, 4], sizes = [16, 32], strides = [1, 1]} : vector<16x36xf32> to vector<16x32xf32>
    %c2_73 = arith.constant 2 : index
    %c0_74 = arith.constant 0 : index
    %c0_75 = arith.constant 0 : index
    %194 = vector.load %arg9[%c2_73, %c0_74, %c0_75] : memref<16x1x32xf32, #tpu.memory_space<vmem>>, vector<1x1x32xf32>
    %195 = vector.shape_cast %194 : vector<1x1x32xf32> to vector<1x32xf32>
    %196 = vector.broadcast %195 : vector<1x32xf32> to vector<16x32xf32>
    %197 = arith.mulf %193, %196 : vector<16x32xf32>
    %198 = vector.extract_strided_slice %173 {offsets = [48, 0], sizes = [16, 32], strides = [1, 1]} : vector<256x32xf32> to vector<16x32xf32>
    %cst_76 = arith.constant 0.000000e+00 : f32
    %199 = vector.broadcast %cst_76 : f32 to vector<16x3xf32>
    %200 = tpu.concatenate %198, %199 in 1 : vector<16x32xf32>, vector<16x3xf32> -> vector<16x35xf32>
    %201 = vector.extract_strided_slice %200 {offsets = [0, 3], sizes = [16, 32], strides = [1, 1]} : vector<16x35xf32> to vector<16x32xf32>
    %c3_77 = arith.constant 3 : index
    %c0_78 = arith.constant 0 : index
    %c0_79 = arith.constant 0 : index
    %202 = vector.load %arg9[%c3_77, %c0_78, %c0_79] : memref<16x1x32xf32, #tpu.memory_space<vmem>>, vector<1x1x32xf32>
    %203 = vector.shape_cast %202 : vector<1x1x32xf32> to vector<1x32xf32>
    %204 = vector.broadcast %203 : vector<1x32xf32> to vector<16x32xf32>
    %205 = arith.mulf %201, %204 : vector<16x32xf32>
    %206 = vector.extract_strided_slice %173 {offsets = [64, 0], sizes = [16, 32], strides = [1, 1]} : vector<256x32xf32> to vector<16x32xf32>
    %cst_80 = arith.constant 0.000000e+00 : f32
    %207 = vector.broadcast %cst_80 : f32 to vector<16x1xf32>
    %208 = tpu.concatenate %206, %207 in 1 : vector<16x32xf32>, vector<16x1xf32> -> vector<16x33xf32>
    %209 = vector.extract_strided_slice %208 {offsets = [0, 1], sizes = [16, 32], strides = [1, 1]} : vector<16x33xf32> to vector<16x32xf32>
    %c4_81 = arith.constant 4 : index
    %c0_82 = arith.constant 0 : index
    %c0_83 = arith.constant 0 : index
    %210 = vector.load %arg9[%c4_81, %c0_82, %c0_83] : memref<16x1x32xf32, #tpu.memory_space<vmem>>, vector<1x1x32xf32>
    %211 = vector.shape_cast %210 : vector<1x1x32xf32> to vector<1x32xf32>
    %212 = vector.broadcast %211 : vector<1x32xf32> to vector<16x32xf32>
    %213 = arith.mulf %209, %212 : vector<16x32xf32>
    %214 = vector.extract_strided_slice %173 {offsets = [80, 0], sizes = [16, 32], strides = [1, 1]} : vector<256x32xf32> to vector<16x32xf32>
    %215 = vector.extract_strided_slice %173 {offsets = [96, 0], sizes = [16, 32], strides = [1, 1]} : vector<256x32xf32> to vector<16x32xf32>
    %216 = vector.extract_strided_slice %173 {offsets = [112, 0], sizes = [16, 32], strides = [1, 1]} : vector<256x32xf32> to vector<16x32xf32>
    %cst_84 = arith.constant 0.000000e+00 : f32
    %217 = vector.broadcast %cst_84 : f32 to vector<16x1xf32>
    %218 = tpu.concatenate %217, %216 in 1 : vector<16x1xf32>, vector<16x32xf32> -> vector<16x33xf32>
    %219 = vector.extract_strided_slice %218 {offsets = [0, 0], sizes = [16, 32], strides = [1, 1]} : vector<16x33xf32> to vector<16x32xf32>
    %c7_85 = arith.constant 7 : index
    %c0_86 = arith.constant 0 : index
    %c0_87 = arith.constant 0 : index
    %220 = vector.load %arg9[%c7_85, %c0_86, %c0_87] : memref<16x1x32xf32, #tpu.memory_space<vmem>>, vector<1x1x32xf32>
    %221 = vector.shape_cast %220 : vector<1x1x32xf32> to vector<1x32xf32>
    %222 = vector.broadcast %221 : vector<1x32xf32> to vector<16x32xf32>
    %223 = arith.mulf %219, %222 : vector<16x32xf32>
    %224 = vector.extract_strided_slice %173 {offsets = [128, 0], sizes = [16, 32], strides = [1, 1]} : vector<256x32xf32> to vector<16x32xf32>
    %cst_88 = arith.constant 0.000000e+00 : f32
    %225 = vector.broadcast %cst_88 : f32 to vector<16x1xf32>
    %226 = tpu.concatenate %224, %225 in 1 : vector<16x32xf32>, vector<16x1xf32> -> vector<16x33xf32>
    %227 = vector.extract_strided_slice %226 {offsets = [0, 1], sizes = [16, 32], strides = [1, 1]} : vector<16x33xf32> to vector<16x32xf32>
    %c8_89 = arith.constant 8 : index
    %c0_90 = arith.constant 0 : index
    %c0_91 = arith.constant 0 : index
    %228 = vector.load %arg9[%c8_89, %c0_90, %c0_91] : memref<16x1x32xf32, #tpu.memory_space<vmem>>, vector<1x1x32xf32>
    %229 = vector.shape_cast %228 : vector<1x1x32xf32> to vector<1x32xf32>
    %230 = vector.broadcast %229 : vector<1x32xf32> to vector<16x32xf32>
    %231 = arith.mulf %227, %230 : vector<16x32xf32>
    %232 = vector.extract_strided_slice %173 {offsets = [144, 0], sizes = [16, 32], strides = [1, 1]} : vector<256x32xf32> to vector<16x32xf32>
    %233 = vector.extract_strided_slice %173 {offsets = [160, 0], sizes = [16, 32], strides = [1, 1]} : vector<256x32xf32> to vector<16x32xf32>
    %234 = vector.extract_strided_slice %173 {offsets = [176, 0], sizes = [16, 32], strides = [1, 1]} : vector<256x32xf32> to vector<16x32xf32>
    %cst_92 = arith.constant 0.000000e+00 : f32
    %235 = vector.broadcast %cst_92 : f32 to vector<16x1xf32>
    %236 = tpu.concatenate %235, %234 in 1 : vector<16x1xf32>, vector<16x32xf32> -> vector<16x33xf32>
    %237 = vector.extract_strided_slice %236 {offsets = [0, 0], sizes = [16, 32], strides = [1, 1]} : vector<16x33xf32> to vector<16x32xf32>
    %c11_93 = arith.constant 11 : index
    %c0_94 = arith.constant 0 : index
    %c0_95 = arith.constant 0 : index
    %238 = vector.load %arg9[%c11_93, %c0_94, %c0_95] : memref<16x1x32xf32, #tpu.memory_space<vmem>>, vector<1x1x32xf32>
    %239 = vector.shape_cast %238 : vector<1x1x32xf32> to vector<1x32xf32>
    %240 = vector.broadcast %239 : vector<1x32xf32> to vector<16x32xf32>
    %241 = arith.mulf %237, %240 : vector<16x32xf32>
    %242 = vector.extract_strided_slice %173 {offsets = [192, 0], sizes = [16, 32], strides = [1, 1]} : vector<256x32xf32> to vector<16x32xf32>
    %cst_96 = arith.constant 0.000000e+00 : f32
    %243 = vector.broadcast %cst_96 : f32 to vector<16x3xf32>
    %244 = tpu.concatenate %243, %242 in 1 : vector<16x3xf32>, vector<16x32xf32> -> vector<16x35xf32>
    %245 = vector.extract_strided_slice %244 {offsets = [0, 0], sizes = [16, 32], strides = [1, 1]} : vector<16x35xf32> to vector<16x32xf32>
    %c12_97 = arith.constant 12 : index
    %c0_98 = arith.constant 0 : index
    %c0_99 = arith.constant 0 : index
    %246 = vector.load %arg9[%c12_97, %c0_98, %c0_99] : memref<16x1x32xf32, #tpu.memory_space<vmem>>, vector<1x1x32xf32>
    %247 = vector.shape_cast %246 : vector<1x1x32xf32> to vector<1x32xf32>
    %248 = vector.broadcast %247 : vector<1x32xf32> to vector<16x32xf32>
    %249 = arith.mulf %245, %248 : vector<16x32xf32>
    %250 = vector.extract_strided_slice %173 {offsets = [208, 0], sizes = [16, 32], strides = [1, 1]} : vector<256x32xf32> to vector<16x32xf32>
    %cst_100 = arith.constant 0.000000e+00 : f32
    %251 = vector.broadcast %cst_100 : f32 to vector<16x4xf32>
    %252 = tpu.concatenate %251, %250 in 1 : vector<16x4xf32>, vector<16x32xf32> -> vector<16x36xf32>
    %253 = vector.extract_strided_slice %252 {offsets = [0, 0], sizes = [16, 32], strides = [1, 1]} : vector<16x36xf32> to vector<16x32xf32>
    %c13_101 = arith.constant 13 : index
    %c0_102 = arith.constant 0 : index
    %c0_103 = arith.constant 0 : index
    %254 = vector.load %arg9[%c13_101, %c0_102, %c0_103] : memref<16x1x32xf32, #tpu.memory_space<vmem>>, vector<1x1x32xf32>
    %255 = vector.shape_cast %254 : vector<1x1x32xf32> to vector<1x32xf32>
    %256 = vector.broadcast %255 : vector<1x32xf32> to vector<16x32xf32>
    %257 = arith.mulf %253, %256 : vector<16x32xf32>
    %258 = vector.extract_strided_slice %173 {offsets = [224, 0], sizes = [16, 32], strides = [1, 1]} : vector<256x32xf32> to vector<16x32xf32>
    %cst_104 = arith.constant 0.000000e+00 : f32
    %259 = vector.broadcast %cst_104 : f32 to vector<16x4xf32>
    %260 = tpu.concatenate %259, %258 in 1 : vector<16x4xf32>, vector<16x32xf32> -> vector<16x36xf32>
    %261 = vector.extract_strided_slice %260 {offsets = [0, 0], sizes = [16, 32], strides = [1, 1]} : vector<16x36xf32> to vector<16x32xf32>
    %c14_105 = arith.constant 14 : index
    %c0_106 = arith.constant 0 : index
    %c0_107 = arith.constant 0 : index
    %262 = vector.load %arg9[%c14_105, %c0_106, %c0_107] : memref<16x1x32xf32, #tpu.memory_space<vmem>>, vector<1x1x32xf32>
    %263 = vector.shape_cast %262 : vector<1x1x32xf32> to vector<1x32xf32>
    %264 = vector.broadcast %263 : vector<1x32xf32> to vector<16x32xf32>
    %265 = arith.mulf %261, %264 : vector<16x32xf32>
    %266 = vector.extract_strided_slice %173 {offsets = [240, 0], sizes = [16, 32], strides = [1, 1]} : vector<256x32xf32> to vector<16x32xf32>
    %cst_108 = arith.constant 0.000000e+00 : f32
    %267 = vector.broadcast %cst_108 : f32 to vector<16x5xf32>
    %268 = tpu.concatenate %267, %266 in 1 : vector<16x5xf32>, vector<16x32xf32> -> vector<16x37xf32>
    %269 = vector.extract_strided_slice %268 {offsets = [0, 0], sizes = [16, 32], strides = [1, 1]} : vector<16x37xf32> to vector<16x32xf32>
    %c15_109 = arith.constant 15 : index
    %c0_110 = arith.constant 0 : index
    %c0_111 = arith.constant 0 : index
    %270 = vector.load %arg9[%c15_109, %c0_110, %c0_111] : memref<16x1x32xf32, #tpu.memory_space<vmem>>, vector<1x1x32xf32>
    %271 = vector.shape_cast %270 : vector<1x1x32xf32> to vector<1x32xf32>
    %272 = vector.broadcast %271 : vector<1x32xf32> to vector<16x32xf32>
    %273 = arith.mulf %269, %272 : vector<16x32xf32>
    %274 = arith.addf %214, %223 : vector<16x32xf32>
    %275 = arith.addf %257, %273 : vector<16x32xf32>
    %276 = arith.addf %274, %275 : vector<16x32xf32>
    %277 = arith.addf %213, %215 : vector<16x32xf32>
    %278 = arith.addf %249, %265 : vector<16x32xf32>
    %279 = arith.addf %277, %278 : vector<16x32xf32>
    %280 = arith.addf %189, %205 : vector<16x32xf32>
    %281 = arith.addf %232, %241 : vector<16x32xf32>
    %282 = arith.addf %280, %281 : vector<16x32xf32>
    %283 = arith.addf %181, %197 : vector<16x32xf32>
    %284 = arith.addf %231, %233 : vector<16x32xf32>
    %285 = arith.addf %283, %284 : vector<16x32xf32>
    %286 = tpu.concatenate %276, %279, %282, %285 in 1 : vector<16x32xf32>, vector<16x32xf32>, vector<16x32xf32>, vector<16x32xf32> -> vector<16x128xf32>
    %cst_112 = arith.constant dense<0.000000e+00> : vector<16xf32>
    %287 = vector.multi_reduction <add>, %286, %cst_112 [1] : vector<16x128xf32> to vector<16xf32>
    %288 = vector.shape_cast %287 : vector<16xf32> to vector<16x1xf32>
    %cst_113 = arith.constant 1.280000e+02 : f32
    %289 = vector.broadcast %cst_113 : f32 to vector<16x1xf32>
    %290 = arith.divf %288, %289 : vector<16x1xf32>
    %291 = vector.broadcast %290 : vector<16x1xf32> to vector<16x128xf32>
    %292 = arith.subf %286, %291 : vector<16x128xf32>
    %293 = arith.mulf %292, %292 : vector<16x128xf32>
    %cst_114 = arith.constant dense<0.000000e+00> : vector<16xf32>
    %294 = vector.multi_reduction <add>, %293, %cst_114 [1] : vector<16x128xf32> to vector<16xf32>
    %295 = vector.shape_cast %294 : vector<16xf32> to vector<16x1xf32>
    %cst_115 = arith.constant 1.280000e+02 : f32
    %296 = vector.broadcast %cst_115 : f32 to vector<16x1xf32>
    %297 = arith.divf %295, %296 : vector<16x1xf32>
    %298 = vector.broadcast %290 : vector<16x1xf32> to vector<16x128xf32>
    %299 = arith.subf %286, %298 : vector<16x128xf32>
    %cst_116 = arith.constant 9.99999974E-6 : f32
    %300 = vector.broadcast %cst_116 : f32 to vector<16x1xf32>
    %301 = arith.addf %297, %300 : vector<16x1xf32>
    %302 = math.rsqrt %301 : vector<16x1xf32>
    %303 = vector.broadcast %302 : vector<16x1xf32> to vector<16x128xf32>
    %304 = arith.mulf %299, %303 : vector<16x128xf32>
    %cst_117 = arith.constant 0.000000e+00 : f32
    %305 = vector.broadcast %cst_117 : f32 to vector<16x128xf32>
    %306 = arith.maximumf %304, %305 : vector<16x128xf32>
    %307 = arith.truncf %306 : vector<16x128xf32> to vector<16x128xbf16>
    %c0_118 = arith.constant 0 : index
    %c0_119 = arith.constant 0 : index
    %308 = vector.load %arg10[%c0_118, %c0_119] : memref<128x128xbf16, #tpu.memory_space<vmem>>, vector<128x128xbf16>
    %cst_120 = arith.constant dense<0.000000e+00> : vector<16x128xf32>
    %309 = tpu.matmul %307, %308, %cst_120 {dimension_numbers = #tpu.dot_dimension_numbers<[1], [0], [0], [1], [0, 0, 1, 1], [], []>} : vector<16x128xbf16>, vector<128x128xbf16>, vector<16x128xf32> -> vector<16x128xf32>
    %310 = arith.truncf %309 : vector<16x128xf32> to vector<16x128xbf16>
    %c0_121 = arith.constant 0 : index
    %c0_122 = arith.constant 0 : index
    %311 = vector.load %arg11[%c0_121, %c0_122] : memref<16x16xbf16, #tpu.memory_space<vmem>>, vector<16x16xbf16>
    %cst_123 = arith.constant dense<0.000000e+00> : vector<16x128xf32>
    %312 = tpu.matmul %311, %310, %cst_123 {dimension_numbers = #tpu.dot_dimension_numbers<[1], [0], [0], [1], [0, 0, 1, 1], [], []>} : vector<16x16xbf16>, vector<16x128xbf16>, vector<16x128xf32> -> vector<16x128xf32>
    %313 = vector.extract_strided_slice %312 {offsets = [0, 0], sizes = [1, 128], strides = [1, 1]} : vector<16x128xf32> to vector<1x128xf32>
    %cst_124 = arith.constant 0.000000e+00 : f32
    %314 = vector.broadcast %cst_124 : f32 to vector<1x9xf32>
    %315 = tpu.concatenate %313, %314 in 1 : vector<1x128xf32>, vector<1x9xf32> -> vector<1x137xf32>
    %316 = vector.extract_strided_slice %315 {offsets = [0, 9], sizes = [1, 128], strides = [1, 1]} : vector<1x137xf32> to vector<1x128xf32>
    %c0_125 = arith.constant 0 : index
    %c0_126 = arith.constant 0 : index
    %c0_127 = arith.constant 0 : index
    %317 = vector.load %arg12[%c0_125, %c0_126, %c0_127] : memref<16x1x128xf32, #tpu.memory_space<vmem>>, vector<1x1x128xf32>
    %318 = vector.shape_cast %317 : vector<1x1x128xf32> to vector<1x128xf32>
    %319 = arith.mulf %316, %318 : vector<1x128xf32>
    %320 = vector.extract_strided_slice %312 {offsets = [1, 0], sizes = [1, 128], strides = [1, 1]} : vector<16x128xf32> to vector<1x128xf32>
    %cst_128 = arith.constant 0.000000e+00 : f32
    %321 = vector.broadcast %cst_128 : f32 to vector<1x8xf32>
    %322 = tpu.concatenate %320, %321 in 1 : vector<1x128xf32>, vector<1x8xf32> -> vector<1x136xf32>
    %323 = vector.extract_strided_slice %322 {offsets = [0, 8], sizes = [1, 128], strides = [1, 1]} : vector<1x136xf32> to vector<1x128xf32>
    %c1_129 = arith.constant 1 : index
    %c0_130 = arith.constant 0 : index
    %c0_131 = arith.constant 0 : index
    %324 = vector.load %arg12[%c1_129, %c0_130, %c0_131] : memref<16x1x128xf32, #tpu.memory_space<vmem>>, vector<1x1x128xf32>
    %325 = vector.shape_cast %324 : vector<1x1x128xf32> to vector<1x128xf32>
    %326 = arith.mulf %323, %325 : vector<1x128xf32>
    %327 = vector.extract_strided_slice %312 {offsets = [2, 0], sizes = [1, 128], strides = [1, 1]} : vector<16x128xf32> to vector<1x128xf32>
    %cst_132 = arith.constant 0.000000e+00 : f32
    %328 = vector.broadcast %cst_132 : f32 to vector<1x8xf32>
    %329 = tpu.concatenate %327, %328 in 1 : vector<1x128xf32>, vector<1x8xf32> -> vector<1x136xf32>
    %330 = vector.extract_strided_slice %329 {offsets = [0, 8], sizes = [1, 128], strides = [1, 1]} : vector<1x136xf32> to vector<1x128xf32>
    %c2_133 = arith.constant 2 : index
    %c0_134 = arith.constant 0 : index
    %c0_135 = arith.constant 0 : index
    %331 = vector.load %arg12[%c2_133, %c0_134, %c0_135] : memref<16x1x128xf32, #tpu.memory_space<vmem>>, vector<1x1x128xf32>
    %332 = vector.shape_cast %331 : vector<1x1x128xf32> to vector<1x128xf32>
    %333 = arith.mulf %330, %332 : vector<1x128xf32>
    %334 = vector.extract_strided_slice %312 {offsets = [3, 0], sizes = [1, 128], strides = [1, 1]} : vector<16x128xf32> to vector<1x128xf32>
    %cst_136 = arith.constant 0.000000e+00 : f32
    %335 = vector.broadcast %cst_136 : f32 to vector<1x7xf32>
    %336 = tpu.concatenate %334, %335 in 1 : vector<1x128xf32>, vector<1x7xf32> -> vector<1x135xf32>
    %337 = vector.extract_strided_slice %336 {offsets = [0, 7], sizes = [1, 128], strides = [1, 1]} : vector<1x135xf32> to vector<1x128xf32>
    %c3_137 = arith.constant 3 : index
    %c0_138 = arith.constant 0 : index
    %c0_139 = arith.constant 0 : index
    %338 = vector.load %arg12[%c3_137, %c0_138, %c0_139] : memref<16x1x128xf32, #tpu.memory_space<vmem>>, vector<1x1x128xf32>
    %339 = vector.shape_cast %338 : vector<1x1x128xf32> to vector<1x128xf32>
    %340 = arith.mulf %337, %339 : vector<1x128xf32>
    %341 = vector.extract_strided_slice %312 {offsets = [4, 0], sizes = [1, 128], strides = [1, 1]} : vector<16x128xf32> to vector<1x128xf32>
    %cst_140 = arith.constant 0.000000e+00 : f32
    %342 = vector.broadcast %cst_140 : f32 to vector<1x1xf32>
    %343 = tpu.concatenate %341, %342 in 1 : vector<1x128xf32>, vector<1x1xf32> -> vector<1x129xf32>
    %344 = vector.extract_strided_slice %343 {offsets = [0, 1], sizes = [1, 128], strides = [1, 1]} : vector<1x129xf32> to vector<1x128xf32>
    %c4_141 = arith.constant 4 : index
    %c0_142 = arith.constant 0 : index
    %c0_143 = arith.constant 0 : index
    %345 = vector.load %arg12[%c4_141, %c0_142, %c0_143] : memref<16x1x128xf32, #tpu.memory_space<vmem>>, vector<1x1x128xf32>
    %346 = vector.shape_cast %345 : vector<1x1x128xf32> to vector<1x128xf32>
    %347 = arith.mulf %344, %346 : vector<1x128xf32>
    %348 = vector.extract_strided_slice %312 {offsets = [5, 0], sizes = [1, 128], strides = [1, 1]} : vector<16x128xf32> to vector<1x128xf32>
    %349 = vector.extract_strided_slice %312 {offsets = [6, 0], sizes = [1, 128], strides = [1, 1]} : vector<16x128xf32> to vector<1x128xf32>
    %350 = vector.extract_strided_slice %312 {offsets = [7, 0], sizes = [1, 128], strides = [1, 1]} : vector<16x128xf32> to vector<1x128xf32>
    %cst_144 = arith.constant 0.000000e+00 : f32
    %351 = vector.broadcast %cst_144 : f32 to vector<1x1xf32>
    %352 = tpu.concatenate %351, %350 in 1 : vector<1x1xf32>, vector<1x128xf32> -> vector<1x129xf32>
    %353 = vector.extract_strided_slice %352 {offsets = [0, 0], sizes = [1, 128], strides = [1, 1]} : vector<1x129xf32> to vector<1x128xf32>
    %c7_145 = arith.constant 7 : index
    %c0_146 = arith.constant 0 : index
    %c0_147 = arith.constant 0 : index
    %354 = vector.load %arg12[%c7_145, %c0_146, %c0_147] : memref<16x1x128xf32, #tpu.memory_space<vmem>>, vector<1x1x128xf32>
    %355 = vector.shape_cast %354 : vector<1x1x128xf32> to vector<1x128xf32>
    %356 = arith.mulf %353, %355 : vector<1x128xf32>
    %357 = vector.extract_strided_slice %312 {offsets = [8, 0], sizes = [1, 128], strides = [1, 1]} : vector<16x128xf32> to vector<1x128xf32>
    %cst_148 = arith.constant 0.000000e+00 : f32
    %358 = vector.broadcast %cst_148 : f32 to vector<1x1xf32>
    %359 = tpu.concatenate %357, %358 in 1 : vector<1x128xf32>, vector<1x1xf32> -> vector<1x129xf32>
    %360 = vector.extract_strided_slice %359 {offsets = [0, 1], sizes = [1, 128], strides = [1, 1]} : vector<1x129xf32> to vector<1x128xf32>
    %c8_149 = arith.constant 8 : index
    %c0_150 = arith.constant 0 : index
    %c0_151 = arith.constant 0 : index
    %361 = vector.load %arg12[%c8_149, %c0_150, %c0_151] : memref<16x1x128xf32, #tpu.memory_space<vmem>>, vector<1x1x128xf32>
    %362 = vector.shape_cast %361 : vector<1x1x128xf32> to vector<1x128xf32>
    %363 = arith.mulf %360, %362 : vector<1x128xf32>
    %364 = vector.extract_strided_slice %312 {offsets = [9, 0], sizes = [1, 128], strides = [1, 1]} : vector<16x128xf32> to vector<1x128xf32>
    %365 = vector.extract_strided_slice %312 {offsets = [10, 0], sizes = [1, 128], strides = [1, 1]} : vector<16x128xf32> to vector<1x128xf32>
    %366 = vector.extract_strided_slice %312 {offsets = [11, 0], sizes = [1, 128], strides = [1, 1]} : vector<16x128xf32> to vector<1x128xf32>
    %cst_152 = arith.constant 0.000000e+00 : f32
    %367 = vector.broadcast %cst_152 : f32 to vector<1x1xf32>
    %368 = tpu.concatenate %367, %366 in 1 : vector<1x1xf32>, vector<1x128xf32> -> vector<1x129xf32>
    %369 = vector.extract_strided_slice %368 {offsets = [0, 0], sizes = [1, 128], strides = [1, 1]} : vector<1x129xf32> to vector<1x128xf32>
    %c11_153 = arith.constant 11 : index
    %c0_154 = arith.constant 0 : index
    %c0_155 = arith.constant 0 : index
    %370 = vector.load %arg12[%c11_153, %c0_154, %c0_155] : memref<16x1x128xf32, #tpu.memory_space<vmem>>, vector<1x1x128xf32>
    %371 = vector.shape_cast %370 : vector<1x1x128xf32> to vector<1x128xf32>
    %372 = arith.mulf %369, %371 : vector<1x128xf32>
    %373 = vector.extract_strided_slice %312 {offsets = [12, 0], sizes = [1, 128], strides = [1, 1]} : vector<16x128xf32> to vector<1x128xf32>
    %cst_156 = arith.constant 0.000000e+00 : f32
    %374 = vector.broadcast %cst_156 : f32 to vector<1x7xf32>
    %375 = tpu.concatenate %374, %373 in 1 : vector<1x7xf32>, vector<1x128xf32> -> vector<1x135xf32>
    %376 = vector.extract_strided_slice %375 {offsets = [0, 0], sizes = [1, 128], strides = [1, 1]} : vector<1x135xf32> to vector<1x128xf32>
    %c12_157 = arith.constant 12 : index
    %c0_158 = arith.constant 0 : index
    %c0_159 = arith.constant 0 : index
    %377 = vector.load %arg12[%c12_157, %c0_158, %c0_159] : memref<16x1x128xf32, #tpu.memory_space<vmem>>, vector<1x1x128xf32>
    %378 = vector.shape_cast %377 : vector<1x1x128xf32> to vector<1x128xf32>
    %379 = arith.mulf %376, %378 : vector<1x128xf32>
    %380 = vector.extract_strided_slice %312 {offsets = [13, 0], sizes = [1, 128], strides = [1, 1]} : vector<16x128xf32> to vector<1x128xf32>
    %cst_160 = arith.constant 0.000000e+00 : f32
    %381 = vector.broadcast %cst_160 : f32 to vector<1x8xf32>
    %382 = tpu.concatenate %381, %380 in 1 : vector<1x8xf32>, vector<1x128xf32> -> vector<1x136xf32>
    %383 = vector.extract_strided_slice %382 {offsets = [0, 0], sizes = [1, 128], strides = [1, 1]} : vector<1x136xf32> to vector<1x128xf32>
    %c13_161 = arith.constant 13 : index
    %c0_162 = arith.constant 0 : index
    %c0_163 = arith.constant 0 : index
    %384 = vector.load %arg12[%c13_161, %c0_162, %c0_163] : memref<16x1x128xf32, #tpu.memory_space<vmem>>, vector<1x1x128xf32>
    %385 = vector.shape_cast %384 : vector<1x1x128xf32> to vector<1x128xf32>
    %386 = arith.mulf %383, %385 : vector<1x128xf32>
    %387 = vector.extract_strided_slice %312 {offsets = [14, 0], sizes = [1, 128], strides = [1, 1]} : vector<16x128xf32> to vector<1x128xf32>
    %cst_164 = arith.constant 0.000000e+00 : f32
    %388 = vector.broadcast %cst_164 : f32 to vector<1x8xf32>
    %389 = tpu.concatenate %388, %387 in 1 : vector<1x8xf32>, vector<1x128xf32> -> vector<1x136xf32>
    %390 = vector.extract_strided_slice %389 {offsets = [0, 0], sizes = [1, 128], strides = [1, 1]} : vector<1x136xf32> to vector<1x128xf32>
    %c14_165 = arith.constant 14 : index
    %c0_166 = arith.constant 0 : index
    %c0_167 = arith.constant 0 : index
    %391 = vector.load %arg12[%c14_165, %c0_166, %c0_167] : memref<16x1x128xf32, #tpu.memory_space<vmem>>, vector<1x1x128xf32>
    %392 = vector.shape_cast %391 : vector<1x1x128xf32> to vector<1x128xf32>
    %393 = arith.mulf %390, %392 : vector<1x128xf32>
    %394 = vector.extract_strided_slice %312 {offsets = [15, 0], sizes = [1, 128], strides = [1, 1]} : vector<16x128xf32> to vector<1x128xf32>
    %cst_168 = arith.constant 0.000000e+00 : f32
    %395 = vector.broadcast %cst_168 : f32 to vector<1x9xf32>
    %396 = tpu.concatenate %395, %394 in 1 : vector<1x9xf32>, vector<1x128xf32> -> vector<1x137xf32>
    %397 = vector.extract_strided_slice %396 {offsets = [0, 0], sizes = [1, 128], strides = [1, 1]} : vector<1x137xf32> to vector<1x128xf32>
    %c15_169 = arith.constant 15 : index
    %c0_170 = arith.constant 0 : index
    %c0_171 = arith.constant 0 : index
    %398 = vector.load %arg12[%c15_169, %c0_170, %c0_171] : memref<16x1x128xf32, #tpu.memory_space<vmem>>, vector<1x1x128xf32>
    %399 = vector.shape_cast %398 : vector<1x1x128xf32> to vector<1x128xf32>
    %400 = arith.mulf %397, %399 : vector<1x128xf32>
    %401 = arith.addf %348, %356 : vector<1x128xf32>
    %402 = arith.addf %386, %400 : vector<1x128xf32>
    %403 = arith.addf %401, %402 : vector<1x128xf32>
    %404 = arith.addf %347, %349 : vector<1x128xf32>
    %405 = arith.addf %379, %393 : vector<1x128xf32>
    %406 = arith.addf %404, %405 : vector<1x128xf32>
    %407 = arith.addf %326, %340 : vector<1x128xf32>
    %408 = arith.addf %364, %372 : vector<1x128xf32>
    %409 = arith.addf %407, %408 : vector<1x128xf32>
    %410 = arith.addf %319, %333 : vector<1x128xf32>
    %411 = arith.addf %363, %365 : vector<1x128xf32>
    %412 = arith.addf %410, %411 : vector<1x128xf32>
    %413 = tpu.concatenate %403, %406, %409, %412 in 1 : vector<1x128xf32>, vector<1x128xf32>, vector<1x128xf32>, vector<1x128xf32> -> vector<1x512xf32>
    %c0_172 = arith.constant 0 : index
    %c0_173 = arith.constant 0 : index
    %414 = vector.load %arg13[%c0_172, %c0_173] : memref<1x1xf32, #tpu.memory_space<vmem>>, vector<1x1xf32>
    %415 = vector.broadcast %414 : vector<1x1xf32> to vector<1x512xf32>
    %416 = arith.addf %413, %415 : vector<1x512xf32>
    %417 = math.tanh %416 : vector<1x512xf32>
    %c0_174 = arith.constant 0 : index
    %c0_175 = arith.constant 0 : index
    %418 = vector.load %arg14[%c0_174, %c0_175] : memref<1x512xf32, #tpu.memory_space<vmem>>, vector<1x512xf32>
    tpu.vector_store %arg14[%c0_174, %c0_175], %417 {strides = array<i32>} : memref<1x512xf32, #tpu.memory_space<vmem>>, vector<1x512xf32>,
    return
  }
  func.func @transform_0(%arg0: i32) -> (i32, i32) {
    %c0_i32 = arith.constant 0 : i32
    %c0_i32_0 = arith.constant 0 : i32
    %c0_i32_1 = arith.constant 0 : i32
    return %c0_i32, %c0_i32_0 : i32, i32
  }
  func.func @transform_1(%arg0: i32) -> (i32, i32) {
    %c0_i32 = arith.constant 0 : i32
    %c0_i32_0 = arith.constant 0 : i32
    %c0_i32_1 = arith.constant 0 : i32
    return %c0_i32, %c0_i32_0 : i32, i32
  }
  func.func @transform_2(%arg0: i32) -> (i32, i32, i32) {
    %c0_i32 = arith.constant 0 : i32
    %c0_i32_0 = arith.constant 0 : i32
    %c0_i32_1 = arith.constant 0 : i32
    %c0_i32_2 = arith.constant 0 : i32
    return %c0_i32, %c0_i32_0, %c0_i32_1 : i32, i32, i32
  }
  func.func @transform_3(%arg0: i32) -> (i32, i32) {
    %c0_i32 = arith.constant 0 : i32
    %c0_i32_0 = arith.constant 0 : i32
    %c0_i32_1 = arith.constant 0 : i32
    return %c0_i32, %c0_i32_0 : i32, i32
  }
  func.func @transform_4(%arg0: i32) -> (i32, i32) {
    %c0_i32 = arith.constant 0 : i32
    %c0_i32_0 = arith.constant 0 : i32
    %c0_i32_1 = arith.constant 0 : i32
    return %c0_i32, %c0_i32_0 : i32, i32
  }
  func.func @transform_5(%arg0: i32) -> (i32, i32, i32) {
    %c0_i32 = arith.constant 0 : i32
    %c0_i32_0 = arith.constant 0 : i32
    %c0_i32_1 = arith.constant 0 : i32
    %c0_i32_2 = arith.constant 0 : i32
    return %c0_i32, %c0_i32_0, %c0_i32_1 : i32, i32, i32
  }
  func.func @transform_6(%arg0: i32) -> (i32, i32) {
    %c0_i32 = arith.constant 0 : i32
    %c0_i32_0 = arith.constant 0 : i32
    %c0_i32_1 = arith.constant 0 : i32
    return %c0_i32, %c0_i32_0 : i32, i32
  }
  func.func @transform_7(%arg0: i32) -> (i32, i32) {
    %c0_i32 = arith.constant 0 : i32
    %c0_i32_0 = arith.constant 0 : i32
    %c0_i32_1 = arith.constant 0 : i32
    return %c0_i32, %c0_i32_0 : i32, i32
  }
  func.func @transform_8(%arg0: i32) -> (i32, i32, i32) {
    %c0_i32 = arith.constant 0 : i32
    %c0_i32_0 = arith.constant 0 : i32
    %c0_i32_1 = arith.constant 0 : i32
    %c0_i32_2 = arith.constant 0 : i32
    return %c0_i32, %c0_i32_0, %c0_i32_1 : i32, i32, i32
  }
  func.func @transform_9(%arg0: i32) -> (i32, i32) {
    %c0_i32 = arith.constant 0 : i32
    %c0_i32_0 = arith.constant 0 : i32
    %c0_i32_1 = arith.constant 0 : i32
    return %c0_i32, %c0_i32_0 : i32, i32
  }
  func.func @transform_10(%arg0: i32) -> (i32, i32) {
    %c0_i32 = arith.constant 0 : i32
    %c0_i32_0 = arith.constant 0 : i32
    %c0_i32_1 = arith.constant 0 : i32
    return %c0_i32, %c0_i32_0 : i32, i32
  }
  func.func @transform_11(%arg0: i32) -> (i32, i32, i32) {
    %c0_i32 = arith.constant 0 : i32
    %c0_i32_0 = arith.constant 0 : i32
    %c0_i32_1 = arith.constant 0 : i32
    %c0_i32_2 = arith.constant 0 : i32
    return %c0_i32, %c0_i32_0, %c0_i32_1 : i32, i32, i32
  }
  func.func @transform_12(%arg0: i32) -> (i32, i32) {
    %c0_i32 = arith.constant 0 : i32
    %c0_i32_0 = arith.constant 0 : i32
    %c0_i32_1 = arith.constant 0 : i32
    return %c0_i32, %c0_i32_0 : i32, i32
  }
  func.func @transform_13(%arg0: i32) -> (i32, i32) {
    %c0_i32 = arith.constant 0 : i32
    %c0_i32_0 = arith.constant 0 : i32
    %c0_i32_1 = arith.constant 0 : i32
    return %c0_i32, %c0_i32_0 : i32, i32
  }
}

</mosaic_0001>

<llo_original>
// kernel: fwd.1
$region0: #{fwd.1}
  #allocation0 [shape = 'u32[]', space=smem, size = 0x4, offset = 0x4, fixed_abs, tag = 'smem constant byte address 0x4 - core index']
  #allocation1 [shape = 'u32[144,128]{1,0:T(1,128)}', space=vmem, size = 0x12000, scoped, tag = 'internal scratch']
  #allocation2 [shape = 'f32[1,1]{1,0:T(1,128)S(1)}', space=vmem, size = 0x200, scoped, tag = 'scoped memory for fwd.1']
  %s0 = inlined_call_operand.vmem [shape: f32[24,2], index: 0, kind: input, shape index: {}]
  %s1 = inlined_call_operand.hbm [shape: bf16[256,24], index: 1, kind: input, shape index: {}]
  %s2 = inlined_call_operand.vmem [shape: f32[4,1,2], index: 2, kind: input, shape index: {}]
  %s3 = inlined_call_operand.hbm [shape: bf16[8,8], index: 3, kind: input, shape index: {}]
  %s4 = inlined_call_operand.hbm [shape: bf16[512,64], index: 4, kind: input, shape index: {}]
  %s5 = inlined_call_operand.hbm [shape: f32[16,1,8], index: 5, kind: input, shape index: {}]
  %s6 = inlined_call_operand.vmem [shape: bf16[32,32], index: 6, kind: input, shape index: {}]
  %s7 = inlined_call_operand.hbm [shape: bf16[256,32], index: 7, kind: input, shape index: {}]
  %s8 = inlined_call_operand.vmem [shape: f32[16,1,32], index: 8, kind: input, shape index: {}]
  %s9 = inlined_call_operand.vmem [shape: bf16[128,128], index: 9, kind: input, shape index: {}]
  %s10 = inlined_call_operand.hbm [shape: bf16[16,16], index: 10, kind: input, shape index: {}]
  %s11 = inlined_call_operand.vmem [shape: f32[16,1,128], index: 11, kind: input, shape index: {}]
  %s12 = inlined_call_operand.<no memory space> [shape: f32[1,1], index: 12, kind: input, shape index: {}]
  %s13 = inlined_call_operand.vmem [shape: f32[1,512], index: 13, kind: output, shape index: {}]
  %s14 = sld [smem:[#allocation0]]
  $region86: #{fwd.1} parent=0
    _
  %s16 = ssub.s32 1, %s14
  %s17 = scalar_select 0, %s16, %s14
  %v18 = vstv %s12
  %19 = vst [vmem:[#allocation2] sm:$0x1] %v18
  $region1: #{fwd.1} parent=0
    #allocation3 [shape = 'u8[65536]{0}', space=vmem, size = 0x10000, scoped, tag = 'input window, operand 1, single buffered']
    #allocation4 [shape = 's32[1]{0}', space=sflag, size = 0x4, scoped, tag = 'scoped memory for fwd.1']
    #allocation5 [shape = 'u8[2048]{0}', space=vmem, size = 0x800, scoped, tag = 'input window, operand 3, single buffered']
    #allocation6 [shape = 's32[1]{0}', space=sflag, size = 0x4, scoped, tag = 'scoped memory for fwd.1']
    #allocation7 [shape = 'u8[131072]{0}', space=vmem, size = 0x20000, scoped, tag = 'input window, operand 4, single buffered']
    #allocation8 [shape = 'u8[8192]{0}', space=vmem, size = 0x2000, scoped, tag = 'input window, operand 5, single buffered']
    #allocation9 [shape = 's32[1]{0}', space=sflag, size = 0x4, scoped, tag = 'scoped memory for fwd.1']
    #allocation10 [shape = 'u8[65536]{0}', space=vmem, size = 0x10000, scoped, tag = 'input window, operand 7, single buffered']
    #allocation11 [shape = 'u8[4096]{0}', space=vmem, size = 0x1000, scoped, tag = 'input window, operand 10, single buffered']
    #allocation12 [shape = 's32[1]{0}', space=sflag, size = 0x4, scoped, tag = 'scoped memory for fwd.1']
    %20 = vsyncpa [#allocation4], 0
    %21 = vsyncpa [#allocation6], 0
    %22 = vsyncpa [#allocation9], 0
    %23 = vsyncpa [#allocation12], 0
    // Predicated region
    $region2: #{fwd.1} parent=1 // pred_check
      _
    $region3: #{fwd.1} parent=1 // pred_check_branch
      %25 = sbr.rel (0) target = $region5
    $region4: #{fwd.1} parent=1 // pred_region
      _
    $region5: #{fwd.1} parent=1 // pred_fallthru
      _
    // Predicated region
    $region6: #{fwd.1} parent=1 // pred_check
      _
    $region7: #{fwd.1} parent=1 // pred_check_branch
      %27 = sbr.rel (0) target = $region9
    $region8: #{fwd.1} parent=1 // pred_region
      %s29 = ssub.s32 2048, 2048
      %30 = vsyncadd [#allocation4], %s29
      %s31 = sshll.u32 [#allocation3], 4
      %s32 = int_to_ptr.vmem [resolvable:$true] %s31
      %37 = dma.hbm_to_vmem [thread:$0]  %s1, 2048, %s32, [#allocation4], 64, 64, 4
    $region9: #{fwd.1} parent=1 // pred_fallthru
      _
    // Predicated region
    $region10: #{fwd.1} parent=1 // pred_check
      _
    $region11: #{fwd.1} parent=1 // pred_check_branch
      %39 = sbr.rel (0) target = $region13
    $region12: #{fwd.1} parent=1 // pred_region
      _
    $region13: #{fwd.1} parent=1 // pred_fallthru
      _
    // Predicated region
    $region14: #{fwd.1} parent=1 // pred_check
      _
    $region15: #{fwd.1} parent=1 // pred_check_branch
      %41 = sbr.rel (0) target = $region17
    $region16: #{fwd.1} parent=1 // pred_region
      %s43 = ssub.s32 64, 64
      %44 = vsyncadd [#allocation6], %s43
      %s46 = sshll.u32 [#allocation5], 4
      %s47 = int_to_ptr.vmem [resolvable:$true] %s46
      %49 = dma.hbm_to_vmem [thread:$0]  %s3, 64, %s47, [#allocation6]
    $region17: #{fwd.1} parent=1 // pred_fallthru
      _
    // Predicated region
    $region18: #{fwd.1} parent=1 // pred_check
      _
    $region19: #{fwd.1} parent=1 // pred_check_branch
      %51 = sbr.rel (0) target = $region21
    $region20: #{fwd.1} parent=1 // pred_region
      %s53 = ssub.s32 4096, 4096
      %54 = vsyncadd [#allocation6], %s53
      %s55 = sshll.u32 [#allocation7], 4
      %s56 = int_to_ptr.vmem [resolvable:$true] %s55
      %61 = dma.hbm_to_vmem [thread:$0]  %s4, 4096, %s56, [#allocation6], 64, 64, 4
    $region21: #{fwd.1} parent=1 // pred_fallthru
      _
    // Predicated region
    $region22: #{fwd.1} parent=1 // pred_check
      _
    $region23: #{fwd.1} parent=1 // pred_check_branch
      %63 = sbr.rel (0) target = $region25
    $region24: #{fwd.1} parent=1 // pred_region
      %s65 = ssub.s32 256, 256
      %66 = vsyncadd [#allocation9], %s65
      %s67 = sshll.u32 [#allocation8], 4
      %s68 = int_to_ptr.vmem [resolvable:$true] %s67
      %73 = dma.hbm_to_vmem [thread:$0]  %s5, 256, %s68, [#allocation9], 16, 16, 1
    $region25: #{fwd.1} parent=1 // pred_fallthru
      _
    // Predicated region
    $region26: #{fwd.1} parent=1 // pred_check
      _
    $region27: #{fwd.1} parent=1 // pred_check_branch
      %75 = sbr.rel (0) target = $region29
    $region28: #{fwd.1} parent=1 // pred_region
      _
    $region29: #{fwd.1} parent=1 // pred_fallthru
      _
    // Predicated region
    $region30: #{fwd.1} parent=1 // pred_check
      _
    $region31: #{fwd.1} parent=1 // pred_check_branch
      %77 = sbr.rel (0) target = $region33
    $region32: #{fwd.1} parent=1 // pred_region
      %s79 = ssub.s32 2048, 2048
      %80 = vsyncadd [#allocation9], %s79
      %s81 = sshll.u32 [#allocation10], 4
      %s82 = int_to_ptr.vmem [resolvable:$true] %s81
      %87 = dma.hbm_to_vmem [thread:$0]  %s7, 2048, %s82, [#allocation9], 64, 64, 4
    $region33: #{fwd.1} parent=1 // pred_fallthru
      _
    // Predicated region
    $region34: #{fwd.1} parent=1 // pred_check
      _
    $region35: #{fwd.1} parent=1 // pred_check_branch
      %89 = sbr.rel (0) target = $region37
    $region36: #{fwd.1} parent=1 // pred_region
      _
    $region37: #{fwd.1} parent=1 // pred_fallthru
      _
    // Predicated region
    $region38: #{fwd.1} parent=1 // pred_check
      _
    $region39: #{fwd.1} parent=1 // pred_check_branch
      %91 = sbr.rel (0) target = $region41
    $region40: #{fwd.1} parent=1 // pred_region
      _
    $region41: #{fwd.1} parent=1 // pred_fallthru
      _
    // Predicated region
    $region42: #{fwd.1} parent=1 // pred_check
      _
    $region43: #{fwd.1} parent=1 // pred_check_branch
      %93 = sbr.rel (0) target = $region45
    $region44: #{fwd.1} parent=1 // pred_region
      %s95 = ssub.s32 128, 128
      %96 = vsyncadd [#allocation12], %s95
      %s97 = sshll.u32 [#allocation11], 4
      %s98 = int_to_ptr.vmem [resolvable:$true] %s97
      %103 = dma.hbm_to_vmem [thread:$0]  %s10, 128, %s98, [#allocation12], 64, 64, 4
    $region45: #{fwd.1} parent=1 // pred_fallthru
      _
    // Predicated region
    $region46: #{fwd.1} parent=1 // pred_check
      _
    $region47: #{fwd.1} parent=1 // pred_check_branch
      %105 = sbr.rel (0) target = $region49
    $region48: #{fwd.1} parent=1 // pred_region
      _
    $region49: #{fwd.1} parent=1 // pred_fallthru
      _
    // Predicated region
    $region50: #{fwd.1} parent=1 // pred_check
      _
    $region51: #{fwd.1} parent=1 // pred_check_branch
      %107 = sbr.rel (0) target = $region53
    $region52: #{fwd.1} parent=1 // pred_region
      _
    $region53: #{fwd.1} parent=1 // pred_fallthru
      _
    // Predicated region
    $region54: #{fwd.1} parent=1 // pred_check
      _
    $region55: #{fwd.1} parent=1 // pred_check_branch
      %109 = sbr.rel (0) target = $region57
    $region56: #{fwd.1} parent=1 // pred_region
      %110 = dma.done [#allocation4], 2048
    $region57: #{fwd.1} parent=1 // pred_fallthru
      _
    // Predicated region
    $region58: #{fwd.1} parent=1 // pred_check
      _
    $region59: #{fwd.1} parent=1 // pred_check_branch
      %112 = sbr.rel (0) target = $region61
    $region60: #{fwd.1} parent=1 // pred_region
      %113 = dma.done [#allocation6], 64
    $region61: #{fwd.1} parent=1 // pred_fallthru
      _
    // Predicated region
    $region62: #{fwd.1} parent=1 // pred_check
      _
    $region63: #{fwd.1} parent=1 // pred_check_branch
      %115 = sbr.rel (0) target = $region65
    $region64: #{fwd.1} parent=1 // pred_region
      %116 = dma.done [#allocation6], 4096
    $region65: #{fwd.1} parent=1 // pred_fallthru
      _
    // Predicated region
    $region66: #{fwd.1} parent=1 // pred_check
      _
    $region67: #{fwd.1} parent=1 // pred_check_branch
      %118 = sbr.rel (0) target = $region69
    $region68: #{fwd.1} parent=1 // pred_region
      %119 = dma.done [#allocation9], 256
    $region69: #{fwd.1} parent=1 // pred_fallthru
      _
    // Predicated region
    $region70: #{fwd.1} parent=1 // pred_check
      _
    $region71: #{fwd.1} parent=1 // pred_check_branch
      %121 = sbr.rel (0) target = $region73
    $region72: #{fwd.1} parent=1 // pred_region
      %122 = dma.done [#allocation9], 2048
    $region73: #{fwd.1} parent=1 // pred_fallthru
      _
    // Predicated region
    $region74: #{fwd.1} parent=1 // pred_check
      _
    $region75: #{fwd.1} parent=1 // pred_check_branch
      %124 = sbr.rel (0) target = $region77
    $region76: #{fwd.1} parent=1 // pred_region
      %125 = dma.done [#allocation12], 128
    $region77: #{fwd.1} parent=1 // pred_fallthru
      _
    %v127 = vld [vmem:[%s0] sm:$0xff]
    %v128 = vld [vmem:[%s0 + $0x8] sm:$0xff]
    %v129 = vld [vmem:[%s0 + $0x10] sm:$0xff]
    %v130 = vpack.c.bf16 %v128, %v127
    %v131 = vpack.c.bf16 %v129, %v129
    %v132 = vld [vmem:[#allocation3] sm:$0xf]
    %v133 = vld [vmem:[#allocation3 + $0x4] sm:$0xf]
    %v134 = vld [vmem:[#allocation3 + $0x8] sm:$0xf]
    %v135 = vld [vmem:[#allocation3 + $0xc] sm:$0xf]
    %v136 = vld [vmem:[#allocation3 + $0x10] sm:$0xf]
    %v137 = vld [vmem:[#allocation3 + $0x14] sm:$0xf]
    %v138 = vld [vmem:[#allocation3 + $0x18] sm:$0xf]
    %v139 = vld [vmem:[#allocation3 + $0x1c] sm:$0xf]
    %v140 = vld [vmem:[#allocation3 + $0x20] sm:$0xf]
    %v141 = vld [vmem:[#allocation3 + $0x24] sm:$0xf]
    %v142 = vld [vmem:[#allocation3 + $0x28] sm:$0xf]
    %v143 = vld [vmem:[#allocation3 + $0x2c] sm:$0xf]
    %v144 = vld [vmem:[#allocation3 + $0x30] sm:$0xf]
    %v145 = vld [vmem:[#allocation3 + $0x34] sm:$0xf]
    %v146 = vld [vmem:[#allocation3 + $0x38] sm:$0xf]
    %v147 = vld [vmem:[#allocation3 + $0x3c] sm:$0xf]
    %v148 = vld [vmem:[#allocation3 + $0x40] sm:$0xf]
    %v149 = vld [vmem:[#allocation3 + $0x44] sm:$0xf]
    %v150 = vld [vmem:[#allocation3 + $0x48] sm:$0xf]
    %v151 = vld [vmem:[#allocation3 + $0x4c] sm:$0xf]
    %v152 = vld [vmem:[#allocation3 + $0x50] sm:$0xf]
    %v153 = vld [vmem:[#allocation3 + $0x54] sm:$0xf]
    %v154 = vld [vmem:[#allocation3 + $0x58] sm:$0xf]
    %v155 = vld [vmem:[#allocation3 + $0x5c] sm:$0xf]
    %v156 = vld [vmem:[#allocation3 + $0x60] sm:$0xf]
    %v157 = vld [vmem:[#allocation3 + $0x64] sm:$0xf]
    %v158 = vld [vmem:[#allocation3 + $0x68] sm:$0xf]
    %v159 = vld [vmem:[#allocation3 + $0x6c] sm:$0xf]
    %v160 = vld [vmem:[#allocation3 + $0x70] sm:$0xf]
    %v161 = vld [vmem:[#allocation3 + $0x74] sm:$0xf]
    %v162 = vld [vmem:[#allocation3 + $0x78] sm:$0xf]
    %v163 = vld [vmem:[#allocation3 + $0x7c] sm:$0xf]
    %v196 = vunpack.c.l.b16 %v132
    %v197 = vunpack.c.l.b16 %v133
    %v198 = vunpack.c.l.b16 %v134
    %v199 = vunpack.c.l.b16 %v135
    %v200 = vunpack.c.l.b16 %v136
    %v201 = vunpack.c.l.b16 %v137
    %v202 = vunpack.c.l.b16 %v138
    %v203 = vunpack.c.l.b16 %v139
    %v204 = vunpack.c.l.b16 %v140
    %v205 = vunpack.c.l.b16 %v141
    %v206 = vunpack.c.l.b16 %v142
    %v207 = vunpack.c.l.b16 %v143
    %v208 = vunpack.c.l.b16 %v144
    %v209 = vunpack.c.l.b16 %v145
    %v210 = vunpack.c.l.b16 %v146
    %v211 = vunpack.c.l.b16 %v147
    %v212 = vunpack.c.l.b16 %v148
    %v213 = vunpack.c.l.b16 %v149
    %v214 = vunpack.c.l.b16 %v150
    %v215 = vunpack.c.l.b16 %v151
    %v216 = vunpack.c.l.b16 %v152
    %v217 = vunpack.c.l.b16 %v153
    %v218 = vunpack.c.l.b16 %v154
    %v219 = vunpack.c.l.b16 %v155
    %v220 = vunpack.c.l.b16 %v156
    %v221 = vunpack.c.l.b16 %v157
    %v222 = vunpack.c.l.b16 %v158
    %v223 = vunpack.c.l.b16 %v159
    %v224 = vunpack.c.l.b16 %v160
    %v225 = vunpack.c.l.b16 %v161
    %v226 = vunpack.c.l.b16 %v162
    %v227 = vunpack.c.l.b16 %v163
    %v228 = vpack.c.b16 %v197, %v196
    %v229 = vpack.c.b16 %v199, %v198
    %v230 = vpack.c.b16 %v201, %v200
    %v231 = vpack.c.b16 %v203, %v202
    %v232 = vpack.c.b16 %v205, %v204
    %v233 = vpack.c.b16 %v207, %v206
    %v234 = vpack.c.b16 %v209, %v208
    %v235 = vpack.c.b16 %v211, %v210
    %v236 = vpack.c.b16 %v213, %v212
    %v237 = vpack.c.b16 %v215, %v214
    %v238 = vpack.c.b16 %v217, %v216
    %v239 = vpack.c.b16 %v219, %v218
    %v240 = vpack.c.b16 %v221, %v220
    %v241 = vpack.c.b16 %v223, %v222
    %v242 = vpack.c.b16 %v225, %v224
    %v243 = vpack.c.b16 %v227, %v226
    %vm244 = vcmask 195584
    %v246 = vsel %vm244, %v228, 0
    %v249 = vsel %vm244, %v229, 0
    %v252 = vsel %vm244, %v230, 0
    %v255 = vsel %vm244, %v231, 0
    %v258 = vsel %vm244, %v232, 0
    %v261 = vsel %vm244, %v233, 0
    %v264 = vsel %vm244, %v234, 0
    %v267 = vsel %vm244, %v235, 0
    %v270 = vsel %vm244, %v236, 0
    %v273 = vsel %vm244, %v237, 0
    %v276 = vsel %vm244, %v238, 0
    %v279 = vsel %vm244, %v239, 0
    %v282 = vsel %vm244, %v240, 0
    %v285 = vsel %vm244, %v241, 0
    %v288 = vsel %vm244, %v242, 0
    %v291 = vsel %vm244, %v243, 0
    %vm293 = vcmask 1043456
    %v295 = vsel %vm293, %v131, 0
    %297 = vmatprep.subr.bf16.mxu0 0
    %298 = vmatpush1.bf16.msra.mxu0 %v130
    %299 = vmatprep.subr.bf16.mxu0 0
    %300 = vmatpush1.bf16.msra.mxu0 %v295
    %301 = vmatprep.subr.bf16.mxu0 0
    %302 = vmatpush1.bf16.msra.mxu0 0
    %303 = vmatprep.subr.bf16.mxu0 0
    %304 = vmatpush1.bf16.msra.mxu0 0
    %305 = vmatprep.subr.bf16.mxu0 0
    %306 = vmatpush1.bf16.msra.mxu0 0
    %307 = vmatprep.subr.bf16.mxu0 0
    %308 = vmatpush1.bf16.msra.mxu0 0
    %309 = vmatprep.subr.bf16.mxu0 0
    %310 = vmatpush1.bf16.msra.mxu0 0
    %311 = vmatprep.subr.bf16.mxu0 0
    %312 = vmatpush1.bf16.msra.mxu0 0
    %313 = vmatprep.subr.bf16.mxu0 0
    %314 = vmatpush1.bf16.msra.mxu0 0
    %315 = vmatprep.subr.bf16.mxu0 0
    %316 = vmatpush1.bf16.msra.mxu0 0
    %317 = vmatprep.subr.bf16.mxu0 0
    %318 = vmatpush1.bf16.msra.mxu0 0
    %319 = vmatprep.subr.bf16.mxu0 0
    %320 = vmatpush1.bf16.msra.mxu0 0
    %321 = vmatprep.subr.bf16.mxu0 0
    %322 = vmatpush1.bf16.msra.mxu0 0
    %323 = vmatprep.subr.bf16.mxu0 0
    %324 = vmatpush1.bf16.msra.mxu0 0
    %325 = vmatprep.subr.bf16.mxu0 0
    %326 = vmatpush1.bf16.msra.mxu0 0
    %327 = vmatprep.subr.bf16.mxu0 0
    %328 = vmatpush1.bf16.msra.mxu0 0
    %329 = vmatprep.mubr.bf16.mxu0 0
    %330 = vmatmul.mubr.bf16.gmra.mrb[0].mxu0 %v246
    %v331 = vpop.f32.mrb[0].mxu0
    %v332 = vadd.f32 0.0, %v331
    %v333 = vpop.f32.mrb[0].mxu0
    %v334 = vpop.f32.mrb[0].mxu0
    %v335 = vadd.f32 0.0, %v334
    %v336 = vpop.f32.mrb[0].mxu0
    %337 = vmatprep.mubr.bf16.mxu0 0
    %338 = vmatmul.mubr.bf16.gmra.mrb[0].mxu0 %v249
    %v339 = vpop.f32.mrb[0].mxu0
    %v340 = vadd.f32 0.0, %v339
    %v341 = vpop.f32.mrb[0].mxu0
    %v342 = vpop.f32.mrb[0].mxu0
    %v343 = vadd.f32 0.0, %v342
    %v344 = vpop.f32.mrb[0].mxu0
    %345 = vmatprep.mubr.bf16.mxu0 0
    %346 = vmatmul.mubr.bf16.gmra.mrb[0].mxu0 %v252
    %v347 = vpop.f32.mrb[0].mxu0
    %v348 = vadd.f32 0.0, %v347
    %v349 = vpop.f32.mrb[0].mxu0
    %v350 = vpop.f32.mrb[0].mxu0
    %v351 = vadd.f32 0.0, %v350
    %v352 = vpop.f32.mrb[0].mxu0
    %353 = vmatprep.mubr.bf16.mxu0 0
    %354 = vmatmul.mubr.bf16.gmra.mrb[0].mxu0 %v255
    %v355 = vpop.f32.mrb[0].mxu0
    %v356 = vadd.f32 0.0, %v355
    %v357 = vpop.f32.mrb[0].mxu0
    %v358 = vpop.f32.mrb[0].mxu0
    %v359 = vadd.f32 0.0, %v358
    %v360 = vpop.f32.mrb[0].mxu0
    %361 = vmatprep.mubr.bf16.mxu0 0
    %362 = vmatmul.mubr.bf16.gmra.mrb[0].mxu0 %v258
    %v363 = vpop.f32.mrb[0].mxu0
    %v364 = vadd.f32 0.0, %v363
    %v365 = vpop.f32.mrb[0].mxu0
    %v366 = vpop.f32.mrb[0].mxu0
    %v367 = vadd.f32 0.0, %v366
    %v368 = vpop.f32.mrb[0].mxu0
    %369 = vmatprep.mubr.bf16.mxu0 0
    %370 = vmatmul.mubr.bf16.gmra.mrb[0].mxu0 %v261
    %v371 = vpop.f32.mrb[0].mxu0
    %v372 = vadd.f32 0.0, %v371
    %v373 = vpop.f32.mrb[0].mxu0
    %v374 = vpop.f32.mrb[0].mxu0
    %v375 = vadd.f32 0.0, %v374
    %v376 = vpop.f32.mrb[0].mxu0
    %377 = vmatprep.mubr.bf16.mxu0 0
    %378 = vmatmul.mubr.bf16.gmra.mrb[0].mxu0 %v264
    %v379 = vpop.f32.mrb[0].mxu0
    %v380 = vadd.f32 0.0, %v379
    %v381 = vpop.f32.mrb[0].mxu0
    %v382 = vpop.f32.mrb[0].mxu0
    %v383 = vadd.f32 0.0, %v382
    %v384 = vpop.f32.mrb[0].mxu0
    %385 = vmatprep.mubr.bf16.mxu0 0
    %386 = vmatmul.mubr.bf16.gmra.mrb[0].mxu0 %v267
    %v387 = vpop.f32.mrb[0].mxu0
    %v388 = vadd.f32 0.0, %v387
    %v389 = vpop.f32.mrb[0].mxu0
    %v390 = vpop.f32.mrb[0].mxu0
    %v391 = vadd.f32 0.0, %v390
    %v392 = vpop.f32.mrb[0].mxu0
    %393 = vmatprep.mubr.bf16.mxu0 0
    %394 = vmatmul.mubr.bf16.gmra.mrb[0].mxu0 %v270
    %v395 = vpop.f32.mrb[0].mxu0
    %v396 = vadd.f32 0.0, %v395
    %v397 = vpop.f32.mrb[0].mxu0
    %v398 = vpop.f32.mrb[0].mxu0
    %v399 = vadd.f32 0.0, %v398
    %v400 = vpop.f32.mrb[0].mxu0
    %401 = vmatprep.mubr.bf16.mxu0 0
    %402 = vmatmul.mubr.bf16.gmra.mrb[0].mxu0 %v273
    %v403 = vpop.f32.mrb[0].mxu0
    %v404 = vadd.f32 0.0, %v403
    %v405 = vpop.f32.mrb[0].mxu0
    %v406 = vpop.f32.mrb[0].mxu0
    %v407 = vadd.f32 0.0, %v406
    %v408 = vpop.f32.mrb[0].mxu0
    %409 = vmatprep.mubr.bf16.mxu0 0
    %410 = vmatmul.mubr.bf16.gmra.mrb[0].mxu0 %v276
    %v411 = vpop.f32.mrb[0].mxu0
    %v412 = vadd.f32 0.0, %v411
    %v413 = vpop.f32.mrb[0].mxu0
    %v414 = vpop.f32.mrb[0].mxu0
    %v415 = vadd.f32 0.0, %v414
    %v416 = vpop.f32.mrb[0].mxu0
    %417 = vmatprep.mubr.bf16.mxu0 0
    %418 = vmatmul.mubr.bf16.gmra.mrb[0].mxu0 %v279
    %v419 = vpop.f32.mrb[0].mxu0
    %v420 = vadd.f32 0.0, %v419
    %v421 = vpop.f32.mrb[0].mxu0
    %v422 = vpop.f32.mrb[0].mxu0
    %v423 = vadd.f32 0.0, %v422
    %v424 = vpop.f32.mrb[0].mxu0
    %425 = vmatprep.mubr.bf16.mxu0 0
    %426 = vmatmul.mubr.bf16.gmra.mrb[0].mxu0 %v282
    %v427 = vpop.f32.mrb[0].mxu0
    %v428 = vadd.f32 0.0, %v427
    %v429 = vpop.f32.mrb[0].mxu0
    %v430 = vpop.f32.mrb[0].mxu0
    %v431 = vadd.f32 0.0, %v430
    %v432 = vpop.f32.mrb[0].mxu0
    %433 = vmatprep.mubr.bf16.mxu0 0
    %434 = vmatmul.mubr.bf16.gmra.mrb[0].mxu0 %v285
    %v435 = vpop.f32.mrb[0].mxu0
    %v436 = vadd.f32 0.0, %v435
    %v437 = vpop.f32.mrb[0].mxu0
    %v438 = vpop.f32.mrb[0].mxu0
    %v439 = vadd.f32 0.0, %v438
    %v440 = vpop.f32.mrb[0].mxu0
    %441 = vmatprep.mubr.bf16.mxu0 0
    %442 = vmatmul.mubr.bf16.gmra.mrb[0].mxu0 %v288
    %v443 = vpop.f32.mrb[0].mxu0
    %v444 = vadd.f32 0.0, %v443
    %v445 = vpop.f32.mrb[0].mxu0
    %v446 = vpop.f32.mrb[0].mxu0
    %v447 = vadd.f32 0.0, %v446
    %v448 = vpop.f32.mrb[0].mxu0
    %449 = vmatprep.mubr.bf16.mxu0 0
    %450 = vmatmul.mubr.bf16.gmra.mrb[0].mxu0 %v291
    %v451 = vpop.f32.mrb[0].mxu0
    %v452 = vadd.f32 0.0, %v451
    %v453 = vpop.f32.mrb[0].mxu0
    %v454 = vpop.f32.mrb[0].mxu0
    %v455 = vadd.f32 0.0, %v454
    %v456 = vpop.f32.mrb[0].mxu0
    %457 = vdwg.mxu0
    %466 = vrot.lane.b32.xlu0 %v364, 2
    %v467 = vpop.permute.xlu0 %466
    %468 = vrot.lane.b32.xlu0 %v367, 2
    %v469 = vpop.permute.xlu0 %468
    %470 = vrot.lane.b32.xlu0 %v372, 2
    %v471 = vpop.permute.xlu0 %470
    %472 = vrot.lane.b32.xlu0 %v375, 2
    %v473 = vpop.permute.xlu0 %472
    %474 = vrot.lane.b32.xlu0 %v380, 2
    %v475 = vpop.permute.xlu0 %474
    %476 = vrot.lane.b32.xlu0 %v383, 2
    %v477 = vpop.permute.xlu0 %476
    %478 = vrot.lane.b32.xlu0 %v388, 2
    %v479 = vpop.permute.xlu0 %478
    %480 = vrot.lane.b32.xlu0 %v391, 2
    %v481 = vpop.permute.xlu0 %480
    %498 = vrot.lane.b32.xlu0 %v396, 4
    %v499 = vpop.permute.xlu0 %498
    %500 = vrot.lane.b32.xlu0 %v399, 4
    %v501 = vpop.permute.xlu0 %500
    %502 = vrot.lane.b32.xlu0 %v404, 4
    %v503 = vpop.permute.xlu0 %502
    %504 = vrot.lane.b32.xlu0 %v407, 4
    %v505 = vpop.permute.xlu0 %504
    %506 = vrot.lane.b32.xlu0 %v412, 4
    %v507 = vpop.permute.xlu0 %506
    %508 = vrot.lane.b32.xlu0 %v415, 4
    %v509 = vpop.permute.xlu0 %508
    %510 = vrot.lane.b32.xlu0 %v420, 4
    %v511 = vpop.permute.xlu0 %510
    %512 = vrot.lane.b32.xlu0 %v423, 4
    %v513 = vpop.permute.xlu0 %512
    %530 = vrot.lane.b32.xlu0 %v428, 6
    %v531 = vpop.permute.xlu0 %530
    %532 = vrot.lane.b32.xlu0 %v431, 6
    %v533 = vpop.permute.xlu0 %532
    %534 = vrot.lane.b32.xlu0 %v436, 6
    %v535 = vpop.permute.xlu0 %534
    %536 = vrot.lane.b32.xlu0 %v439, 6
    %v537 = vpop.permute.xlu0 %536
    %538 = vrot.lane.b32.xlu0 %v444, 6
    %v539 = vpop.permute.xlu0 %538
    %540 = vrot.lane.b32.xlu0 %v447, 6
    %v541 = vpop.permute.xlu0 %540
    %542 = vrot.lane.b32.xlu0 %v452, 6
    %v543 = vpop.permute.xlu0 %542
    %544 = vrot.lane.b32.xlu0 %v455, 6
    %v545 = vpop.permute.xlu0 %544
    %vm554 = vcmask 15360
    %v555 = vsel %vm554, %v332, %v467
    %v556 = vsel %vm554, %v335, %v469
    %v557 = vsel %vm554, %v340, %v471
    %v558 = vsel %vm554, %v343, %v473
    %v559 = vsel %vm554, %v348, %v475
    %v560 = vsel %vm554, %v351, %v477
    %v561 = vsel %vm554, %v356, %v479
    %v562 = vsel %vm554, %v359, %v481
    %vm563 = vcmask 31744
    %v564 = vsel %vm563, %v555, %v499
    %v565 = vsel %vm563, %v556, %v501
    %v566 = vsel %vm563, %v557, %v503
    %v567 = vsel %vm563, %v558, %v505
    %v568 = vsel %vm563, %v559, %v507
    %v569 = vsel %vm563, %v560, %v509
    %v570 = vsel %vm563, %v561, %v511
    %v571 = vsel %vm563, %v562, %v513
    %vm572 = vcmask 48128
    %v573 = vsel %vm572, %v564, %v531
    %v574 = vsel %vm572, %v565, %v533
    %v575 = vsel %vm572, %v566, %v535
    %v576 = vsel %vm572, %v567, %v537
    %v577 = vsel %vm572, %v568, %v539
    %v578 = vsel %vm572, %v569, %v541
    %v579 = vsel %vm572, %v570, %v543
    %v580 = vsel %vm572, %v571, %v545
    %vm581 = vcmask 64512
    %v582 = vsel %vm581, %v573, 0.0
    %583 = vadd.xlane.f32.xlu0 %v582
    %v584 = vpop.xlane.xlu0 %583
    %v585 = vsel %vm581, %v574, 0.0
    %586 = vadd.xlane.f32.xlu0 %v585
    %v587 = vpop.xlane.xlu0 %586
    %v588 = vsel %vm581, %v575, 0.0
    %589 = vadd.xlane.f32.xlu0 %v588
    %v590 = vpop.xlane.xlu0 %589
    %v591 = vsel %vm581, %v576, 0.0
    %592 = vadd.xlane.f32.xlu0 %v591
    %v593 = vpop.xlane.xlu0 %592
    %v594 = vsel %vm581, %v577, 0.0
    %595 = vadd.xlane.f32.xlu0 %v594
    %v596 = vpop.xlane.xlu0 %595
    %v597 = vsel %vm581, %v578, 0.0
    %598 = vadd.xlane.f32.xlu0 %v597
    %v599 = vpop.xlane.xlu0 %598
    %v600 = vsel %vm581, %v579, 0.0
    %601 = vadd.xlane.f32.xlu0 %v600
    %v602 = vpop.xlane.xlu0 %601
    %v603 = vsel %vm581, %v580, 0.0
    %604 = vadd.xlane.f32.xlu0 %v603
    %v605 = vpop.xlane.xlu0 %604
    %v606 = vrcp.pop 8.0
    %v607 = vmul.f32 %v584, %v606
    %v608 = vmul.f32 %v587, %v606
    %v609 = vmul.f32 %v590, %v606
    %v610 = vmul.f32 %v593, %v606
    %v611 = vmul.f32 %v596, %v606
    %v612 = vmul.f32 %v599, %v606
    %v613 = vmul.f32 %v602, %v606
    %v614 = vmul.f32 %v605, %v606
    %v615 = vsub.f32 %v573, %v607
    %v616 = vsub.f32 %v574, %v608
    %v617 = vsub.f32 %v575, %v609
    %v618 = vsub.f32 %v576, %v610
    %v619 = vsub.f32 %v577, %v611
    %v620 = vsub.f32 %v578, %v612
    %v621 = vsub.f32 %v579, %v613
    %v622 = vsub.f32 %v580, %v614
    %v623 = vmul.f32 %v615, %v615
    %v624 = vmul.f32 %v616, %v616
    %v625 = vmul.f32 %v617, %v617
    %v626 = vmul.f32 %v618, %v618
    %v627 = vmul.f32 %v619, %v619
    %v628 = vmul.f32 %v620, %v620
    %v629 = vmul.f32 %v621, %v621
    %v630 = vmul.f32 %v622, %v622
    %v631 = vsel %vm581, %v623, 0.0
    %632 = vadd.xlane.f32.xlu0 %v631
    %v633 = vpop.xlane.xlu0 %632
    %v634 = vsel %vm581, %v624, 0.0
    %635 = vadd.xlane.f32.xlu0 %v634
    %v636 = vpop.xlane.xlu0 %635
    %v637 = vsel %vm581, %v625, 0.0
    %638 = vadd.xlane.f32.xlu0 %v637
    %v639 = vpop.xlane.xlu0 %638
    %v640 = vsel %vm581, %v626, 0.0
    %641 = vadd.xlane.f32.xlu0 %v640
    %v642 = vpop.xlane.xlu0 %641
    %v643 = vsel %vm581, %v627, 0.0
    %644 = vadd.xlane.f32.xlu0 %v643
    %v645 = vpop.xlane.xlu0 %644
    %v646 = vsel %vm581, %v628, 0.0
    %647 = vadd.xlane.f32.xlu0 %v646
    %v648 = vpop.xlane.xlu0 %647
    %v649 = vsel %vm581, %v629, 0.0
    %650 = vadd.xlane.f32.xlu0 %v649
    %v651 = vpop.xlane.xlu0 %650
    %v652 = vsel %vm581, %v630, 0.0
    %653 = vadd.xlane.f32.xlu0 %v652
    %v654 = vpop.xlane.xlu0 %653
    %v655 = vmul.f32 %v633, %v606
    %v656 = vmul.f32 %v636, %v606
    %v657 = vmul.f32 %v639, %v606
    %v658 = vmul.f32 %v642, %v606
    %v659 = vmul.f32 %v645, %v606
    %v660 = vmul.f32 %v648, %v606
    %v661 = vmul.f32 %v651, %v606
    %v662 = vmul.f32 %v654, %v606
    %v663 = vadd.f32 %v655, 1e-05
    %v664 = vadd.f32 %v656, 1e-05
    %v665 = vadd.f32 %v657, 1e-05
    %v666 = vadd.f32 %v658, 1e-05
    %v667 = vadd.f32 %v659, 1e-05
    %v668 = vadd.f32 %v660, 1e-05
    %v669 = vadd.f32 %v661, 1e-05
    %v670 = vadd.f32 %v662, 1e-05
    %v671 = vrsqrt.pop %v663
    %v672 = vrsqrt.pop %v664
    %v673 = vrsqrt.pop %v665
    %v674 = vrsqrt.pop %v666
    %v675 = vrsqrt.pop %v667
    %v676 = vrsqrt.pop %v668
    %v677 = vrsqrt.pop %v669
    %v678 = vrsqrt.pop %v670
    %v679 = vmul.f32 %v615, %v671
    %v680 = vmul.f32 %v616, %v672
    %v681 = vmul.f32 %v617, %v673
    %v682 = vmul.f32 %v618, %v674
    %v683 = vmul.f32 %v619, %v675
    %v684 = vmul.f32 %v620, %v676
    %v685 = vmul.f32 %v621, %v677
    %v686 = vmul.f32 %v622, %v678
    %v687 = vmax.f32 %v679, 0.0
    %v688 = vmax.f32 %v680, 0.0
    %v689 = vmax.f32 %v681, 0.0
    %v690 = vmax.f32 %v682, 0.0
    %v691 = vmax.f32 %v683, 0.0
    %v692 = vmax.f32 %v684, 0.0
    %v693 = vmax.f32 %v685, 0.0
    %v694 = vmax.f32 %v686, 0.0
    %v695 = vpack.c.bf16 %v688, %v687
    %v696 = vpack.c.bf16 %v690, %v689
    %v697 = vpack.c.bf16 %v692, %v691
    %v698 = vpack.c.bf16 %v694, %v693
    %v699 = vld [vmem:[#allocation5] sm:$0xf]
    %v701 = vsel %vm581, %v695, 0
    %v704 = vsel %vm581, %v696, 0
    %v707 = vsel %vm581, %v697, 0
    %v710 = vsel %vm581, %v698, 0
    %v713 = vsel %vm293, %v699, 0
    %715 = vmatprep.subr.bf16.mxu0 0
    %716 = vmatpush1.bf16.msra.mxu0 %v713
    %717 = vmatprep.subr.bf16.mxu0 0
    %718 = vmatpush1.bf16.msra.mxu0 0
    %719 = vmatprep.subr.bf16.mxu0 0
    %720 = vmatpush1.bf16.msra.mxu0 0
    %721 = vmatprep.subr.bf16.mxu0 0
    %722 = vmatpush1.bf16.msra.mxu0 0
    %723 = vmatprep.subr.bf16.mxu0 0
    %724 = vmatpush1.bf16.msra.mxu0 0
    %725 = vmatprep.subr.bf16.mxu0 0
    %726 = vmatpush1.bf16.msra.mxu0 0
    %727 = vmatprep.subr.bf16.mxu0 0
    %728 = vmatpush1.bf16.msra.mxu0 0
    %729 = vmatprep.subr.bf16.mxu0 0
    %730 = vmatpush1.bf16.msra.mxu0 0
    %731 = vmatprep.subr.bf16.mxu0 0
    %732 = vmatpush1.bf16.msra.mxu0 0
    %733 = vmatprep.subr.bf16.mxu0 0
    %734 = vmatpush1.bf16.msra.mxu0 0
    %735 = vmatprep.subr.bf16.mxu0 0
    %736 = vmatpush1.bf16.msra.mxu0 0
    %737 = vmatprep.subr.bf16.mxu0 0
    %738 = vmatpush1.bf16.msra.mxu0 0
    %739 = vmatprep.subr.bf16.mxu0 0
    %740 = vmatpush1.bf16.msra.mxu0 0
    %741 = vmatprep.subr.bf16.mxu0 0
    %742 = vmatpush1.bf16.msra.mxu0 0
    %743 = vmatprep.subr.bf16.mxu0 0
    %744 = vmatpush1.bf16.msra.mxu0 0
    %745 = vmatprep.subr.bf16.mxu0 0
    %746 = vmatpush1.bf16.msra.mxu0 0
    %747 = vmatprep.mubr.bf16.mxu0 0
    %748 = vmatmul.mubr.bf16.gmra.mrb[0].mxu0 %v701
    %v749 = vpop.f32.mrb[0].mxu0
    %v750 = vadd.f32 0.0, %v749
    %v751 = vpop.f32.mrb[0].mxu0
    %v752 = vpop.f32.mrb[0].mxu0
    %v753 = vadd.f32 0.0, %v752
    %v754 = vpop.f32.mrb[0].mxu0
    %755 = vmatprep.mubr.bf16.mxu0 0
    %756 = vmatmul.mubr.bf16.gmra.mrb[0].mxu0 %v704
    %v757 = vpop.f32.mrb[0].mxu0
    %v758 = vadd.f32 0.0, %v757
    %v759 = vpop.f32.mrb[0].mxu0
    %v760 = vpop.f32.mrb[0].mxu0
    %v761 = vadd.f32 0.0, %v760
    %v762 = vpop.f32.mrb[0].mxu0
    %763 = vmatprep.mubr.bf16.mxu0 0
    %764 = vmatmul.mubr.bf16.gmra.mrb[0].mxu0 %v707
    %v765 = vpop.f32.mrb[0].mxu0
    %v766 = vadd.f32 0.0, %v765
    %v767 = vpop.f32.mrb[0].mxu0
    %v768 = vpop.f32.mrb[0].mxu0
    %v769 = vadd.f32 0.0, %v768
    %v770 = vpop.f32.mrb[0].mxu0
    %771 = vmatprep.mubr.bf16.mxu0 0
    %772 = vmatmul.mubr.bf16.gmra.mrb[0].mxu0 %v710
    %v773 = vpop.f32.mrb[0].mxu0
    %v774 = vadd.f32 0.0, %v773
    %v775 = vpop.f32.mrb[0].mxu0
    %v776 = vpop.f32.mrb[0].mxu0
    %v777 = vadd.f32 0.0, %v776
    %v778 = vpop.f32.mrb[0].mxu0
    %779 = vdwg.mxu0
    %v780 = vpack.c.bf16 %v753, %v750
    %v781 = vpack.c.bf16 %v761, %v758
    %v782 = vpack.c.bf16 %v769, %v766
    %v783 = vpack.c.bf16 %v777, %v774
    %v784 = vld [vmem:[#allocation7] sm:$0xf]
    %v785 = vld [vmem:[#allocation7 + $0x4] sm:$0xf]
    %v786 = vld [vmem:[#allocation7 + $0x8] sm:$0xf]
    %v787 = vld [vmem:[#allocation7 + $0xc] sm:$0xf]
    %v788 = vld [vmem:[#allocation7 + $0x10] sm:$0xf]
    %v789 = vld [vmem:[#allocation7 + $0x14] sm:$0xf]
    %v790 = vld [vmem:[#allocation7 + $0x18] sm:$0xf]
    %v791 = vld [vmem:[#allocation7 + $0x1c] sm:$0xf]
    %v792 = vld [vmem:[#allocation7 + $0x20] sm:$0xf]
    %v793 = vld [vmem:[#allocation7 + $0x24] sm:$0xf]
    %v794 = vld [vmem:[#allocation7 + $0x28] sm:$0xf]
    %v795 = vld [vmem:[#allocation7 + $0x2c] sm:$0xf]
    %v796 = vld [vmem:[#allocation7 + $0x30] sm:$0xf]
    %v797 = vld [vmem:[#allocation7 + $0x34] sm:$0xf]
    %v798 = vld [vmem:[#allocation7 + $0x38] sm:$0xf]
    %v799 = vld [vmem:[#allocation7 + $0x3c] sm:$0xf]
    %v800 = vld [vmem:[#allocation7 + $0x40] sm:$0xf]
    %v801 = vld [vmem:[#allocation7 + $0x44] sm:$0xf]
    %v802 = vld [vmem:[#allocation7 + $0x48] sm:$0xf]
    %v803 = vld [vmem:[#allocation7 + $0x4c] sm:$0xf]
    %v804 = vld [vmem:[#allocation7 + $0x50] sm:$0xf]
    %v805 = vld [vmem:[#allocation7 + $0x54] sm:$0xf]
    %v806 = vld [vmem:[#allocation7 + $0x58] sm:$0xf]
    %v807 = vld [vmem:[#allocation7 + $0x5c] sm:$0xf]
    %v808 = vld [vmem:[#allocation7 + $0x60] sm:$0xf]
    %v809 = vld [vmem:[#allocation7 + $0x64] sm:$0xf]
    %v810 = vld [vmem:[#allocation7 + $0x68] sm:$0xf]
    %v811 = vld [vmem:[#allocation7 + $0x6c] sm:$0xf]
    %v812 = vld [vmem:[#allocation7 + $0x70] sm:$0xf]
    %v813 = vld [vmem:[#allocation7 + $0x74] sm:$0xf]
    %v814 = vld [vmem:[#allocation7 + $0x78] sm:$0xf]
    %v815 = vld [vmem:[#allocation7 + $0x7c] sm:$0xf]
    %v816 = vld [vmem:[#allocation7 + $0x80] sm:$0xf]
    %v817 = vld [vmem:[#allocation7 + $0x84] sm:$0xf]
    %v818 = vld [vmem:[#allocation7 + $0x88] sm:$0xf]
    %v819 = vld [vmem:[#allocation7 + $0x8c] sm:$0xf]
    %v820 = vld [vmem:[#allocation7 + $0x90] sm:$0xf]
    %v821 = vld [vmem:[#allocation7 + $0x94] sm:$0xf]
    %v822 = vld [vmem:[#allocation7 + $0x98] sm:$0xf]
    %v823 = vld [vmem:[#allocation7 + $0x9c] sm:$0xf]
    %v824 = vld [vmem:[#allocation7 + $0xa0] sm:$0xf]
    %v825 = vld [vmem:[#allocation7 + $0xa4] sm:$0xf]
    %v826 = vld [vmem:[#allocation7 + $0xa8] sm:$0xf]
    %v827 = vld [vmem:[#allocation7 + $0xac] sm:$0xf]
    %v828 = vld [vmem:[#allocation7 + $0xb0] sm:$0xf]
    %v829 = vld [vmem:[#allocation7 + $0xb4] sm:$0xf]
    %v830 = vld [vmem:[#allocation7 + $0xb8] sm:$0xf]
    %v831 = vld [vmem:[#allocation7 + $0xbc] sm:$0xf]
    %v832 = vld [vmem:[#allocation7 + $0xc0] sm:$0xf]
    %v833 = vld [vmem:[#allocation7 + $0xc4] sm:$0xf]
    %v834 = vld [vmem:[#allocation7 + $0xc8] sm:$0xf]
    %v835 = vld [vmem:[#allocation7 + $0xcc] sm:$0xf]
    %v836 = vld [vmem:[#allocation7 + $0xd0] sm:$0xf]
    %v837 = vld [vmem:[#allocation7 + $0xd4] sm:$0xf]
    %v838 = vld [vmem:[#allocation7 + $0xd8] sm:$0xf]
    %v839 = vld [vmem:[#allocation7 + $0xdc] sm:$0xf]
    %v840 = vld [vmem:[#allocation7 + $0xe0] sm:$0xf]
    %v841 = vld [vmem:[#allocation7 + $0xe4] sm:$0xf]
    %v842 = vld [vmem:[#allocation7 + $0xe8] sm:$0xf]
    %v843 = vld [vmem:[#allocation7 + $0xec] sm:$0xf]
    %v844 = vld [vmem:[#allocation7 + $0xf0] sm:$0xf]
    %v845 = vld [vmem:[#allocation7 + $0xf4] sm:$0xf]
    %v846 = vld [vmem:[#allocation7 + $0xf8] sm:$0xf]
    %v847 = vld [vmem:[#allocation7 + $0xfc] sm:$0xf]
    %v912 = vunpack.c.l.b16 %v784
    %v913 = vunpack.c.l.b16 %v785
    %v914 = vunpack.c.l.b16 %v786
    %v915 = vunpack.c.l.b16 %v787
    %v916 = vunpack.c.l.b16 %v788
    %v917 = vunpack.c.l.b16 %v789
    %v918 = vunpack.c.l.b16 %v790
    %v919 = vunpack.c.l.b16 %v791
    %v920 = vunpack.c.l.b16 %v792
    %v921 = vunpack.c.l.b16 %v793
    %v922 = vunpack.c.l.b16 %v794
    %v923 = vunpack.c.l.b16 %v795
    %v924 = vunpack.c.l.b16 %v796
    %v925 = vunpack.c.l.b16 %v797
    %v926 = vunpack.c.l.b16 %v798
    %v927 = vunpack.c.l.b16 %v799
    %v928 = vunpack.c.l.b16 %v800
    %v929 = vunpack.c.l.b16 %v801
    %v930 = vunpack.c.l.b16 %v802
    %v931 = vunpack.c.l.b16 %v803
    %v932 = vunpack.c.l.b16 %v804
    %v933 = vunpack.c.l.b16 %v805
    %v934 = vunpack.c.l.b16 %v806
    %v935 = vunpack.c.l.b16 %v807
    %v936 = vunpack.c.l.b16 %v808
    %v937 = vunpack.c.l.b16 %v809
    %v938 = vunpack.c.l.b16 %v810
    %v939 = vunpack.c.l.b16 %v811
    %v940 = vunpack.c.l.b16 %v812
    %v941 = vunpack.c.l.b16 %v813
    %v942 = vunpack.c.l.b16 %v814
    %v943 = vunpack.c.l.b16 %v815
    %v944 = vunpack.c.l.b16 %v816
    %v945 = vunpack.c.l.b16 %v817
    %v946 = vunpack.c.l.b16 %v818
    %v947 = vunpack.c.l.b16 %v819
    %v948 = vunpack.c.l.b16 %v820
    %v949 = vunpack.c.l.b16 %v821
    %v950 = vunpack.c.l.b16 %v822
    %v951 = vunpack.c.l.b16 %v823
    %v952 = vunpack.c.l.b16 %v824
    %v953 = vunpack.c.l.b16 %v825
    %v954 = vunpack.c.l.b16 %v826
    %v955 = vunpack.c.l.b16 %v827
    %v956 = vunpack.c.l.b16 %v828
    %v957 = vunpack.c.l.b16 %v829
    %v958 = vunpack.c.l.b16 %v830
    %v959 = vunpack.c.l.b16 %v831
    %v960 = vunpack.c.l.b16 %v832
    %v961 = vunpack.c.l.b16 %v833
    %v962 = vunpack.c.l.b16 %v834
    %v963 = vunpack.c.l.b16 %v835
    %v964 = vunpack.c.l.b16 %v836
    %v965 = vunpack.c.l.b16 %v837
    %v966 = vunpack.c.l.b16 %v838
    %v967 = vunpack.c.l.b16 %v839
    %v968 = vunpack.c.l.b16 %v840
    %v969 = vunpack.c.l.b16 %v841
    %v970 = vunpack.c.l.b16 %v842
    %v971 = vunpack.c.l.b16 %v843
    %v972 = vunpack.c.l.b16 %v844
    %v973 = vunpack.c.l.b16 %v845
    %v974 = vunpack.c.l.b16 %v846
    %v975 = vunpack.c.l.b16 %v847
    %v976 = vpack.c.b16 %v913, %v912
    %v977 = vpack.c.b16 %v915, %v914
    %v978 = vpack.c.b16 %v917, %v916
    %v979 = vpack.c.b16 %v919, %v918
    %v980 = vpack.c.b16 %v921, %v920
    %v981 = vpack.c.b16 %v923, %v922
    %v982 = vpack.c.b16 %v925, %v924
    %v983 = vpack.c.b16 %v927, %v926
    %v984 = vpack.c.b16 %v929, %v928
    %v985 = vpack.c.b16 %v931, %v930
    %v986 = vpack.c.b16 %v933, %v932
    %v987 = vpack.c.b16 %v935, %v934
    %v988 = vpack.c.b16 %v937, %v936
    %v989 = vpack.c.b16 %v939, %v938
    %v990 = vpack.c.b16 %v941, %v940
    %v991 = vpack.c.b16 %v943, %v942
    %v992 = vpack.c.b16 %v945, %v944
    %v993 = vpack.c.b16 %v947, %v946
    %v994 = vpack.c.b16 %v949, %v948
    %v995 = vpack.c.b16 %v951, %v950
    %v996 = vpack.c.b16 %v953, %v952
    %v997 = vpack.c.b16 %v955, %v954
    %v998 = vpack.c.b16 %v957, %v956
    %v999 = vpack.c.b16 %v959, %v958
    %v1000 = vpack.c.b16 %v961, %v960
    %v1001 = vpack.c.b16 %v963, %v962
    %v1002 = vpack.c.b16 %v965, %v964
    %v1003 = vpack.c.b16 %v967, %v966
    %v1004 = vpack.c.b16 %v969, %v968
    %v1005 = vpack.c.b16 %v971, %v970
    %v1006 = vpack.c.b16 %v973, %v972
    %v1007 = vpack.c.b16 %v975, %v974
    %vm1008 = vcmask 523264
    %v1010 = vsel %vm1008, %v976, 0
    %v1013 = vsel %vm1008, %v977, 0
    %v1016 = vsel %vm1008, %v978, 0
    %v1019 = vsel %vm1008, %v979, 0
    %v1022 = vsel %vm1008, %v980, 0
    %v1025 = vsel %vm1008, %v981, 0
    %v1028 = vsel %vm1008, %v982, 0
    %v1031 = vsel %vm1008, %v983, 0
    %v1034 = vsel %vm1008, %v984, 0
    %v1037 = vsel %vm1008, %v985, 0
    %v1040 = vsel %vm1008, %v986, 0
    %v1043 = vsel %vm1008, %v987, 0
    %v1046 = vsel %vm1008, %v988, 0
    %v1049 = vsel %vm1008, %v989, 0
    %v1052 = vsel %vm1008, %v990, 0
    %v1055 = vsel %vm1008, %v991, 0
    %v1058 = vsel %vm1008, %v992, 0
    %v1061 = vsel %vm1008, %v993, 0
    %v1064 = vsel %vm1008, %v994, 0
    %v1067 = vsel %vm1008, %v995, 0
    %v1070 = vsel %vm1008, %v996, 0
    %v1073 = vsel %vm1008, %v997, 0
    %v1076 = vsel %vm1008, %v998, 0
    %v1079 = vsel %vm1008, %v999, 0
    %v1082 = vsel %vm1008, %v1000, 0
    %v1085 = vsel %vm1008, %v1001, 0
    %v1088 = vsel %vm1008, %v1002, 0
    %v1091 = vsel %vm1008, %v1003, 0
    %v1094 = vsel %vm1008, %v1004, 0
    %v1097 = vsel %vm1008, %v1005, 0
    %v1100 = vsel %vm1008, %v1006, 0
    %v1103 = vsel %vm1008, %v1007, 0
    %1105 = vmatprep.subr.bf16.mxu0 0
    %1106 = vmatpush1.bf16.msra.mxu0 %v780
    %1107 = vmatprep.subr.bf16.mxu0 0
    %1108 = vmatpush1.bf16.msra.mxu0 %v781
    %1109 = vmatprep.subr.bf16.mxu0 0
    %1110 = vmatpush1.bf16.msra.mxu0 %v782
    %1111 = vmatprep.subr.bf16.mxu0 0
    %1112 = vmatpush1.bf16.msra.mxu0 %v783
    %1113 = vmatprep.subr.bf16.mxu0 0
    %1114 = vmatpush1.bf16.msra.mxu0 0
    %1115 = vmatprep.subr.bf16.mxu0 0
    %1116 = vmatpush1.bf16.msra.mxu0 0
    %1117 = vmatprep.subr.bf16.mxu0 0
    %1118 = vmatpush1.bf16.msra.mxu0 0
    %1119 = vmatprep.subr.bf16.mxu0 0
    %1120 = vmatpush1.bf16.msra.mxu0 0
    %1121 = vmatprep.subr.bf16.mxu0 0
    %1122 = vmatpush1.bf16.msra.mxu0 0
    %1123 = vmatprep.subr.bf16.mxu0 0
    %1124 = vmatpush1.bf16.msra.mxu0 0
    %1125 = vmatprep.subr.bf16.mxu0 0
    %1126 = vmatpush1.bf16.msra.mxu0 0
    %1127 = vmatprep.subr.bf16.mxu0 0
    %1128 = vmatpush1.bf16.msra.mxu0 0
    %1129 = vmatprep.subr.bf16.mxu0 0
    %1130 = vmatpush1.bf16.msra.mxu0 0
    %1131 = vmatprep.subr.bf16.mxu0 0
    %1132 = vmatpush1.bf16.msra.mxu0 0
    %1133 = vmatprep.subr.bf16.mxu0 0
    %1134 = vmatpush1.bf16.msra.mxu0 0
    %1135 = vmatprep.subr.bf16.mxu0 0
    %1136 = vmatpush1.bf16.msra.mxu0 0
    %1137 = vmatprep.mubr.bf16.mxu0 0
    %1138 = vmatmul.mubr.bf16.gmra.mrb[0].mxu0 %v1010
    %v1139 = vpop.f32.mrb[0].mxu0
    %v1140 = vadd.f32 0.0, %v1139
    %v1141 = vpop.f32.mrb[0].mxu0
    %v1142 = vpop.f32.mrb[0].mxu0
    %v1143 = vadd.f32 0.0, %v1142
    %v1144 = vpop.f32.mrb[0].mxu0
    %1145 = vmatprep.mubr.bf16.mxu0 0
    %1146 = vmatmul.mubr.bf16.gmra.mrb[0].mxu0 %v1013
    %v1147 = vpop.f32.mrb[0].mxu0
    %v1148 = vadd.f32 0.0, %v1147
    %v1149 = vpop.f32.mrb[0].mxu0
    %v1150 = vpop.f32.mrb[0].mxu0
    %v1151 = vadd.f32 0.0, %v1150
    %v1152 = vpop.f32.mrb[0].mxu0
    %1153 = vmatprep.mubr.bf16.mxu0 0
    %1154 = vmatmul.mubr.bf16.gmra.mrb[0].mxu0 %v1016
    %v1155 = vpop.f32.mrb[0].mxu0
    %v1156 = vadd.f32 0.0, %v1155
    %v1157 = vpop.f32.mrb[0].mxu0
    %v1158 = vpop.f32.mrb[0].mxu0
    %v1159 = vadd.f32 0.0, %v1158
    %v1160 = vpop.f32.mrb[0].mxu0
    %1161 = vmatprep.mubr.bf16.mxu0 0
    %1162 = vmatmul.mubr.bf16.gmra.mrb[0].mxu0 %v1019
    %v1163 = vpop.f32.mrb[0].mxu0
    %v1164 = vadd.f32 0.0, %v1163
    %v1165 = vpop.f32.mrb[0].mxu0
    %v1166 = vpop.f32.mrb[0].mxu0
    %v1167 = vadd.f32 0.0, %v1166
    %v1168 = vpop.f32.mrb[0].mxu0
    %1169 = vmatprep.mubr.bf16.mxu0 0
    %1170 = vmatmul.mubr.bf16.gmra.mrb[0].mxu0 %v1022
    %v1171 = vpop.f32.mrb[0].mxu0
    %v1172 = vadd.f32 0.0, %v1171
    %v1173 = vpop.f32.mrb[0].mxu0
    %v1174 = vpop.f32.mrb[0].mxu0
    %v1175 = vadd.f32 0.0, %v1174
    %v1176 = vpop.f32.mrb[0].mxu0
    %1177 = vmatprep.mubr.bf16.mxu0 0
    %1178 = vmatmul.mubr.bf16.gmra.mrb[0].mxu0 %v1025
    %v1179 = vpop.f32.mrb[0].mxu0
    %v1180 = vadd.f32 0.0, %v1179
    %v1181 = vpop.f32.mrb[0].mxu0
    %v1182 = vpop.f32.mrb[0].mxu0
    %v1183 = vadd.f32 0.0, %v1182
    %v1184 = vpop.f32.mrb[0].mxu0
    %1185 = vmatprep.mubr.bf16.mxu0 0
    %1186 = vmatmul.mubr.bf16.gmra.mrb[0].mxu0 %v1028
    %v1187 = vpop.f32.mrb[0].mxu0
    %v1188 = vadd.f32 0.0, %v1187
    %v1189 = vpop.f32.mrb[0].mxu0
    %v1190 = vpop.f32.mrb[0].mxu0
    %v1191 = vadd.f32 0.0, %v1190
    %v1192 = vpop.f32.mrb[0].mxu0
    %1193 = vmatprep.mubr.bf16.mxu0 0
    %1194 = vmatmul.mubr.bf16.gmra.mrb[0].mxu0 %v1031
    %v1195 = vpop.f32.mrb[0].mxu0
    %v1196 = vadd.f32 0.0, %v1195
    %v1197 = vpop.f32.mrb[0].mxu0
    %v1198 = vpop.f32.mrb[0].mxu0
    %v1199 = vadd.f32 0.0, %v1198
    %v1200 = vpop.f32.mrb[0].mxu0
    %1201 = vmatprep.mubr.bf16.mxu0 0
    %1202 = vmatmul.mubr.bf16.gmra.mrb[0].mxu0 %v1034
    %v1203 = vpop.f32.mrb[0].mxu0
    %v1204 = vadd.f32 0.0, %v1203
    %v1205 = vpop.f32.mrb[0].mxu0
    %v1206 = vpop.f32.mrb[0].mxu0
    %v1207 = vadd.f32 0.0, %v1206
    %v1208 = vpop.f32.mrb[0].mxu0
    %1209 = vmatprep.mubr.bf16.mxu0 0
    %1210 = vmatmul.mubr.bf16.gmra.mrb[0].mxu0 %v1037
    %v1211 = vpop.f32.mrb[0].mxu0
    %v1212 = vadd.f32 0.0, %v1211
    %v1213 = vpop.f32.mrb[0].mxu0
    %v1214 = vpop.f32.mrb[0].mxu0
    %v1215 = vadd.f32 0.0, %v1214
    %v1216 = vpop.f32.mrb[0].mxu0
    %1217 = vmatprep.mubr.bf16.mxu0 0
    %1218 = vmatmul.mubr.bf16.gmra.mrb[0].mxu0 %v1040
    %v1219 = vpop.f32.mrb[0].mxu0
    %v1220 = vadd.f32 0.0, %v1219
    %v1221 = vpop.f32.mrb[0].mxu0
    %v1222 = vpop.f32.mrb[0].mxu0
    %v1223 = vadd.f32 0.0, %v1222
    %v1224 = vpop.f32.mrb[0].mxu0
    %1225 = vmatprep.mubr.bf16.mxu0 0
    %1226 = vmatmul.mubr.bf16.gmra.mrb[0].mxu0 %v1043
    %v1227 = vpop.f32.mrb[0].mxu0
    %v1228 = vadd.f32 0.0, %v1227
    %v1229 = vpop.f32.mrb[0].mxu0
    %v1230 = vpop.f32.mrb[0].mxu0
    %v1231 = vadd.f32 0.0, %v1230
    %v1232 = vpop.f32.mrb[0].mxu0
    %1233 = vmatprep.mubr.bf16.mxu0 0
    %1234 = vmatmul.mubr.bf16.gmra.mrb[0].mxu0 %v1046
    %v1235 = vpop.f32.mrb[0].mxu0
    %v1236 = vadd.f32 0.0, %v1235
    %v1237 = vpop.f32.mrb[0].mxu0
    %v1238 = vpop.f32.mrb[0].mxu0
    %v1239 = vadd.f32 0.0, %v1238
    %v1240 = vpop.f32.mrb[0].mxu0
    %1241 = vmatprep.mubr.bf16.mxu0 0
    %1242 = vmatmul.mubr.bf16.gmra.mrb[0].mxu0 %v1049
    %v1243 = vpop.f32.mrb[0].mxu0
    %v1244 = vadd.f32 0.0, %v1243
    %v1245 = vpop.f32.mrb[0].mxu0
    %v1246 = vpop.f32.mrb[0].mxu0
    %v1247 = vadd.f32 0.0, %v1246
    %v1248 = vpop.f32.mrb[0].mxu0
    %1249 = vmatprep.mubr.bf16.mxu0 0
    %1250 = vmatmul.mubr.bf16.gmra.mrb[0].mxu0 %v1052
    %v1251 = vpop.f32.mrb[0].mxu0
    %v1252 = vadd.f32 0.0, %v1251
    %v1253 = vpop.f32.mrb[0].mxu0
    %v1254 = vpop.f32.mrb[0].mxu0
    %v1255 = vadd.f32 0.0, %v1254
    %v1256 = vpop.f32.mrb[0].mxu0
    %1257 = vmatprep.mubr.bf16.mxu0 0
    %1258 = vmatmul.mubr.bf16.gmra.mrb[0].mxu0 %v1055
    %v1259 = vpop.f32.mrb[0].mxu0
    %v1260 = vadd.f32 0.0, %v1259
    %v1261 = vpop.f32.mrb[0].mxu0
    %v1262 = vpop.f32.mrb[0].mxu0
    %v1263 = vadd.f32 0.0, %v1262
    %v1264 = vpop.f32.mrb[0].mxu0
    %1265 = vmatprep.mubr.bf16.mxu0 0
    %1266 = vmatmul.mubr.bf16.gmra.mrb[0].mxu0 %v1058
    %v1267 = vpop.f32.mrb[0].mxu0
    %v1268 = vadd.f32 0.0, %v1267
    %v1269 = vpop.f32.mrb[0].mxu0
    %v1270 = vpop.f32.mrb[0].mxu0
    %v1271 = vadd.f32 0.0, %v1270
    %v1272 = vpop.f32.mrb[0].mxu0
    %1273 = vmatprep.mubr.bf16.mxu0 0
    %1274 = vmatmul.mubr.bf16.gmra.mrb[0].mxu0 %v1061
    %v1275 = vpop.f32.mrb[0].mxu0
    %v1276 = vadd.f32 0.0, %v1275
    %v1277 = vpop.f32.mrb[0].mxu0
    %v1278 = vpop.f32.mrb[0].mxu0
    %v1279 = vadd.f32 0.0, %v1278
    %v1280 = vpop.f32.mrb[0].mxu0
    %1281 = vmatprep.mubr.bf16.mxu0 0
    %1282 = vmatmul.mubr.bf16.gmra.mrb[0].mxu0 %v1064
    %v1283 = vpop.f32.mrb[0].mxu0
    %v1284 = vadd.f32 0.0, %v1283
    %v1285 = vpop.f32.mrb[0].mxu0
    %v1286 = vpop.f32.mrb[0].mxu0
    %v1287 = vadd.f32 0.0, %v1286
    %v1288 = vpop.f32.mrb[0].mxu0
    %1289 = vmatprep.mubr.bf16.mxu0 0
    %1290 = vmatmul.mubr.bf16.gmra.mrb[0].mxu0 %v1067
    %v1291 = vpop.f32.mrb[0].mxu0
    %v1292 = vadd.f32 0.0, %v1291
    %v1293 = vpop.f32.mrb[0].mxu0
    %v1294 = vpop.f32.mrb[0].mxu0
    %v1295 = vadd.f32 0.0, %v1294
    %v1296 = vpop.f32.mrb[0].mxu0
    %1297 = vmatprep.mubr.bf16.mxu0 0
    %1298 = vmatmul.mubr.bf16.gmra.mrb[0].mxu0 %v1070
    %v1299 = vpop.f32.mrb[0].mxu0
    %v1300 = vadd.f32 0.0, %v1299
    %v1301 = vpop.f32.mrb[0].mxu0
    %v1302 = vpop.f32.mrb[0].mxu0
    %v1303 = vadd.f32 0.0, %v1302
    %v1304 = vpop.f32.mrb[0].mxu0
    %1305 = vmatprep.mubr.bf16.mxu0 0
    %1306 = vmatmul.mubr.bf16.gmra.mrb[0].mxu0 %v1073
    %v1307 = vpop.f32.mrb[0].mxu0
    %v1308 = vadd.f32 0.0, %v1307
    %v1309 = vpop.f32.mrb[0].mxu0
    %v1310 = vpop.f32.mrb[0].mxu0
    %v1311 = vadd.f32 0.0, %v1310
    %v1312 = vpop.f32.mrb[0].mxu0
    %1313 = vmatprep.mubr.bf16.mxu0 0
    %1314 = vmatmul.mubr.bf16.gmra.mrb[0].mxu0 %v1076
    %v1315 = vpop.f32.mrb[0].mxu0
    %v1316 = vadd.f32 0.0, %v1315
    %v1317 = vpop.f32.mrb[0].mxu0
    %v1318 = vpop.f32.mrb[0].mxu0
    %v1319 = vadd.f32 0.0, %v1318
    %v1320 = vpop.f32.mrb[0].mxu0
    %1321 = vmatprep.mubr.bf16.mxu0 0
    %1322 = vmatmul.mubr.bf16.gmra.mrb[0].mxu0 %v1079
    %v1323 = vpop.f32.mrb[0].mxu0
    %v1324 = vadd.f32 0.0, %v1323
    %v1325 = vpop.f32.mrb[0].mxu0
    %v1326 = vpop.f32.mrb[0].mxu0
    %v1327 = vadd.f32 0.0, %v1326
    %v1328 = vpop.f32.mrb[0].mxu0
    %1329 = vmatprep.mubr.bf16.mxu0 0
    %1330 = vmatmul.mubr.bf16.gmra.mrb[0].mxu0 %v1082
    %v1331 = vpop.f32.mrb[0].mxu0
    %v1332 = vadd.f32 0.0, %v1331
    %v1333 = vpop.f32.mrb[0].mxu0
    %v1334 = vpop.f32.mrb[0].mxu0
    %v1335 = vadd.f32 0.0, %v1334
    %v1336 = vpop.f32.mrb[0].mxu0
    %1337 = vmatprep.mubr.bf16.mxu0 0
    %1338 = vmatmul.mubr.bf16.gmra.mrb[0].mxu0 %v1085
    %v1339 = vpop.f32.mrb[0].mxu0
    %v1340 = vadd.f32 0.0, %v1339
    %v1341 = vpop.f32.mrb[0].mxu0
    %v1342 = vpop.f32.mrb[0].mxu0
    %v1343 = vadd.f32 0.0, %v1342
    %v1344 = vpop.f32.mrb[0].mxu0
    %1345 = vmatprep.mubr.bf16.mxu0 0
    %1346 = vmatmul.mubr.bf16.gmra.mrb[0].mxu0 %v1088
    %v1347 = vpop.f32.mrb[0].mxu0
    %v1348 = vadd.f32 0.0, %v1347
    %v1349 = vpop.f32.mrb[0].mxu0
    %v1350 = vpop.f32.mrb[0].mxu0
    %v1351 = vadd.f32 0.0, %v1350
    %v1352 = vpop.f32.mrb[0].mxu0
    %1353 = vmatprep.mubr.bf16.mxu0 0
    %1354 = vmatmul.mubr.bf16.gmra.mrb[0].mxu0 %v1091
    %v1355 = vpop.f32.mrb[0].mxu0
    %v1356 = vadd.f32 0.0, %v1355
    %v1357 = vpop.f32.mrb[0].mxu0
    %v1358 = vpop.f32.mrb[0].mxu0
    %v1359 = vadd.f32 0.0, %v1358
    %v1360 = vpop.f32.mrb[0].mxu0
    %1361 = vmatprep.mubr.bf16.mxu0 0
    %1362 = vmatmul.mubr.bf16.gmra.mrb[0].mxu0 %v1094
    %v1363 = vpop.f32.mrb[0].mxu0
    %v1364 = vadd.f32 0.0, %v1363
    %v1365 = vpop.f32.mrb[0].mxu0
    %v1366 = vpop.f32.mrb[0].mxu0
    %v1367 = vadd.f32 0.0, %v1366
    %v1368 = vpop.f32.mrb[0].mxu0
    %1369 = vmatprep.mubr.bf16.mxu0 0
    %1370 = vmatmul.mubr.bf16.gmra.mrb[0].mxu0 %v1097
    %v1371 = vpop.f32.mrb[0].mxu0
    %v1372 = vadd.f32 0.0, %v1371
    %v1373 = vpop.f32.mrb[0].mxu0
    %v1374 = vpop.f32.mrb[0].mxu0
    %v1375 = vadd.f32 0.0, %v1374
    %v1376 = vpop.f32.mrb[0].mxu0
    %1377 = vmatprep.mubr.bf16.mxu0 0
    %1378 = vmatmul.mubr.bf16.gmra.mrb[0].mxu0 %v1100
    %v1379 = vpop.f32.mrb[0].mxu0
    %v1380 = vadd.f32 0.0, %v1379
    %v1381 = vpop.f32.mrb[0].mxu0
    %v1382 = vpop.f32.mrb[0].mxu0
    %v1383 = vadd.f32 0.0, %v1382
    %v1384 = vpop.f32.mrb[0].mxu0
    %1385 = vmatprep.mubr.bf16.mxu0 0
    %1386 = vmatmul.mubr.bf16.gmra.mrb[0].mxu0 %v1103
    %v1387 = vpop.f32.mrb[0].mxu0
    %v1388 = vadd.f32 0.0, %v1387
    %v1389 = vpop.f32.mrb[0].mxu0
    %v1390 = vpop.f32.mrb[0].mxu0
    %v1391 = vadd.f32 0.0, %v1390
    %v1392 = vpop.f32.mrb[0].mxu0
    %1393 = vdwg.mxu0
    %v1394 = vsel %vm581, %v1140, 0.0
    %v1395 = vsel %vm581, %v1143, 0.0
    %v1396 = vsel %vm581, %v1148, 0.0
    %v1397 = vsel %vm581, %v1151, 0.0
    %v1398 = vld [vmem:[#allocation8] sm:$0x1]
    %v1400 = vlaneseq
    %v1401 = vshrl.u32 %v1400, 7
    %v1402 = vsub.s32 0, %v1401
    %v1403 = vrot.slane %v1398, %v1402
    %1404 = vrot.lane.b32.xlu0 %v1403, 3
    %v1405 = vpop.permute.xlu0 %1404
    %v1407 = vmul.f32 %v1394, %v1405
    %v1408 = vmul.f32 %v1395, %v1405
    %v1409 = vmul.f32 %v1396, %v1405
    %v1410 = vmul.f32 %v1397, %v1405
    %v1411 = vsel %vm581, %v1156, 0.0
    %v1412 = vsel %vm581, %v1159, 0.0
    %v1413 = vsel %vm581, %v1164, 0.0
    %v1414 = vsel %vm581, %v1167, 0.0
    %s1415 = scalar_lea.vmem [#allocation8], 1
    %v1416 = vld [vmem:[%s1415] sm:$0x1]
    %v1418 = vlaneseq
    %v1419 = vshrl.u32 %v1418, 7
    %v1420 = vsub.s32 0, %v1419
    %v1421 = vrot.slane %v1416, %v1420
    %1422 = vrot.lane.b32.xlu0 %v1421, 2
    %v1423 = vpop.permute.xlu0 %1422
    %v1425 = vmul.f32 %v1411, %v1423
    %v1426 = vmul.f32 %v1412, %v1423
    %v1427 = vmul.f32 %v1413, %v1423
    %v1428 = vmul.f32 %v1414, %v1423
    %v1429 = vsel %vm581, %v1172, 0.0
    %v1430 = vsel %vm581, %v1175, 0.0
    %v1431 = vsel %vm581, %v1180, 0.0
    %v1432 = vsel %vm581, %v1183, 0.0
    %s1433 = scalar_lea.vmem [#allocation8], 2
    %v1434 = vld [vmem:[%s1433] sm:$0x1]
    %v1436 = vlaneseq
    %v1437 = vshrl.u32 %v1436, 7
    %v1438 = vsub.s32 0, %v1437
    %v1439 = vrot.slane %v1434, %v1438
    %1440 = vrot.lane.b32.xlu0 %v1439, 2
    %v1441 = vpop.permute.xlu0 %1440
    %v1443 = vmul.f32 %v1429, %v1441
    %v1444 = vmul.f32 %v1430, %v1441
    %v1445 = vmul.f32 %v1431, %v1441
    %v1446 = vmul.f32 %v1432, %v1441
    %v1447 = vsel %vm581, %v1188, 0.0
    %v1448 = vsel %vm581, %v1191, 0.0
    %v1449 = vsel %vm581, %v1196, 0.0
    %v1450 = vsel %vm581, %v1199, 0.0
    %s1451 = scalar_lea.vmem [#allocation8], 3
    %v1452 = vld [vmem:[%s1451] sm:$0x1]
    %v1454 = vlaneseq
    %v1455 = vshrl.u32 %v1454, 7
    %v1456 = vsub.s32 0, %v1455
    %v1457 = vrot.slane %v1452, %v1456
    %1458 = vrot.lane.b32.xlu0 %v1457, 1
    %v1459 = vpop.permute.xlu0 %1458
    %v1461 = vmul.f32 %v1447, %v1459
    %v1462 = vmul.f32 %v1448, %v1459
    %v1463 = vmul.f32 %v1449, %v1459
    %v1464 = vmul.f32 %v1450, %v1459
    %v1465 = vsel %vm581, %v1204, 0.0
    %v1466 = vsel %vm581, %v1207, 0.0
    %v1467 = vsel %vm581, %v1212, 0.0
    %v1468 = vsel %vm581, %v1215, 0.0
    %s1469 = scalar_lea.vmem [#allocation8], 4
    %v1470 = vld [vmem:[%s1469] sm:$0x1]
    %v1472 = vlaneseq
    %v1473 = vshrl.u32 %v1472, 7
    %v1474 = vsub.s32 0, %v1473
    %v1475 = vrot.slane %v1470, %v1474
    %1476 = vrot.lane.b32.xlu0 %v1475, 1
    %v1477 = vpop.permute.xlu0 %1476
    %v1479 = vmul.f32 %v1465, %v1477
    %v1480 = vmul.f32 %v1466, %v1477
    %v1481 = vmul.f32 %v1467, %v1477
    %v1482 = vmul.f32 %v1468, %v1477
    %1487 = vrot.lane.b32.xlu0 %v1252, 1
    %v1488 = vpop.permute.xlu0 %1487
    %1489 = vrot.lane.b32.xlu0 %v1255, 1
    %v1490 = vpop.permute.xlu0 %1489
    %1491 = vrot.lane.b32.xlu0 %v1260, 1
    %v1492 = vpop.permute.xlu0 %1491
    %1493 = vrot.lane.b32.xlu0 %v1263, 1
    %v1494 = vpop.permute.xlu0 %1493
    %vm1499 = vcmask 7168
    %v1500 = vsel %vm1499, 0.0, %v1488
    %v1501 = vsel %vm1499, 0.0, %v1490
    %v1502 = vsel %vm1499, 0.0, %v1492
    %v1503 = vsel %vm1499, 0.0, %v1494
    %s1504 = scalar_lea.vmem [#allocation8], 7
    %v1505 = vld [vmem:[%s1504] sm:$0x1]
    %v1507 = vlaneseq
    %v1508 = vshrl.u32 %v1507, 7
    %v1509 = vsub.s32 0, %v1508
    %v1510 = vrot.slane %v1505, %v1509
    %v1512 = vmul.f32 %v1500, %v1510
    %v1513 = vmul.f32 %v1501, %v1510
    %v1514 = vmul.f32 %v1502, %v1510
    %v1515 = vmul.f32 %v1503, %v1510
    %v1516 = vsel %vm581, %v1268, 0.0
    %v1517 = vsel %vm581, %v1271, 0.0
    %v1518 = vsel %vm581, %v1276, 0.0
    %v1519 = vsel %vm581, %v1279, 0.0
    %s1520 = scalar_lea.vmem [#allocation8], 8
    %v1521 = vld [vmem:[%s1520] sm:$0x1]
    %v1523 = vlaneseq
    %v1524 = vshrl.u32 %v1523, 7
    %v1525 = vsub.s32 0, %v1524
    %v1526 = vrot.slane %v1521, %v1525
    %1527 = vrot.lane.b32.xlu0 %v1526, 1
    %v1528 = vpop.permute.xlu0 %1527
    %v1530 = vmul.f32 %v1516, %v1528
    %v1531 = vmul.f32 %v1517, %v1528
    %v1532 = vmul.f32 %v1518, %v1528
    %v1533 = vmul.f32 %v1519, %v1528
    %1538 = vrot.lane.b32.xlu0 %v1316, 1
    %v1539 = vpop.permute.xlu0 %1538
    %1540 = vrot.lane.b32.xlu0 %v1319, 1
    %v1541 = vpop.permute.xlu0 %1540
    %1542 = vrot.lane.b32.xlu0 %v1324, 1
    %v1543 = vpop.permute.xlu0 %1542
    %1544 = vrot.lane.b32.xlu0 %v1327, 1
    %v1545 = vpop.permute.xlu0 %1544
    %v1550 = vsel %vm1499, 0.0, %v1539
    %v1551 = vsel %vm1499, 0.0, %v1541
    %v1552 = vsel %vm1499, 0.0, %v1543
    %v1553 = vsel %vm1499, 0.0, %v1545
    %s1554 = scalar_lea.vmem [#allocation8], 11
    %v1555 = vld [vmem:[%s1554] sm:$0x1]
    %v1557 = vlaneseq
    %v1558 = vshrl.u32 %v1557, 7
    %v1559 = vsub.s32 0, %v1558
    %v1560 = vrot.slane %v1555, %v1559
    %v1562 = vmul.f32 %v1550, %v1560
    %v1563 = vmul.f32 %v1551, %v1560
    %v1564 = vmul.f32 %v1552, %v1560
    %v1565 = vmul.f32 %v1553, %v1560
    %1570 = vrot.lane.b32.xlu0 %v1332, 1
    %v1571 = vpop.permute.xlu0 %1570
    %1572 = vrot.lane.b32.xlu0 %v1335, 1
    %v1573 = vpop.permute.xlu0 %1572
    %1574 = vrot.lane.b32.xlu0 %v1340, 1
    %v1575 = vpop.permute.xlu0 %1574
    %1576 = vrot.lane.b32.xlu0 %v1343, 1
    %v1577 = vpop.permute.xlu0 %1576
    %v1582 = vsel %vm1499, 0.0, %v1571
    %v1583 = vsel %vm1499, 0.0, %v1573
    %v1584 = vsel %vm1499, 0.0, %v1575
    %v1585 = vsel %vm1499, 0.0, %v1577
    %s1586 = scalar_lea.vmem [#allocation8], 12
    %v1587 = vld [vmem:[%s1586] sm:$0x1]
    %v1589 = vlaneseq
    %v1590 = vshrl.u32 %v1589, 7
    %v1591 = vsub.s32 0, %v1590
    %v1592 = vrot.slane %v1587, %v1591
    %v1594 = vmul.f32 %v1582, %v1592
    %v1595 = vmul.f32 %v1583, %v1592
    %v1596 = vmul.f32 %v1584, %v1592
    %v1597 = vmul.f32 %v1585, %v1592
    %1602 = vrot.lane.b32.xlu0 %v1348, 2
    %v1603 = vpop.permute.xlu0 %1602
    %1604 = vrot.lane.b32.xlu0 %v1351, 2
    %v1605 = vpop.permute.xlu0 %1604
    %1606 = vrot.lane.b32.xlu0 %v1356, 2
    %v1607 = vpop.permute.xlu0 %1606
    %1608 = vrot.lane.b32.xlu0 %v1359, 2
    %v1609 = vpop.permute.xlu0 %1608
    %v1614 = vsel %vm554, 0.0, %v1603
    %v1615 = vsel %vm554, 0.0, %v1605
    %v1616 = vsel %vm554, 0.0, %v1607
    %v1617 = vsel %vm554, 0.0, %v1609
    %s1618 = scalar_lea.vmem [#allocation8], 13
    %v1619 = vld [vmem:[%s1618] sm:$0x1]
    %v1621 = vlaneseq
    %v1622 = vshrl.u32 %v1621, 7
    %v1623 = vsub.s32 0, %v1622
    %v1624 = vrot.slane %v1619, %v1623
    %v1626 = vmul.f32 %v1614, %v1624
    %v1627 = vmul.f32 %v1615, %v1624
    %v1628 = vmul.f32 %v1616, %v1624
    %v1629 = vmul.f32 %v1617, %v1624
    %1634 = vrot.lane.b32.xlu0 %v1364, 2
    %v1635 = vpop.permute.xlu0 %1634
    %1636 = vrot.lane.b32.xlu0 %v1367, 2
    %v1637 = vpop.permute.xlu0 %1636
    %1638 = vrot.lane.b32.xlu0 %v1372, 2
    %v1639 = vpop.permute.xlu0 %1638
    %1640 = vrot.lane.b32.xlu0 %v1375, 2
    %v1641 = vpop.permute.xlu0 %1640
    %v1646 = vsel %vm554, 0.0, %v1635
    %v1647 = vsel %vm554, 0.0, %v1637
    %v1648 = vsel %vm554, 0.0, %v1639
    %v1649 = vsel %vm554, 0.0, %v1641
    %s1650 = scalar_lea.vmem [#allocation8], 14
    %v1651 = vld [vmem:[%s1650] sm:$0x1]
    %v1653 = vlaneseq
    %v1654 = vshrl.u32 %v1653, 7
    %v1655 = vsub.s32 0, %v1654
    %v1656 = vrot.slane %v1651, %v1655
    %v1658 = vmul.f32 %v1646, %v1656
    %v1659 = vmul.f32 %v1647, %v1656
    %v1660 = vmul.f32 %v1648, %v1656
    %v1661 = vmul.f32 %v1649, %v1656
    %1666 = vrot.lane.b32.xlu0 %v1380, 3
    %v1667 = vpop.permute.xlu0 %1666
    %1668 = vrot.lane.b32.xlu0 %v1383, 3
    %v1669 = vpop.permute.xlu0 %1668
    %1670 = vrot.lane.b32.xlu0 %v1388, 3
    %v1671 = vpop.permute.xlu0 %1670
    %1672 = vrot.lane.b32.xlu0 %v1391, 3
    %v1673 = vpop.permute.xlu0 %1672
    %vm1678 = vcmask 23552
    %v1679 = vsel %vm1678, 0.0, %v1667
    %v1680 = vsel %vm1678, 0.0, %v1669
    %v1681 = vsel %vm1678, 0.0, %v1671
    %v1682 = vsel %vm1678, 0.0, %v1673
    %s1683 = scalar_lea.vmem [#allocation8], 15
    %v1684 = vld [vmem:[%s1683] sm:$0x1]
    %v1686 = vlaneseq
    %v1687 = vshrl.u32 %v1686, 7
    %v1688 = vsub.s32 0, %v1687
    %v1689 = vrot.slane %v1684, %v1688
    %v1691 = vmul.f32 %v1679, %v1689
    %v1692 = vmul.f32 %v1680, %v1689
    %v1693 = vmul.f32 %v1681, %v1689
    %v1694 = vmul.f32 %v1682, %v1689
    %v1695 = vadd.f32 %v1220, %v1512
    %v1696 = vadd.f32 %v1223, %v1513
    %v1697 = vadd.f32 %v1228, %v1514
    %v1698 = vadd.f32 %v1231, %v1515
    %v1699 = vadd.f32 %v1626, %v1691
    %v1700 = vadd.f32 %v1627, %v1692
    %v1701 = vadd.f32 %v1628, %v1693
    %v1702 = vadd.f32 %v1629, %v1694
    %v1703 = vadd.f32 %v1695, %v1699
    %v1704 = vadd.f32 %v1696, %v1700
    %v1705 = vadd.f32 %v1697, %v1701
    %v1706 = vadd.f32 %v1698, %v1702
    %1711 = vrot.lane.b32.xlu0 %v1236, 1
    %v1712 = vpop.permute.xlu0 %1711
    %1713 = vrot.lane.b32.xlu0 %v1239, 1
    %v1714 = vpop.permute.xlu0 %1713
    %1715 = vrot.lane.b32.xlu0 %v1244, 1
    %v1716 = vpop.permute.xlu0 %1715
    %1717 = vrot.lane.b32.xlu0 %v1247, 1
    %v1718 = vpop.permute.xlu0 %1717
    %v1723 = vadd.f32 %v1479, %v1712
    %v1724 = vadd.f32 %v1480, %v1714
    %v1725 = vadd.f32 %v1481, %v1716
    %v1726 = vadd.f32 %v1482, %v1718
    %v1727 = vadd.f32 %v1594, %v1658
    %v1728 = vadd.f32 %v1595, %v1659
    %v1729 = vadd.f32 %v1596, %v1660
    %v1730 = vadd.f32 %v1597, %v1661
    %1735 = vrot.lane.b32.xlu0 %v1727, 1
    %v1736 = vpop.permute.xlu0 %1735
    %1737 = vrot.lane.b32.xlu0 %v1728, 1
    %v1738 = vpop.permute.xlu0 %1737
    %1739 = vrot.lane.b32.xlu0 %v1729, 1
    %v1740 = vpop.permute.xlu0 %1739
    %1741 = vrot.lane.b32.xlu0 %v1730, 1
    %v1742 = vpop.permute.xlu0 %1741
    %v1747 = vadd.f32 %v1723, %v1736
    %v1748 = vadd.f32 %v1724, %v1738
    %v1749 = vadd.f32 %v1725, %v1740
    %v1750 = vadd.f32 %v1726, %v1742
    %1755 = vrot.lane.b32.xlu0 %v1461, 1
    %v1756 = vpop.permute.xlu0 %1755
    %1757 = vrot.lane.b32.xlu0 %v1462, 1
    %v1758 = vpop.permute.xlu0 %1757
    %1759 = vrot.lane.b32.xlu0 %v1463, 1
    %v1760 = vpop.permute.xlu0 %1759
    %1761 = vrot.lane.b32.xlu0 %v1464, 1
    %v1762 = vpop.permute.xlu0 %1761
    %v1767 = vadd.f32 %v1425, %v1756
    %v1768 = vadd.f32 %v1426, %v1758
    %v1769 = vadd.f32 %v1427, %v1760
    %v1770 = vadd.f32 %v1428, %v1762
    %v1771 = vadd.f32 %v1284, %v1562
    %v1772 = vadd.f32 %v1287, %v1563
    %v1773 = vadd.f32 %v1292, %v1564
    %v1774 = vadd.f32 %v1295, %v1565
    %1779 = vrot.lane.b32.xlu0 %v1771, 2
    %v1780 = vpop.permute.xlu0 %1779
    %1781 = vrot.lane.b32.xlu0 %v1772, 2
    %v1782 = vpop.permute.xlu0 %1781
    %1783 = vrot.lane.b32.xlu0 %v1773, 2
    %v1784 = vpop.permute.xlu0 %1783
    %1785 = vrot.lane.b32.xlu0 %v1774, 2
    %v1786 = vpop.permute.xlu0 %1785
    %v1791 = vadd.f32 %v1767, %v1780
    %v1792 = vadd.f32 %v1768, %v1782
    %v1793 = vadd.f32 %v1769, %v1784
    %v1794 = vadd.f32 %v1770, %v1786
    %1799 = vrot.lane.b32.xlu0 %v1443, 1
    %v1800 = vpop.permute.xlu0 %1799
    %1801 = vrot.lane.b32.xlu0 %v1444, 1
    %v1802 = vpop.permute.xlu0 %1801
    %1803 = vrot.lane.b32.xlu0 %v1445, 1
    %v1804 = vpop.permute.xlu0 %1803
    %1805 = vrot.lane.b32.xlu0 %v1446, 1
    %v1806 = vpop.permute.xlu0 %1805
    %v1811 = vadd.f32 %v1407, %v1800
    %v1812 = vadd.f32 %v1408, %v1802
    %v1813 = vadd.f32 %v1409, %v1804
    %v1814 = vadd.f32 %v1410, %v1806
    %1819 = vrot.lane.b32.xlu0 %v1300, 1
    %v1820 = vpop.permute.xlu0 %1819
    %1821 = vrot.lane.b32.xlu0 %v1303, 1
    %v1822 = vpop.permute.xlu0 %1821
    %1823 = vrot.lane.b32.xlu0 %v1308, 1
    %v1824 = vpop.permute.xlu0 %1823
    %1825 = vrot.lane.b32.xlu0 %v1311, 1
    %v1826 = vpop.permute.xlu0 %1825
    %v1831 = vadd.f32 %v1530, %v1820
    %v1832 = vadd.f32 %v1531, %v1822
    %v1833 = vadd.f32 %v1532, %v1824
    %v1834 = vadd.f32 %v1533, %v1826
    %1839 = vrot.lane.b32.xlu0 %v1831, 2
    %v1840 = vpop.permute.xlu0 %1839
    %1841 = vrot.lane.b32.xlu0 %v1832, 2
    %v1842 = vpop.permute.xlu0 %1841
    %1843 = vrot.lane.b32.xlu0 %v1833, 2
    %v1844 = vpop.permute.xlu0 %1843
    %1845 = vrot.lane.b32.xlu0 %v1834, 2
    %v1846 = vpop.permute.xlu0 %1845
    %v1851 = vadd.f32 %v1811, %v1840
    %v1852 = vadd.f32 %v1812, %v1842
    %v1853 = vadd.f32 %v1813, %v1844
    %v1854 = vadd.f32 %v1814, %v1846
    %1859 = vrot.lane.b32.xlu0 %v1747, 7
    %v1860 = vpop.permute.xlu0 %1859
    %1861 = vrot.lane.b32.xlu0 %v1748, 7
    %v1862 = vpop.permute.xlu0 %1861
    %1863 = vrot.lane.b32.xlu0 %v1749, 7
    %v1864 = vpop.permute.xlu0 %1863
    %1865 = vrot.lane.b32.xlu0 %v1750, 7
    %v1866 = vpop.permute.xlu0 %1865
    %1875 = vrot.lane.b32.xlu0 %v1791, 14
    %v1876 = vpop.permute.xlu0 %1875
    %1877 = vrot.lane.b32.xlu0 %v1792, 14
    %v1878 = vpop.permute.xlu0 %1877
    %1879 = vrot.lane.b32.xlu0 %v1793, 14
    %v1880 = vpop.permute.xlu0 %1879
    %1881 = vrot.lane.b32.xlu0 %v1794, 14
    %v1882 = vpop.permute.xlu0 %1881
    %1891 = vrot.lane.b32.xlu0 %v1851, 21
    %v1892 = vpop.permute.xlu0 %1891
    %1893 = vrot.lane.b32.xlu0 %v1852, 21
    %v1894 = vpop.permute.xlu0 %1893
    %1895 = vrot.lane.b32.xlu0 %v1853, 21
    %v1896 = vpop.permute.xlu0 %1895
    %1897 = vrot.lane.b32.xlu0 %v1854, 21
    %v1898 = vpop.permute.xlu0 %1897
    %v1903 = vsel %vm581, %v1703, %v1860
    %v1904 = vsel %vm581, %v1704, %v1862
    %v1905 = vsel %vm581, %v1705, %v1864
    %v1906 = vsel %vm581, %v1706, %v1866
    %vm1907 = vcmask 130048
    %v1908 = vsel %vm1907, %v1903, %v1876
    %v1909 = vsel %vm1907, %v1904, %v1878
    %v1910 = vsel %vm1907, %v1905, %v1880
    %v1911 = vsel %vm1907, %v1906, %v1882
    %v1912 = vsel %vm244, %v1908, %v1892
    %v1913 = vsel %vm244, %v1909, %v1894
    %v1914 = vsel %vm244, %v1910, %v1896
    %v1915 = vsel %vm244, %v1911, %v1898
    %vm1916 = vcmask 261120
    %v1917 = vsel %vm1916, %v1912, 0.0
    %1918 = vadd.xlane.f32.xlu0 %v1917
    %v1919 = vpop.xlane.xlu0 %1918
    %v1920 = vsel %vm1916, %v1913, 0.0
    %1921 = vadd.xlane.f32.xlu0 %v1920
    %v1922 = vpop.xlane.xlu0 %1921
    %v1923 = vsel %vm1916, %v1914, 0.0
    %1924 = vadd.xlane.f32.xlu0 %v1923
    %v1925 = vpop.xlane.xlu0 %1924
    %v1926 = vsel %vm1916, %v1915, 0.0
    %1927 = vadd.xlane.f32.xlu0 %v1926
    %v1928 = vpop.xlane.xlu0 %1927
    %v1929 = vrcp.pop 32.0
    %v1930 = vmul.f32 %v1919, %v1929
    %v1931 = vmul.f32 %v1922, %v1929
    %v1932 = vmul.f32 %v1925, %v1929
    %v1933 = vmul.f32 %v1928, %v1929
    %v1934 = vsub.f32 %v1912, %v1930
    %v1935 = vsub.f32 %v1913, %v1931
    %v1936 = vsub.f32 %v1914, %v1932
    %v1937 = vsub.f32 %v1915, %v1933
    %v1938 = vmul.f32 %v1934, %v1934
    %v1939 = vmul.f32 %v1935, %v1935
    %v1940 = vmul.f32 %v1936, %v1936
    %v1941 = vmul.f32 %v1937, %v1937
    %v1942 = vsel %vm1916, %v1938, 0.0
    %1943 = vadd.xlane.f32.xlu0 %v1942
    %v1944 = vpop.xlane.xlu0 %1943
    %v1945 = vsel %vm1916, %v1939, 0.0
    %1946 = vadd.xlane.f32.xlu0 %v1945
    %v1947 = vpop.xlane.xlu0 %1946
    %v1948 = vsel %vm1916, %v1940, 0.0
    %1949 = vadd.xlane.f32.xlu0 %v1948
    %v1950 = vpop.xlane.xlu0 %1949
    %v1951 = vsel %vm1916, %v1941, 0.0
    %1952 = vadd.xlane.f32.xlu0 %v1951
    %v1953 = vpop.xlane.xlu0 %1952
    %v1954 = vmul.f32 %v1944, %v1929
    %v1955 = vmul.f32 %v1947, %v1929
    %v1956 = vmul.f32 %v1950, %v1929
    %v1957 = vmul.f32 %v1953, %v1929
    %v1958 = vadd.f32 %v1954, 1e-05
    %v1959 = vadd.f32 %v1955, 1e-05
    %v1960 = vadd.f32 %v1956, 1e-05
    %v1961 = vadd.f32 %v1957, 1e-05
    %v1962 = vrsqrt.pop %v1958
    %v1963 = vrsqrt.pop %v1959
    %v1964 = vrsqrt.pop %v1960
    %v1965 = vrsqrt.pop %v1961
    %v1966 = vmul.f32 %v1934, %v1962
    %v1967 = vmul.f32 %v1935, %v1963
    %v1968 = vmul.f32 %v1936, %v1964
    %v1969 = vmul.f32 %v1937, %v1965
    %v1970 = vmax.f32 %v1966, 0.0
    %v1971 = vmax.f32 %v1967, 0.0
    %v1972 = vmax.f32 %v1968, 0.0
    %v1973 = vmax.f32 %v1969, 0.0
    %v1974 = vpack.c.bf16 %v1971, %v1970
    %v1975 = vpack.c.bf16 %v1973, %v1972
    %v1976 = vld [vmem:[%s6] sm:$0xf]
    %v1977 = vld [vmem:[%s6 + $0x4] sm:$0xf]
    %v1978 = vld [vmem:[%s6 + $0x8] sm:$0xf]
    %v1979 = vld [vmem:[%s6 + $0xc] sm:$0xf]
    %v1984 = vunpack.c.l.b16 %v1976
    %v1985 = vunpack.c.l.b16 %v1977
    %v1986 = vunpack.c.l.b16 %v1978
    %v1987 = vunpack.c.l.b16 %v1979
    %v1988 = vpack.c.b16 %v1985, %v1984
    %v1989 = vpack.c.b16 %v1987, %v1986
    %v1993 = vsel %vm1916, %v1974, 0
    %v1996 = vsel %vm1916, %v1975, 0
    %1998 = vmatprep.subr.bf16.mxu0 0
    %1999 = vmatpush1.bf16.msra.mxu0 %v1988
    %2000 = vmatprep.subr.bf16.mxu0 0
    %2001 = vmatpush1.bf16.msra.mxu0 %v1989
    %2002 = vmatprep.subr.bf16.mxu0 0
    %2003 = vmatpush1.bf16.msra.mxu0 0
    %2004 = vmatprep.subr.bf16.mxu0 0
    %2005 = vmatpush1.bf16.msra.mxu0 0
    %2006 = vmatprep.subr.bf16.mxu0 0
    %2007 = vmatpush1.bf16.msra.mxu0 0
    %2008 = vmatprep.subr.bf16.mxu0 0
    %2009 = vmatpush1.bf16.msra.mxu0 0
    %2010 = vmatprep.subr.bf16.mxu0 0
    %2011 = vmatpush1.bf16.msra.mxu0 0
    %2012 = vmatprep.subr.bf16.mxu0 0
    %2013 = vmatpush1.bf16.msra.mxu0 0
    %2014 = vmatprep.subr.bf16.mxu0 0
    %2015 = vmatpush1.bf16.msra.mxu0 0
    %2016 = vmatprep.subr.bf16.mxu0 0
    %2017 = vmatpush1.bf16.msra.mxu0 0
    %2018 = vmatprep.subr.bf16.mxu0 0
    %2019 = vmatpush1.bf16.msra.mxu0 0
    %2020 = vmatprep.subr.bf16.mxu0 0
    %2021 = vmatpush1.bf16.msra.mxu0 0
    %2022 = vmatprep.subr.bf16.mxu0 0
    %2023 = vmatpush1.bf16.msra.mxu0 0
    %2024 = vmatprep.subr.bf16.mxu0 0
    %2025 = vmatpush1.bf16.msra.mxu0 0
    %2026 = vmatprep.subr.bf16.mxu0 0
    %2027 = vmatpush1.bf16.msra.mxu0 0
    %2028 = vmatprep.subr.bf16.mxu0 0
    %2029 = vmatpush1.bf16.msra.mxu0 0
    %2030 = vmatprep.mubr.bf16.mxu0 0
    %2031 = vmatmul.mubr.bf16.gmra.mrb[0].mxu0 %v1993
    %v2032 = vpop.f32.mrb[0].mxu0
    %v2033 = vadd.f32 0.0, %v2032
    %v2034 = vpop.f32.mrb[0].mxu0
    %v2035 = vpop.f32.mrb[0].mxu0
    %v2036 = vadd.f32 0.0, %v2035
    %v2037 = vpop.f32.mrb[0].mxu0
    %2038 = vmatprep.mubr.bf16.mxu0 0
    %2039 = vmatmul.mubr.bf16.gmra.mrb[0].mxu0 %v1996
    %v2040 = vpop.f32.mrb[0].mxu0
    %v2041 = vadd.f32 0.0, %v2040
    %v2042 = vpop.f32.mrb[0].mxu0
    %v2043 = vpop.f32.mrb[0].mxu0
    %v2044 = vadd.f32 0.0, %v2043
    %v2045 = vpop.f32.mrb[0].mxu0
    %2046 = vdwg.mxu0
    %v2047 = vpack.c.bf16 %v2036, %v2033
    %v2048 = vpack.c.bf16 %v2044, %v2041
    %v2049 = vld [vmem:[#allocation10] sm:$0xf]
    %v2050 = vld [vmem:[#allocation10 + $0x4] sm:$0xf]
    %v2051 = vld [vmem:[#allocation10 + $0x8] sm:$0xf]
    %v2052 = vld [vmem:[#allocation10 + $0xc] sm:$0xf]
    %v2053 = vld [vmem:[#allocation10 + $0x10] sm:$0xf]
    %v2054 = vld [vmem:[#allocation10 + $0x14] sm:$0xf]
    %v2055 = vld [vmem:[#allocation10 + $0x18] sm:$0xf]
    %v2056 = vld [vmem:[#allocation10 + $0x1c] sm:$0xf]
    %v2057 = vld [vmem:[#allocation10 + $0x20] sm:$0xf]
    %v2058 = vld [vmem:[#allocation10 + $0x24] sm:$0xf]
    %v2059 = vld [vmem:[#allocation10 + $0x28] sm:$0xf]
    %v2060 = vld [vmem:[#allocation10 + $0x2c] sm:$0xf]
    %v2061 = vld [vmem:[#allocation10 + $0x30] sm:$0xf]
    %v2062 = vld [vmem:[#allocation10 + $0x34] sm:$0xf]
    %v2063 = vld [vmem:[#allocation10 + $0x38] sm:$0xf]
    %v2064 = vld [vmem:[#allocation10 + $0x3c] sm:$0xf]
    %v2065 = vld [vmem:[#allocation10 + $0x40] sm:$0xf]
    %v2066 = vld [vmem:[#allocation10 + $0x44] sm:$0xf]
    %v2067 = vld [vmem:[#allocation10 + $0x48] sm:$0xf]
    %v2068 = vld [vmem:[#allocation10 + $0x4c] sm:$0xf]
    %v2069 = vld [vmem:[#allocation10 + $0x50] sm:$0xf]
    %v2070 = vld [vmem:[#allocation10 + $0x54] sm:$0xf]
    %v2071 = vld [vmem:[#allocation10 + $0x58] sm:$0xf]
    %v2072 = vld [vmem:[#allocation10 + $0x5c] sm:$0xf]
    %v2073 = vld [vmem:[#allocation10 + $0x60] sm:$0xf]
    %v2074 = vld [vmem:[#allocation10 + $0x64] sm:$0xf]
    %v2075 = vld [vmem:[#allocation10 + $0x68] sm:$0xf]
    %v2076 = vld [vmem:[#allocation10 + $0x6c] sm:$0xf]
    %v2077 = vld [vmem:[#allocation10 + $0x70] sm:$0xf]
    %v2078 = vld [vmem:[#allocation10 + $0x74] sm:$0xf]
    %v2079 = vld [vmem:[#allocation10 + $0x78] sm:$0xf]
    %v2080 = vld [vmem:[#allocation10 + $0x7c] sm:$0xf]
    %v2113 = vunpack.c.l.b16 %v2049
    %v2114 = vunpack.c.l.b16 %v2050
    %v2115 = vunpack.c.l.b16 %v2051
    %v2116 = vunpack.c.l.b16 %v2052
    %v2117 = vunpack.c.l.b16 %v2053
    %v2118 = vunpack.c.l.b16 %v2054
    %v2119 = vunpack.c.l.b16 %v2055
    %v2120 = vunpack.c.l.b16 %v2056
    %v2121 = vunpack.c.l.b16 %v2057
    %v2122 = vunpack.c.l.b16 %v2058
    %v2123 = vunpack.c.l.b16 %v2059
    %v2124 = vunpack.c.l.b16 %v2060
    %v2125 = vunpack.c.l.b16 %v2061
    %v2126 = vunpack.c.l.b16 %v2062
    %v2127 = vunpack.c.l.b16 %v2063
    %v2128 = vunpack.c.l.b16 %v2064
    %v2129 = vunpack.c.l.b16 %v2065
    %v2130 = vunpack.c.l.b16 %v2066
    %v2131 = vunpack.c.l.b16 %v2067
    %v2132 = vunpack.c.l.b16 %v2068
    %v2133 = vunpack.c.l.b16 %v2069
    %v2134 = vunpack.c.l.b16 %v2070
    %v2135 = vunpack.c.l.b16 %v2071
    %v2136 = vunpack.c.l.b16 %v2072
    %v2137 = vunpack.c.l.b16 %v2073
    %v2138 = vunpack.c.l.b16 %v2074
    %v2139 = vunpack.c.l.b16 %v2075
    %v2140 = vunpack.c.l.b16 %v2076
    %v2141 = vunpack.c.l.b16 %v2077
    %v2142 = vunpack.c.l.b16 %v2078
    %v2143 = vunpack.c.l.b16 %v2079
    %v2144 = vunpack.c.l.b16 %v2080
    %v2145 = vpack.c.b16 %v2114, %v2113
    %v2146 = vpack.c.b16 %v2116, %v2115
    %v2147 = vpack.c.b16 %v2118, %v2117
    %v2148 = vpack.c.b16 %v2120, %v2119
    %v2149 = vpack.c.b16 %v2122, %v2121
    %v2150 = vpack.c.b16 %v2124, %v2123
    %v2151 = vpack.c.b16 %v2126, %v2125
    %v2152 = vpack.c.b16 %v2128, %v2127
    %v2153 = vpack.c.b16 %v2130, %v2129
    %v2154 = vpack.c.b16 %v2132, %v2131
    %v2155 = vpack.c.b16 %v2134, %v2133
    %v2156 = vpack.c.b16 %v2136, %v2135
    %v2157 = vpack.c.b16 %v2138, %v2137
    %v2158 = vpack.c.b16 %v2140, %v2139
    %v2159 = vpack.c.b16 %v2142, %v2141
    %v2160 = vpack.c.b16 %v2144, %v2143
    %v2162 = vsel %vm1916, %v2145, 0
    %v2165 = vsel %vm1916, %v2146, 0
    %v2168 = vsel %vm1916, %v2147, 0
    %v2171 = vsel %vm1916, %v2148, 0
    %v2174 = vsel %vm1916, %v2149, 0
    %v2177 = vsel %vm1916, %v2150, 0
    %v2180 = vsel %vm1916, %v2151, 0
    %v2183 = vsel %vm1916, %v2152, 0
    %v2186 = vsel %vm1916, %v2153, 0
    %v2189 = vsel %vm1916, %v2154, 0
    %v2192 = vsel %vm1916, %v2155, 0
    %v2195 = vsel %vm1916, %v2156, 0
    %v2198 = vsel %vm1916, %v2157, 0
    %v2201 = vsel %vm1916, %v2158, 0
    %v2204 = vsel %vm1916, %v2159, 0
    %v2207 = vsel %vm1916, %v2160, 0
    %2209 = vmatprep.subr.bf16.mxu0 0
    %2210 = vmatpush1.bf16.msra.mxu0 %v2047
    %2211 = vmatprep.subr.bf16.mxu0 0
    %2212 = vmatpush1.bf16.msra.mxu0 %v2048
    %2213 = vmatprep.subr.bf16.mxu0 0
    %2214 = vmatpush1.bf16.msra.mxu0 0
    %2215 = vmatprep.subr.bf16.mxu0 0
    %2216 = vmatpush1.bf16.msra.mxu0 0
    %2217 = vmatprep.subr.bf16.mxu0 0
    %2218 = vmatpush1.bf16.msra.mxu0 0
    %2219 = vmatprep.subr.bf16.mxu0 0
    %2220 = vmatpush1.bf16.msra.mxu0 0
    %2221 = vmatprep.subr.bf16.mxu0 0
    %2222 = vmatpush1.bf16.msra.mxu0 0
    %2223 = vmatprep.subr.bf16.mxu0 0
    %2224 = vmatpush1.bf16.msra.mxu0 0
    %2225 = vmatprep.subr.bf16.mxu0 0
    %2226 = vmatpush1.bf16.msra.mxu0 0
    %2227 = vmatprep.subr.bf16.mxu0 0
    %2228 = vmatpush1.bf16.msra.mxu0 0
    %2229 = vmatprep.subr.bf16.mxu0 0
    %2230 = vmatpush1.bf16.msra.mxu0 0
    %2231 = vmatprep.subr.bf16.mxu0 0
    %2232 = vmatpush1.bf16.msra.mxu0 0
    %2233 = vmatprep.subr.bf16.mxu0 0
    %2234 = vmatpush1.bf16.msra.mxu0 0
    %2235 = vmatprep.subr.bf16.mxu0 0
    %2236 = vmatpush1.bf16.msra.mxu0 0
    %2237 = vmatprep.subr.bf16.mxu0 0
    %2238 = vmatpush1.bf16.msra.mxu0 0
    %2239 = vmatprep.subr.bf16.mxu0 0
    %2240 = vmatpush1.bf16.msra.mxu0 0
    %2241 = vmatprep.mubr.bf16.mxu0 0
    %2242 = vmatmul.mubr.bf16.gmra.mrb[0].mxu0 %v2162
    %v2243 = vpop.f32.mrb[0].mxu0
    %v2244 = vadd.f32 0.0, %v2243
    %v2245 = vpop.f32.mrb[0].mxu0
    %v2246 = vpop.f32.mrb[0].mxu0
    %v2247 = vadd.f32 0.0, %v2246
    %v2248 = vpop.f32.mrb[0].mxu0
    %2249 = vmatprep.mubr.bf16.mxu0 0
    %2250 = vmatmul.mubr.bf16.gmra.mrb[0].mxu0 %v2165
    %v2251 = vpop.f32.mrb[0].mxu0
    %v2252 = vadd.f32 0.0, %v2251
    %v2253 = vpop.f32.mrb[0].mxu0
    %v2254 = vpop.f32.mrb[0].mxu0
    %v2255 = vadd.f32 0.0, %v2254
    %v2256 = vpop.f32.mrb[0].mxu0
    %2257 = vmatprep.mubr.bf16.mxu0 0
    %2258 = vmatmul.mubr.bf16.gmra.mrb[0].mxu0 %v2168
    %v2259 = vpop.f32.mrb[0].mxu0
    %v2260 = vadd.f32 0.0, %v2259
    %v2261 = vpop.f32.mrb[0].mxu0
    %v2262 = vpop.f32.mrb[0].mxu0
    %v2263 = vadd.f32 0.0, %v2262
    %v2264 = vpop.f32.mrb[0].mxu0
    %2265 = vmatprep.mubr.bf16.mxu0 0
    %2266 = vmatmul.mubr.bf16.gmra.mrb[0].mxu0 %v2171
    %v2267 = vpop.f32.mrb[0].mxu0
    %v2268 = vadd.f32 0.0, %v2267
    %v2269 = vpop.f32.mrb[0].mxu0
    %v2270 = vpop.f32.mrb[0].mxu0
    %v2271 = vadd.f32 0.0, %v2270
    %v2272 = vpop.f32.mrb[0].mxu0
    %2273 = vmatprep.mubr.bf16.mxu0 0
    %2274 = vmatmul.mubr.bf16.gmra.mrb[0].mxu0 %v2174
    %v2275 = vpop.f32.mrb[0].mxu0
    %v2276 = vadd.f32 0.0, %v2275
    %v2277 = vpop.f32.mrb[0].mxu0
    %v2278 = vpop.f32.mrb[0].mxu0
    %v2279 = vadd.f32 0.0, %v2278
    %v2280 = vpop.f32.mrb[0].mxu0
    %2281 = vmatprep.mubr.bf16.mxu0 0
    %2282 = vmatmul.mubr.bf16.gmra.mrb[0].mxu0 %v2177
    %v2283 = vpop.f32.mrb[0].mxu0
    %v2284 = vadd.f32 0.0, %v2283
    %v2285 = vpop.f32.mrb[0].mxu0
    %v2286 = vpop.f32.mrb[0].mxu0
    %v2287 = vadd.f32 0.0, %v2286
    %v2288 = vpop.f32.mrb[0].mxu0
    %2289 = vmatprep.mubr.bf16.mxu0 0
    %2290 = vmatmul.mubr.bf16.gmra.mrb[0].mxu0 %v2180
    %v2291 = vpop.f32.mrb[0].mxu0
    %v2292 = vadd.f32 0.0, %v2291
    %v2293 = vpop.f32.mrb[0].mxu0
    %v2294 = vpop.f32.mrb[0].mxu0
    %v2295 = vadd.f32 0.0, %v2294
    %v2296 = vpop.f32.mrb[0].mxu0
    %2297 = vmatprep.mubr.bf16.mxu0 0
    %2298 = vmatmul.mubr.bf16.gmra.mrb[0].mxu0 %v2183
    %v2299 = vpop.f32.mrb[0].mxu0
    %v2300 = vadd.f32 0.0, %v2299
    %v2301 = vpop.f32.mrb[0].mxu0
    %v2302 = vpop.f32.mrb[0].mxu0
    %v2303 = vadd.f32 0.0, %v2302
    %v2304 = vpop.f32.mrb[0].mxu0
    %2305 = vmatprep.mubr.bf16.mxu0 0
    %2306 = vmatmul.mubr.bf16.gmra.mrb[0].mxu0 %v2186
    %v2307 = vpop.f32.mrb[0].mxu0
    %v2308 = vadd.f32 0.0, %v2307
    %v2309 = vpop.f32.mrb[0].mxu0
    %v2310 = vpop.f32.mrb[0].mxu0
    %v2311 = vadd.f32 0.0, %v2310
    %v2312 = vpop.f32.mrb[0].mxu0
    %2313 = vmatprep.mubr.bf16.mxu0 0
    %2314 = vmatmul.mubr.bf16.gmra.mrb[0].mxu0 %v2189
    %v2315 = vpop.f32.mrb[0].mxu0
    %v2316 = vadd.f32 0.0, %v2315
    %v2317 = vpop.f32.mrb[0].mxu0
    %v2318 = vpop.f32.mrb[0].mxu0
    %v2319 = vadd.f32 0.0, %v2318
    %v2320 = vpop.f32.mrb[0].mxu0
    %2321 = vmatprep.mubr.bf16.mxu0 0
    %2322 = vmatmul.mubr.bf16.gmra.mrb[0].mxu0 %v2192
    %v2323 = vpop.f32.mrb[0].mxu0
    %v2324 = vadd.f32 0.0, %v2323
    %v2325 = vpop.f32.mrb[0].mxu0
    %v2326 = vpop.f32.mrb[0].mxu0
    %v2327 = vadd.f32 0.0, %v2326
    %v2328 = vpop.f32.mrb[0].mxu0
    %2329 = vmatprep.mubr.bf16.mxu0 0
    %2330 = vmatmul.mubr.bf16.gmra.mrb[0].mxu0 %v2195
    %v2331 = vpop.f32.mrb[0].mxu0
    %v2332 = vadd.f32 0.0, %v2331
    %v2333 = vpop.f32.mrb[0].mxu0
    %v2334 = vpop.f32.mrb[0].mxu0
    %v2335 = vadd.f32 0.0, %v2334
    %v2336 = vpop.f32.mrb[0].mxu0
    %2337 = vmatprep.mubr.bf16.mxu0 0
    %2338 = vmatmul.mubr.bf16.gmra.mrb[0].mxu0 %v2198
    %v2339 = vpop.f32.mrb[0].mxu0
    %v2340 = vadd.f32 0.0, %v2339
    %v2341 = vpop.f32.mrb[0].mxu0
    %v2342 = vpop.f32.mrb[0].mxu0
    %v2343 = vadd.f32 0.0, %v2342
    %v2344 = vpop.f32.mrb[0].mxu0
    %2345 = vmatprep.mubr.bf16.mxu0 0
    %2346 = vmatmul.mubr.bf16.gmra.mrb[0].mxu0 %v2201
    %v2347 = vpop.f32.mrb[0].mxu0
    %v2348 = vadd.f32 0.0, %v2347
    %v2349 = vpop.f32.mrb[0].mxu0
    %v2350 = vpop.f32.mrb[0].mxu0
    %v2351 = vadd.f32 0.0, %v2350
    %v2352 = vpop.f32.mrb[0].mxu0
    %2353 = vmatprep.mubr.bf16.mxu0 0
    %2354 = vmatmul.mubr.bf16.gmra.mrb[0].mxu0 %v2204
    %v2355 = vpop.f32.mrb[0].mxu0
    %v2356 = vadd.f32 0.0, %v2355
    %v2357 = vpop.f32.mrb[0].mxu0
    %v2358 = vpop.f32.mrb[0].mxu0
    %v2359 = vadd.f32 0.0, %v2358
    %v2360 = vpop.f32.mrb[0].mxu0
    %2361 = vmatprep.mubr.bf16.mxu0 0
    %2362 = vmatmul.mubr.bf16.gmra.mrb[0].mxu0 %v2207
    %v2363 = vpop.f32.mrb[0].mxu0
    %v2364 = vadd.f32 0.0, %v2363
    %v2365 = vpop.f32.mrb[0].mxu0
    %v2366 = vpop.f32.mrb[0].mxu0
    %v2367 = vadd.f32 0.0, %v2366
    %v2368 = vpop.f32.mrb[0].mxu0
    %2369 = vdwg.mxu0
    %v2370 = vsel %vm1916, %v2244, 0.0
    %v2371 = vsel %vm1916, %v2247, 0.0
    %v2372 = vld [vmem:[%s8] sm:$0x1]
    %v2374 = vlaneseq
    %v2375 = vshrl.u32 %v2374, 7
    %v2376 = vsub.s32 0, %v2375
    %v2377 = vrot.slane %v2372, %v2376
    %2378 = vrot.lane.b32.xlu0 %v2377, 5
    %v2379 = vpop.permute.xlu0 %2378
    %v2381 = vmul.f32 %v2370, %v2379
    %v2382 = vmul.f32 %v2371, %v2379
    %v2383 = vsel %vm1916, %v2252, 0.0
    %v2384 = vsel %vm1916, %v2255, 0.0
    %s2385 = scalar_lea.vmem %s8, 1
    %v2386 = vld [vmem:[%s2385] sm:$0x1]
    %v2388 = vlaneseq
    %v2389 = vshrl.u32 %v2388, 7
    %v2390 = vsub.s32 0, %v2389
    %v2391 = vrot.slane %v2386, %v2390
    %2392 = vrot.lane.b32.xlu0 %v2391, 4
    %v2393 = vpop.permute.xlu0 %2392
    %v2395 = vmul.f32 %v2383, %v2393
    %v2396 = vmul.f32 %v2384, %v2393
    %v2397 = vsel %vm1916, %v2260, 0.0
    %v2398 = vsel %vm1916, %v2263, 0.0
    %s2399 = scalar_lea.vmem %s8, 2
    %v2400 = vld [vmem:[%s2399] sm:$0x1]
    %v2402 = vlaneseq
    %v2403 = vshrl.u32 %v2402, 7
    %v2404 = vsub.s32 0, %v2403
    %v2405 = vrot.slane %v2400, %v2404
    %2406 = vrot.lane.b32.xlu0 %v2405, 4
    %v2407 = vpop.permute.xlu0 %2406
    %v2409 = vmul.f32 %v2397, %v2407
    %v2410 = vmul.f32 %v2398, %v2407
    %v2411 = vsel %vm1916, %v2268, 0.0
    %v2412 = vsel %vm1916, %v2271, 0.0
    %s2413 = scalar_lea.vmem %s8, 3
    %v2414 = vld [vmem:[%s2413] sm:$0x1]
    %v2416 = vlaneseq
    %v2417 = vshrl.u32 %v2416, 7
    %v2418 = vsub.s32 0, %v2417
    %v2419 = vrot.slane %v2414, %v2418
    %2420 = vrot.lane.b32.xlu0 %v2419, 3
    %v2421 = vpop.permute.xlu0 %2420
    %v2423 = vmul.f32 %v2411, %v2421
    %v2424 = vmul.f32 %v2412, %v2421
    %v2425 = vsel %vm1916, %v2276, 0.0
    %v2426 = vsel %vm1916, %v2279, 0.0
    %s2427 = scalar_lea.vmem %s8, 4
    %v2428 = vld [vmem:[%s2427] sm:$0x1]
    %v2430 = vlaneseq
    %v2431 = vshrl.u32 %v2430, 7
    %v2432 = vsub.s32 0, %v2431
    %v2433 = vrot.slane %v2428, %v2432
    %2434 = vrot.lane.b32.xlu0 %v2433, 1
    %v2435 = vpop.permute.xlu0 %2434
    %v2437 = vmul.f32 %v2425, %v2435
    %v2438 = vmul.f32 %v2426, %v2435
    %2441 = vrot.lane.b32.xlu0 %v2300, 1
    %v2442 = vpop.permute.xlu0 %2441
    %2443 = vrot.lane.b32.xlu0 %v2303, 1
    %v2444 = vpop.permute.xlu0 %2443
    %v2447 = vsel %vm1499, 0.0, %v2442
    %v2448 = vsel %vm1499, 0.0, %v2444
    %s2449 = scalar_lea.vmem %s8, 7
    %v2450 = vld [vmem:[%s2449] sm:$0x1]
    %v2452 = vlaneseq
    %v2453 = vshrl.u32 %v2452, 7
    %v2454 = vsub.s32 0, %v2453
    %v2455 = vrot.slane %v2450, %v2454
    %v2457 = vmul.f32 %v2447, %v2455
    %v2458 = vmul.f32 %v2448, %v2455
    %v2459 = vsel %vm1916, %v2308, 0.0
    %v2460 = vsel %vm1916, %v2311, 0.0
    %s2461 = scalar_lea.vmem %s8, 8
    %v2462 = vld [vmem:[%s2461] sm:$0x1]
    %v2464 = vlaneseq
    %v2465 = vshrl.u32 %v2464, 7
    %v2466 = vsub.s32 0, %v2465
    %v2467 = vrot.slane %v2462, %v2466
    %2468 = vrot.lane.b32.xlu0 %v2467, 1
    %v2469 = vpop.permute.xlu0 %2468
    %v2471 = vmul.f32 %v2459, %v2469
    %v2472 = vmul.f32 %v2460, %v2469
    %2475 = vrot.lane.b32.xlu0 %v2332, 1
    %v2476 = vpop.permute.xlu0 %2475
    %2477 = vrot.lane.b32.xlu0 %v2335, 1
    %v2478 = vpop.permute.xlu0 %2477
    %v2481 = vsel %vm1499, 0.0, %v2476
    %v2482 = vsel %vm1499, 0.0, %v2478
    %s2483 = scalar_lea.vmem %s8, 11
    %v2484 = vld [vmem:[%s2483] sm:$0x1]
    %v2486 = vlaneseq
    %v2487 = vshrl.u32 %v2486, 7
    %v2488 = vsub.s32 0, %v2487
    %v2489 = vrot.slane %v2484, %v2488
    %v2491 = vmul.f32 %v2481, %v2489
    %v2492 = vmul.f32 %v2482, %v2489
    %2495 = vrot.lane.b32.xlu0 %v2340, 3
    %v2496 = vpop.permute.xlu0 %2495
    %2497 = vrot.lane.b32.xlu0 %v2343, 3
    %v2498 = vpop.permute.xlu0 %2497
    %v2501 = vsel %vm1678, 0.0, %v2496
    %v2502 = vsel %vm1678, 0.0, %v2498
    %s2503 = scalar_lea.vmem %s8, 12
    %v2504 = vld [vmem:[%s2503] sm:$0x1]
    %v2506 = vlaneseq
    %v2507 = vshrl.u32 %v2506, 7
    %v2508 = vsub.s32 0, %v2507
    %v2509 = vrot.slane %v2504, %v2508
    %v2511 = vmul.f32 %v2501, %v2509
    %v2512 = vmul.f32 %v2502, %v2509
    %2515 = vrot.lane.b32.xlu0 %v2348, 4
    %v2516 = vpop.permute.xlu0 %2515
    %2517 = vrot.lane.b32.xlu0 %v2351, 4
    %v2518 = vpop.permute.xlu0 %2517
    %v2521 = vsel %vm563, 0.0, %v2516
    %v2522 = vsel %vm563, 0.0, %v2518
    %s2523 = scalar_lea.vmem %s8, 13
    %v2524 = vld [vmem:[%s2523] sm:$0x1]
    %v2526 = vlaneseq
    %v2527 = vshrl.u32 %v2526, 7
    %v2528 = vsub.s32 0, %v2527
    %v2529 = vrot.slane %v2524, %v2528
    %v2531 = vmul.f32 %v2521, %v2529
    %v2532 = vmul.f32 %v2522, %v2529
    %2535 = vrot.lane.b32.xlu0 %v2356, 4
    %v2536 = vpop.permute.xlu0 %2535
    %2537 = vrot.lane.b32.xlu0 %v2359, 4
    %v2538 = vpop.permute.xlu0 %2537
    %v2541 = vsel %vm563, 0.0, %v2536
    %v2542 = vsel %vm563, 0.0, %v2538
    %s2543 = scalar_lea.vmem %s8, 14
    %v2544 = vld [vmem:[%s2543] sm:$0x1]
    %v2546 = vlaneseq
    %v2547 = vshrl.u32 %v2546, 7
    %v2548 = vsub.s32 0, %v2547
    %v2549 = vrot.slane %v2544, %v2548
    %v2551 = vmul.f32 %v2541, %v2549
    %v2552 = vmul.f32 %v2542, %v2549
    %2555 = vrot.lane.b32.xlu0 %v2364, 5
    %v2556 = vpop.permute.xlu0 %2555
    %2557 = vrot.lane.b32.xlu0 %v2367, 5
    %v2558 = vpop.permute.xlu0 %2557
    %vm2561 = vcmask 39936
    %v2562 = vsel %vm2561, 0.0, %v2556
    %v2563 = vsel %vm2561, 0.0, %v2558
    %s2564 = scalar_lea.vmem %s8, 15
    %v2565 = vld [vmem:[%s2564] sm:$0x1]
    %v2567 = vlaneseq
    %v2568 = vshrl.u32 %v2567, 7
    %v2569 = vsub.s32 0, %v2568
    %v2570 = vrot.slane %v2565, %v2569
    %v2572 = vmul.f32 %v2562, %v2570
    %v2573 = vmul.f32 %v2563, %v2570
    %v2574 = vadd.f32 %v2284, %v2457
    %v2575 = vadd.f32 %v2287, %v2458
    %v2576 = vadd.f32 %v2531, %v2572
    %v2577 = vadd.f32 %v2532, %v2573
    %v2578 = vadd.f32 %v2574, %v2576
    %v2579 = vadd.f32 %v2575, %v2577
    %2582 = vrot.lane.b32.xlu0 %v2292, 1
    %v2583 = vpop.permute.xlu0 %2582
    %2584 = vrot.lane.b32.xlu0 %v2295, 1
    %v2585 = vpop.permute.xlu0 %2584
    %v2588 = vadd.f32 %v2437, %v2583
    %v2589 = vadd.f32 %v2438, %v2585
    %v2590 = vadd.f32 %v2511, %v2551
    %v2591 = vadd.f32 %v2512, %v2552
    %2594 = vrot.lane.b32.xlu0 %v2590, 1
    %v2595 = vpop.permute.xlu0 %2594
    %2596 = vrot.lane.b32.xlu0 %v2591, 1
    %v2597 = vpop.permute.xlu0 %2596
    %v2600 = vadd.f32 %v2588, %v2595
    %v2601 = vadd.f32 %v2589, %v2597
    %2604 = vrot.lane.b32.xlu0 %v2423, 1
    %v2605 = vpop.permute.xlu0 %2604
    %2606 = vrot.lane.b32.xlu0 %v2424, 1
    %v2607 = vpop.permute.xlu0 %2606
    %v2610 = vadd.f32 %v2395, %v2605
    %v2611 = vadd.f32 %v2396, %v2607
    %v2612 = vadd.f32 %v2316, %v2491
    %v2613 = vadd.f32 %v2319, %v2492
    %2616 = vrot.lane.b32.xlu0 %v2612, 4
    %v2617 = vpop.permute.xlu0 %2616
    %2618 = vrot.lane.b32.xlu0 %v2613, 4
    %v2619 = vpop.permute.xlu0 %2618
    %v2622 = vadd.f32 %v2610, %v2617
    %v2623 = vadd.f32 %v2611, %v2619
    %2626 = vrot.lane.b32.xlu0 %v2409, 1
    %v2627 = vpop.permute.xlu0 %2626
    %2628 = vrot.lane.b32.xlu0 %v2410, 1
    %v2629 = vpop.permute.xlu0 %2628
    %v2632 = vadd.f32 %v2381, %v2627
    %v2633 = vadd.f32 %v2382, %v2629
    %2636 = vrot.lane.b32.xlu0 %v2324, 1
    %v2637 = vpop.permute.xlu0 %2636
    %2638 = vrot.lane.b32.xlu0 %v2327, 1
    %v2639 = vpop.permute.xlu0 %2638
    %v2642 = vadd.f32 %v2471, %v2637
    %v2643 = vadd.f32 %v2472, %v2639
    %2646 = vrot.lane.b32.xlu0 %v2642, 4
    %v2647 = vpop.permute.xlu0 %2646
    %2648 = vrot.lane.b32.xlu0 %v2643, 4
    %v2649 = vpop.permute.xlu0 %2648
    %v2652 = vadd.f32 %v2632, %v2647
    %v2653 = vadd.f32 %v2633, %v2649
    %2656 = vrot.lane.b32.xlu0 %v2600, 31
    %v2657 = vpop.permute.xlu0 %2656
    %2658 = vrot.lane.b32.xlu0 %v2601, 31
    %v2659 = vpop.permute.xlu0 %2658
    %2664 = vrot.lane.b32.xlu0 %v2622, 60
    %v2665 = vpop.permute.xlu0 %2664
    %2666 = vrot.lane.b32.xlu0 %v2623, 60
    %v2667 = vpop.permute.xlu0 %2666
    %2672 = vrot.lane.b32.xlu0 %v2652, 91
    %v2673 = vpop.permute.xlu0 %2672
    %2674 = vrot.lane.b32.xlu0 %v2653, 91
    %v2675 = vpop.permute.xlu0 %2674
    %v2678 = vsel %vm1916, %v2578, %v2657
    %v2679 = vsel %vm1916, %v2579, %v2659
    %v2680 = vsel %vm1008, %v2678, %v2665
    %v2681 = vsel %vm1008, %v2679, %v2667
    %vm2682 = vcmask 785408
    %v2683 = vsel %vm2682, %v2680, %v2673
    %v2684 = vsel %vm2682, %v2681, %v2675
    %2685 = vadd.xlane.f32.xlu0 %v2683
    %v2686 = vpop.xlane.xlu0 %2685
    %2687 = vadd.xlane.f32.xlu0 %v2684
    %v2688 = vpop.xlane.xlu0 %2687
    %v2689 = vrcp.pop 128.0
    %v2690 = vmul.f32 %v2686, %v2689
    %v2691 = vmul.f32 %v2688, %v2689
    %v2692 = vsub.f32 %v2683, %v2690
    %v2693 = vsub.f32 %v2684, %v2691
    %v2694 = vmul.f32 %v2692, %v2692
    %v2695 = vmul.f32 %v2693, %v2693
    %2696 = vadd.xlane.f32.xlu0 %v2694
    %v2697 = vpop.xlane.xlu0 %2696
    %2698 = vadd.xlane.f32.xlu0 %v2695
    %v2699 = vpop.xlane.xlu0 %2698
    %v2700 = vmul.f32 %v2697, %v2689
    %v2701 = vmul.f32 %v2699, %v2689
    %v2702 = vadd.f32 %v2700, 1e-05
    %v2703 = vadd.f32 %v2701, 1e-05
    %v2704 = vrsqrt.pop %v2702
    %v2705 = vrsqrt.pop %v2703
    %v2706 = vmul.f32 %v2692, %v2704
    %v2707 = vmul.f32 %v2693, %v2705
    %v2708 = vmax.f32 %v2706, 0.0
    %v2709 = vmax.f32 %v2707, 0.0
    %v2710 = vpack.c.bf16 %v2709, %v2708
    %v2711 = vld [vmem:[%s9] sm:$0xf]
    %v2712 = vld [vmem:[%s9 + $0x4] sm:$0xf]
    %v2713 = vld [vmem:[%s9 + $0x8] sm:$0xf]
    %v2714 = vld [vmem:[%s9 + $0xc] sm:$0xf]
    %v2715 = vld [vmem:[%s9 + $0x10] sm:$0xf]
    %v2716 = vld [vmem:[%s9 + $0x14] sm:$0xf]
    %v2717 = vld [vmem:[%s9 + $0x18] sm:$0xf]
    %v2718 = vld [vmem:[%s9 + $0x1c] sm:$0xf]
    %v2719 = vld [vmem:[%s9 + $0x20] sm:$0xf]
    %v2720 = vld [vmem:[%s9 + $0x24] sm:$0xf]
    %v2721 = vld [vmem:[%s9 + $0x28] sm:$0xf]
    %v2722 = vld [vmem:[%s9 + $0x2c] sm:$0xf]
    %v2723 = vld [vmem:[%s9 + $0x30] sm:$0xf]
    %v2724 = vld [vmem:[%s9 + $0x34] sm:$0xf]
    %v2725 = vld [vmem:[%s9 + $0x38] sm:$0xf]
    %v2726 = vld [vmem:[%s9 + $0x3c] sm:$0xf]
    %v2743 = vunpack.c.l.b16 %v2711
    %v2744 = vunpack.c.l.b16 %v2712
    %v2745 = vunpack.c.l.b16 %v2713
    %v2746 = vunpack.c.l.b16 %v2714
    %v2747 = vunpack.c.l.b16 %v2715
    %v2748 = vunpack.c.l.b16 %v2716
    %v2749 = vunpack.c.l.b16 %v2717
    %v2750 = vunpack.c.l.b16 %v2718
    %v2751 = vunpack.c.l.b16 %v2719
    %v2752 = vunpack.c.l.b16 %v2720
    %v2753 = vunpack.c.l.b16 %v2721
    %v2754 = vunpack.c.l.b16 %v2722
    %v2755 = vunpack.c.l.b16 %v2723
    %v2756 = vunpack.c.l.b16 %v2724
    %v2757 = vunpack.c.l.b16 %v2725
    %v2758 = vunpack.c.l.b16 %v2726
    %v2759 = vpack.c.b16 %v2744, %v2743
    %v2760 = vpack.c.b16 %v2746, %v2745
    %v2761 = vpack.c.b16 %v2748, %v2747
    %v2762 = vpack.c.b16 %v2750, %v2749
    %v2763 = vpack.c.b16 %v2752, %v2751
    %v2764 = vpack.c.b16 %v2754, %v2753
    %v2765 = vpack.c.b16 %v2756, %v2755
    %v2766 = vpack.c.b16 %v2758, %v2757
    %2775 = vmatprep.subr.bf16.mxu0 0
    %2776 = vmatpush1.bf16.msra.mxu0 %v2759
    %2777 = vmatprep.subr.bf16.mxu0 0
    %2778 = vmatpush1.bf16.msra.mxu0 %v2760
    %2779 = vmatprep.subr.bf16.mxu0 0
    %2780 = vmatpush1.bf16.msra.mxu0 %v2761
    %2781 = vmatprep.subr.bf16.mxu0 0
    %2782 = vmatpush1.bf16.msra.mxu0 %v2762
    %2783 = vmatprep.subr.bf16.mxu0 0
    %2784 = vmatpush1.bf16.msra.mxu0 %v2763
    %2785 = vmatprep.subr.bf16.mxu0 0
    %2786 = vmatpush1.bf16.msra.mxu0 %v2764
    %2787 = vmatprep.subr.bf16.mxu0 0
    %2788 = vmatpush1.bf16.msra.mxu0 %v2765
    %2789 = vmatprep.subr.bf16.mxu0 0
    %2790 = vmatpush1.bf16.msra.mxu0 %v2766
    %2791 = vmatprep.subr.bf16.mxu0 0
    %2792 = vmatpush1.bf16.msra.mxu0 0
    %2793 = vmatprep.subr.bf16.mxu0 0
    %2794 = vmatpush1.bf16.msra.mxu0 0
    %2795 = vmatprep.subr.bf16.mxu0 0
    %2796 = vmatpush1.bf16.msra.mxu0 0
    %2797 = vmatprep.subr.bf16.mxu0 0
    %2798 = vmatpush1.bf16.msra.mxu0 0
    %2799 = vmatprep.subr.bf16.mxu0 0
    %2800 = vmatpush1.bf16.msra.mxu0 0
    %2801 = vmatprep.subr.bf16.mxu0 0
    %2802 = vmatpush1.bf16.msra.mxu0 0
    %2803 = vmatprep.subr.bf16.mxu0 0
    %2804 = vmatpush1.bf16.msra.mxu0 0
    %2805 = vmatprep.subr.bf16.mxu0 0
    %2806 = vmatpush1.bf16.msra.mxu0 0
    %2807 = vmatprep.mubr.bf16.mxu0 0
    %2808 = vmatmul.mubr.bf16.gmra.mrb[0].mxu0 %v2710
    %v2809 = vpop.f32.mrb[0].mxu0
    %v2810 = vadd.f32 0.0, %v2809
    %v2811 = vpop.f32.mrb[0].mxu0
    %v2812 = vpop.f32.mrb[0].mxu0
    %v2813 = vadd.f32 0.0, %v2812
    %v2814 = vpop.f32.mrb[0].mxu0
    %2815 = vdwg.mxu0
    %v2816 = vpack.c.bf16 %v2813, %v2810
    %v2817 = vld [vmem:[#allocation11] sm:$0xf]
    %v2818 = vld [vmem:[#allocation11 + $0x4] sm:$0xf]
    %v2821 = vunpack.c.l.b16 %v2817
    %v2822 = vunpack.c.l.b16 %v2818
    %v2823 = vpack.c.b16 %v2822, %v2821
    %v2825 = vsel %vm1907, %v2823, 0
    %2827 = vmatprep.subr.bf16.mxu0 0
    %2828 = vmatpush1.bf16.msra.mxu0 %v2816
    %2829 = vmatprep.subr.bf16.mxu0 0
    %2830 = vmatpush1.bf16.msra.mxu0 0
    %2831 = vmatprep.subr.bf16.mxu0 0
    %2832 = vmatpush1.bf16.msra.mxu0 0
    %2833 = vmatprep.subr.bf16.mxu0 0
    %2834 = vmatpush1.bf16.msra.mxu0 0
    %2835 = vmatprep.subr.bf16.mxu0 0
    %2836 = vmatpush1.bf16.msra.mxu0 0
    %2837 = vmatprep.subr.bf16.mxu0 0
    %2838 = vmatpush1.bf16.msra.mxu0 0
    %2839 = vmatprep.subr.bf16.mxu0 0
    %2840 = vmatpush1.bf16.msra.mxu0 0
    %2841 = vmatprep.subr.bf16.mxu0 0
    %2842 = vmatpush1.bf16.msra.mxu0 0
    %2843 = vmatprep.subr.bf16.mxu0 0
    %2844 = vmatpush1.bf16.msra.mxu0 0
    %2845 = vmatprep.subr.bf16.mxu0 0
    %2846 = vmatpush1.bf16.msra.mxu0 0
    %2847 = vmatprep.subr.bf16.mxu0 0
    %2848 = vmatpush1.bf16.msra.mxu0 0
    %2849 = vmatprep.subr.bf16.mxu0 0
    %2850 = vmatpush1.bf16.msra.mxu0 0
    %2851 = vmatprep.subr.bf16.mxu0 0
    %2852 = vmatpush1.bf16.msra.mxu0 0
    %2853 = vmatprep.subr.bf16.mxu0 0
    %2854 = vmatpush1.bf16.msra.mxu0 0
    %2855 = vmatprep.subr.bf16.mxu0 0
    %2856 = vmatpush1.bf16.msra.mxu0 0
    %2857 = vmatprep.subr.bf16.mxu0 0
    %2858 = vmatpush1.bf16.msra.mxu0 0
    %2859 = vmatprep.mubr.bf16.mxu0 0
    %2860 = vmatmul.mubr.bf16.gmra.mrb[0].mxu0 %v2825
    %v2861 = vpop.f32.mrb[0].mxu0
    %v2862 = vadd.f32 0.0, %v2861
    %v2863 = vpop.f32.mrb[0].mxu0
    %v2864 = vpop.f32.mrb[0].mxu0
    %v2865 = vadd.f32 0.0, %v2864
    %v2866 = vpop.f32.mrb[0].mxu0
    %2867 = vdwg.mxu0
    %v2868 = vld [vmem:[%s11] sm:$0x1]
    %v2870 = vlaneseq
    %v2871 = vshrl.u32 %v2870, 7
    %v2872 = vsub.s32 0, %v2871
    %v2873 = vrot.slane %v2868, %v2872
    %2874 = vrot.lane.b32.xlu0 %v2873, 9
    %v2875 = vpop.permute.xlu0 %2874
    %v2877 = vmul.f32 %v2862, %v2875
    %v2878 = vmul.f32 %v2875, 0.0
    %s2879 = scalar_lea.vmem %s11, 1
    %v2880 = vld [vmem:[%s2879] sm:$0x1]
    %v2882 = vlaneseq
    %v2883 = vshrl.u32 %v2882, 7
    %v2884 = vsub.s32 0, %v2883
    %v2885 = vrot.slane %v2880, %v2884
    %2886 = vrot.lane.b32.xlu0 %v2885, 8
    %v2887 = vpop.permute.xlu0 %2886
    %v2889 = vmul.f32 %v2862, %v2887
    %v2890 = vmul.f32 %v2887, 0.0
    %s2891 = scalar_lea.vmem %s11, 2
    %v2892 = vld [vmem:[%s2891] sm:$0x1]
    %v2894 = vlaneseq
    %v2895 = vshrl.u32 %v2894, 7
    %v2896 = vsub.s32 0, %v2895
    %v2897 = vrot.slane %v2892, %v2896
    %2898 = vrot.lane.b32.xlu0 %v2897, 8
    %v2899 = vpop.permute.xlu0 %2898
    %v2901 = vmul.f32 %v2862, %v2899
    %v2902 = vmul.f32 %v2899, 0.0
    %s2903 = scalar_lea.vmem %s11, 3
    %v2904 = vld [vmem:[%s2903] sm:$0x1]
    %v2906 = vlaneseq
    %v2907 = vshrl.u32 %v2906, 7
    %v2908 = vsub.s32 0, %v2907
    %v2909 = vrot.slane %v2904, %v2908
    %2910 = vrot.lane.b32.xlu0 %v2909, 7
    %v2911 = vpop.permute.xlu0 %2910
    %v2913 = vmul.f32 %v2862, %v2911
    %v2914 = vmul.f32 %v2911, 0.0
    %s2915 = scalar_lea.vmem %s11, 4
    %v2916 = vld [vmem:[%s2915] sm:$0x1]
    %v2918 = vlaneseq
    %v2919 = vshrl.u32 %v2918, 7
    %v2920 = vsub.s32 0, %v2919
    %v2921 = vrot.slane %v2916, %v2920
    %2922 = vrot.lane.b32.xlu0 %v2921, 1
    %v2923 = vpop.permute.xlu0 %2922
    %v2925 = vmul.f32 %v2862, %v2923
    %v2926 = vmul.f32 %v2923, 0.0
    %v2928 = vrot.slane %v2862, 7
    %2929 = vrot.lane.b32.xlu0 %v2928, 1
    %v2930 = vpop.permute.xlu0 %2929
    %v2932 = vsel %vm1499, 0.0, %v2930
    %s2933 = scalar_lea.vmem %s11, 7
    %v2934 = vld [vmem:[%s2933] sm:$0x1]
    %v2935 = vmul.f32 %v2932, %v2934
    %s2936 = scalar_lea.vmem %s11, 8
    %v2937 = vld [vmem:[%s2936] sm:$0x1]
    %v2939 = vlaneseq
    %v2940 = vshrl.u32 %v2939, 7
    %v2941 = vsub.s32 0, %v2940
    %v2942 = vrot.slane %v2937, %v2941
    %2943 = vrot.lane.b32.xlu0 %v2942, 1
    %v2944 = vpop.permute.xlu0 %2943
    %v2946 = vmul.f32 %v2865, %v2944
    %v2947 = vmul.f32 %v2944, 0.0
    %v2949 = vrot.slane %v2865, 3
    %2950 = vrot.lane.b32.xlu0 %v2949, 1
    %v2951 = vpop.permute.xlu0 %2950
    %v2953 = vsel %vm1499, 0.0, %v2951
    %s2954 = scalar_lea.vmem %s11, 11
    %v2955 = vld [vmem:[%s2954] sm:$0x1]
    %v2956 = vmul.f32 %v2953, %v2955
    %v2957 = vrot.slane %v2865, 4
    %2958 = vrot.lane.b32.xlu0 %v2957, 7
    %v2959 = vpop.permute.xlu0 %2958
    %vm2961 = vcmask 56320
    %v2962 = vsel %vm2961, 0.0, %v2959
    %s2963 = scalar_lea.vmem %s11, 12
    %v2964 = vld [vmem:[%s2963] sm:$0x1]
    %v2965 = vmul.f32 %v2962, %v2964
    %v2966 = vrot.slane %v2865, 5
    %2967 = vrot.lane.b32.xlu0 %v2966, 8
    %v2968 = vpop.permute.xlu0 %2967
    %v2970 = vsel %vm581, 0.0, %v2968
    %s2971 = scalar_lea.vmem %s11, 13
    %v2972 = vld [vmem:[%s2971] sm:$0x1]
    %v2973 = vmul.f32 %v2970, %v2972
    %v2974 = vrot.slane %v2865, 6
    %2975 = vrot.lane.b32.xlu0 %v2974, 8
    %v2976 = vpop.permute.xlu0 %2975
    %v2978 = vsel %vm581, 0.0, %v2976
    %s2979 = scalar_lea.vmem %s11, 14
    %v2980 = vld [vmem:[%s2979] sm:$0x1]
    %v2981 = vmul.f32 %v2978, %v2980
    %v2982 = vrot.slane %v2865, 7
    %2983 = vrot.lane.b32.xlu0 %v2982, 9
    %v2984 = vpop.permute.xlu0 %2983
    %vm2986 = vcmask 72704
    %v2987 = vsel %vm2986, 0.0, %v2984
    %s2988 = scalar_lea.vmem %s11, 15
    %v2989 = vld [vmem:[%s2988] sm:$0x1]
    %v2990 = vmul.f32 %v2987, %v2989
    %v2992 = vrot.slane %v2935, 3
    %v2994 = vadd.f32 %v2862, %v2992
    %v2995 = vadd.f32 %v2973, %v2990
    %v2997 = vrot.slane %v2995, 3
    %v2999 = vadd.f32 %v2994, %v2997
    %v3000 = vrot.slane %v2862, 2
    %3001 = vrot.lane.b32.xlu0 %v3000, 1
    %v3002 = vpop.permute.xlu0 %3001
    %v3004 = vadd.f32 %v2925, %v3002
    %v3005 = vadd.f32 %v2926, %v3002
    %v3006 = vadd.f32 %v2965, %v2981
    %v3008 = vrot.slane %v3006, 4
    %3009 = vrot.lane.b32.xlu0 %v3008, 1
    %v3010 = vpop.permute.xlu0 %3009
    %v3012 = vadd.f32 %v3004, %v3010
    %v3013 = vadd.f32 %v3005, %v3010
    %v3016 = vrot.slane %v2913, 2
    %v3017 = vrot.slane %v2914, 2
    %3018 = vrot.lane.b32.xlu0 %v3016, 1
    %v3019 = vpop.permute.xlu0 %3018
    %3020 = vrot.lane.b32.xlu0 %v3017, 1
    %v3021 = vpop.permute.xlu0 %3020
    %v3022 = vsel %vm1499, %v3019, %v3021
    %v3025 = vadd.f32 %v2889, %v3019
    %v3026 = vadd.f32 %v2890, %v3022
    %v3028 = vrot.slane %v2956, 7
    %v3030 = vadd.f32 %v2865, %v3028
    %3032 = vrot.lane.b32.xlu0 %v3030, 8
    %v3033 = vpop.permute.xlu0 %3032
    %v3035 = vadd.f32 %v3025, %v3033
    %v3036 = vadd.f32 %v3026, %v3033
    %v3039 = vrot.slane %v2901, 2
    %v3040 = vrot.slane %v2902, 2
    %3041 = vrot.lane.b32.xlu0 %v3039, 1
    %v3042 = vpop.permute.xlu0 %3041
    %3043 = vrot.lane.b32.xlu0 %v3040, 1
    %v3044 = vpop.permute.xlu0 %3043
    %v3045 = vsel %vm1499, %v3042, %v3044
    %v3048 = vadd.f32 %v2877, %v3042
    %v3049 = vadd.f32 %v2878, %v3045
    %v3050 = vrot.slane %v2865, 2
    %3051 = vrot.lane.b32.xlu0 %v3050, 1
    %v3052 = vpop.permute.xlu0 %3051
    %v3054 = vadd.f32 %v2946, %v3052
    %v3055 = vadd.f32 %v2947, %v3052
    %3058 = vrot.lane.b32.xlu0 %v3054, 8
    %v3059 = vpop.permute.xlu0 %3058
    %3060 = vrot.lane.b32.xlu0 %v3055, 8
    %v3061 = vpop.permute.xlu0 %3060
    %v3062 = vsel %vm581, %v3059, %v3061
    %v3065 = vadd.f32 %v3048, %v3059
    %v3066 = vadd.f32 %v3049, %v3062
    %v3069 = vrot.slane %v3012, 7
    %v3070 = vrot.slane %v3013, 7
    %3071 = vrot.lane.b32.xlu0 %v3069, 127
    %v3072 = vpop.permute.xlu0 %3071
    %3073 = vrot.lane.b32.xlu0 %v3070, 127
    %v3074 = vpop.permute.xlu0 %3073
    %vm3075 = vcmask 1039360
    %v3076 = vsel %vm3075, %v3072, %v3074
    %v3080 = vrot.slane %v3035, 4
    %v3081 = vrot.slane %v3036, 4
    %3082 = vrot.lane.b32.xlu0 %v3080, 120
    %v3083 = vpop.permute.xlu0 %3082
    %3084 = vrot.lane.b32.xlu0 %v3081, 120
    %v3085 = vpop.permute.xlu0 %3084
    %vm3086 = vcmask 982016
    %v3087 = vsel %vm3086, %v3083, %v3085
    %v3091 = vrot.slane %v3065, 3
    %v3092 = vrot.slane %v3066, 3
    %3093 = vrot.lane.b32.xlu0 %v3091, 119
    %v3094 = vpop.permute.xlu0 %3093
    %3095 = vrot.lane.b32.xlu0 %v3092, 119
    %v3096 = vpop.permute.xlu0 %3095
    %vm3097 = vcmask 973824
    %v3098 = vsel %vm3097, %v3094, %v3096
    %v3100 = vld [vmem:[#allocation2] sm:$0x1]
    %3102 = vset.pattern.permute.xlu0 0
    %3103 = vperm.xlu0 %3102, %v3100
    %v3104 = vpop.permute.xlu0 %3103
    %v3106 = vlaneseq
    %v3107 = vshrl.u32 %v3106, 7
    %v3108 = vsub.s32 0, %v3107
    %v3109 = vrot.slane %v3104, %v3108
    %v3110 = vadd.f32 %v2999, %v3109
    %v3111 = vadd.f32 %v3076, %v3109
    %v3112 = vadd.f32 %v3087, %v3109
    %v3113 = vadd.f32 %v3098, %v3109
    %v3114 = vtanh.pop %v3110
    %v3115 = vtanh.pop %v3111
    %v3116 = vtanh.pop %v3112
    %v3117 = vtanh.pop %v3113
    %v3122 = vcombine.high %v3114, %v3115
    %v3123 = vcombine.high %v3116, %v3117
    %v3125 = vunpack.c.l.s4 1966171168
    %v3126 = vunpack.c.0.s8 %v3125
    %v3127 = vlaneseq
    %v3128 = vshrl.u32 %v3127, 7
    %v3129 = vsub.s32 %v3126, %v3128
    %v3130 = vrot.slane %v3122, %v3129
    %v3132 = vunpack.c.l.s4 1966171168
    %v3133 = vunpack.c.0.s8 %v3132
    %v3134 = vlaneseq
    %v3135 = vshrl.u32 %v3134, 7
    %v3136 = vsub.s32 %v3133, %v3135
    %v3137 = vrot.slane %v3123, %v3136
    %v3138 = vcombine.high %v3130, %v3137
    %v3140 = vunpack.c.l.s4 1966171168
    %v3141 = vunpack.c.0.s8 %v3140
    %v3142 = vlaneseq
    %v3143 = vshrl.u32 %v3142, 7
    %v3144 = vsub.s32 %v3141, %v3143
    %v3145 = vrot.slane %v3138, %v3144
    %v3147 = vlaneseq
    %vm3148 = vcmp.ge.s32.totalorder %v3147, 0
    %vm3149 = vcmp.lt.s32.totalorder %v3147, 512
    %vm3150 = vmand %vm3148, %vm3149
    %3151 = vst.msk [vmem:[%s13] sm:$0xf] %vm3150, %v3145
    // Predicated region
    $region78: #{fwd.1} parent=1 // pred_check
      _
    $region79: #{fwd.1} parent=1 // pred_check_branch
      %3153 = sbr.rel (0) target = $region81
    $region80: #{fwd.1} parent=1 // pred_region
      _
    $region81: #{fwd.1} parent=1 // pred_fallthru
      _
    // Predicated region
    $region82: #{fwd.1} parent=1 // pred_check
      _
    $region83: #{fwd.1} parent=1 // pred_check_branch
      %3155 = sbr.rel (0) target = $region85
    $region84: #{fwd.1} parent=1 // pred_region
      _
    $region85: #{fwd.1} parent=1 // pred_fallthru
      _
    %3156 = vsyncpa [#allocation4], 1
    %3157 = vsyncpa [#allocation6], 1
    %3158 = vsyncpa [#allocation9], 1
    %3159 = vsyncpa [#allocation12], 1

</llo_original>
